<compile_context>
chip_gen: v5e
topology: v5e:2x2
jax: 0.10.0
libtpu: 0.0.40
codegen_flags: <defaults>
</compile_context>

<pallas_src>
import jax
import jax.numpy as jnp
from jax.experimental import pallas as pl
from jax.experimental.pallas import tpu as pltpu

EPS = 1e-5


def resblocks_kernel(x_ref, w1_ref, w2_ref, o_ref, xpad, col):
    # x_ref:  (1, H, W, C) f32 — one image per grid step
    # w*_ref: (NUM_BLOCKS, 9*C, C) bf16 — im2col weight slabs, row index = k*C + cin,
    #         k = ky*3 + kx
    # o_ref:  (1, H, W, C) f32
    # xpad:   (H+2, W+2, C) f32 VMEM scratch (zero-padded conv input)
    # col:    (H, W, 9*C)  f32 VMEM scratch (im2col patch buffer)
    H, W, C = x_ref.shape[1], x_ref.shape[2], x_ref.shape[3]
    num_blocks = w1_ref.shape[0]
    HW = H * W

    # Clear the padded buffer once per grid step; only the interior is rewritten per
    # conv, so the 1-pixel zero border stays valid for all convs of this step.
    xpad[...] = jnp.zeros(xpad.shape, xpad.dtype)

    def conv3x3(inp_hwc, w_slab):
        # inp_hwc: (H, W, C) f32;  w_slab: (9*C, C) bf16
        xpad[1:H + 1, 1:W + 1, :] = inp_hwc
        # im2col gather: tap k occupies lane strip [k*C, (k+1)*C)
        for k in range(9):
            dy, dx = divmod(k, 3)
            col[:, :, k * C:(k + 1) * C] = xpad[dy:dy + H, dx:dx + W, :]
        patches = col[...].reshape(HW, 9 * C).astype(jnp.bfloat16)
        # single MXU matmul, bf16 operands, f32 accumulation
        return jnp.dot(patches, w_slab, preferred_element_type=jnp.float32)  # (HW, C)

    def instance_norm(y):  # y: (HW, C) f32, per-channel over spatial, biased variance
        inv_n = 1.0 / HW
        mean = jnp.sum(y, axis=0, keepdims=True) * inv_n
        mean_sq = jnp.sum(y * y, axis=0, keepdims=True) * inv_n
        var = mean_sq - mean * mean
        return (y - mean) * jax.lax.rsqrt(var + EPS)

    x = x_ref[0].astype(jnp.float32)  # (H, W, C) residual stream kept in f32
    for blk in range(num_blocks):
        y = conv3x3(x, w1_ref[blk])               # conv1 (bias is a no-op under IN)
        y = jnp.maximum(instance_norm(y), 0.0)    # IN + ReLU
        y = conv3x3(y.reshape(H, W, C), w2_ref[blk])  # conv2
        y = instance_norm(y)                      # IN (no activation)
        x = x + y.reshape(H, W, C)                # residual
    o_ref[0] = x.astype(o_ref.dtype)


def resblocks_pallas(x_nhwc, w1_all, w2_all):
    """x_nhwc: (B, H, W, C) f32; w*_all: (NUM_BLOCKS, 9*C, C) bf16 weight slabs."""
    B, H, W, C = x_nhwc.shape
    nb, k9c, _ = w1_all.shape
    return pl.pallas_call(
        resblocks_kernel,
        out_shape=jax.ShapeDtypeStruct((B, H, W, C), x_nhwc.dtype),
        grid_spec=pltpu.PrefetchScalarGridSpec(
            num_scalar_prefetch=0,
            grid=(B,),
            in_specs=[
                pl.BlockSpec((1, H, W, C), lambda b: (b, 0, 0, 0)),
                pl.BlockSpec((nb, k9c, C), lambda b: (0, 0, 0)),  # weights resident
                pl.BlockSpec((nb, k9c, C), lambda b: (0, 0, 0)),
            ],
            out_specs=pl.BlockSpec((1, H, W, C), lambda b: (b, 0, 0, 0)),
            scratch_shapes=[
                pltpu.VMEM((H + 2, W + 2, C), jnp.float32),   # zero-padded input
                pltpu.VMEM((H, W, 9 * C), jnp.float32),       # im2col patches
            ],
        ),
        compiler_params=pltpu.CompilerParams(
            dimension_semantics=("parallel",)),   # batch across TCs on v7x
    )(x_nhwc, w1_all, w2_all)


def resblocks_forward(x_nchw, w1_all, w2_all):
    x = jnp.transpose(x_nchw, (0, 2, 3, 1))       # NCHW -> NHWC
    y = resblocks_pallas(x, w1_all, w2_all)
    return jnp.transpose(y, (0, 3, 1, 2))         # NHWC -> NCHW


def oihw_to_slab(w_oihw):
    # (Cout, Cin, 3, 3) -> (9*Cin, Cout), row index = (ky*3+kx)*Cin + cin
    cout, cin = w_oihw.shape[0], w_oihw.shape[1]
    return jnp.transpose(w_oihw, (2, 3, 1, 0)).reshape(9 * cin, cout)


# ---------------- pure-JAX reference (PyTorch semantics) ----------------
# Conv operands are rounded to bf16 (mirroring the kernel's MXU-native bf16 matmul with
# f32 accumulation); biases are kept (nn.Conv2d bias=True) — InstanceNorm cancels them.
def ref_resblocks(x_nchw, params_oihw):
    def conv(x, w, b):
        xb = x.astype(jnp.bfloat16).astype(jnp.float32)
        wb = w.astype(jnp.bfloat16).astype(jnp.float32)
        y = jax.lax.conv_general_dilated(
            xb, wb, window_strides=(1, 1), padding=((1, 1), (1, 1)),
            dimension_numbers=("NCHW", "OIHW", "NCHW"),
            precision=jax.lax.Precision.HIGHEST)
        return y + b[None, :, None, None]

    def inorm(y):
        mean = y.mean(axis=(2, 3), keepdims=True)
        var = ((y - mean) ** 2).mean(axis=(2, 3), keepdims=True)
        return (y - mean) / jnp.sqrt(var + EPS)

    x = x_nchw
    for (w1, b1, w2, b2) in params_oihw:
        r = x
        y = jax.nn.relu(inorm(conv(x, w1, b1)))
        y = inorm(conv(y, w2, b2))
        x = y + r
    return x


if __name__ == "__main__":
    # Shapes consistent with ResBlocks(num_blocks=2, dim=32) on (B, C, H, W)
    B, C, H, W = 2, 32, 8, 8
    NUM_BLOCKS = 2

    key = jax.random.PRNGKey(0)
    key, kx = jax.random.split(key)
    x = jax.random.normal(kx, (B, C, H, W), jnp.float32)

    params_oihw = []
    w1_slabs, w2_slabs = [], []
    for _ in range(NUM_BLOCKS):
        key, k1, k2, k3, k4 = jax.random.split(key, 5)
        w1 = 0.1 * jax.random.normal(k1, (C, C, 3, 3), jnp.float32)   # OIHW
        b1 = 0.01 * jax.random.normal(k2, (C,), jnp.float32)
        w2 = 0.1 * jax.random.normal(k3, (C, C, 3, 3), jnp.float32)
        b2 = 0.01 * jax.random.normal(k4, (C,), jnp.float32)
        params_oihw.append((w1, b1, w2, b2))
        w1_slabs.append(oihw_to_slab(w1))
        w2_slabs.append(oihw_to_slab(w2))

    # Stacked, pre-reshaped, bf16-cast weight slabs (one contiguous load per kernel).
    w1_all = jnp.stack(w1_slabs).astype(jnp.bfloat16)   # (NUM_BLOCKS, 9*C, C)
    w2_all = jnp.stack(w2_slabs).astype(jnp.bfloat16)   # (NUM_BLOCKS, 9*C, C)

    out = jax.block_until_ready(resblocks_forward(x, w1_all, w2_all))
    ref = jax.block_until_ready(ref_resblocks(x, params_oihw))

    assert out.shape == (B, C, H, W)
    max_err = float(jnp.max(jnp.abs(out - ref)))
    assert jnp.allclose(out, ref, atol=1e-2, rtol=1e-2), max_err

    print("KERNEL_OK")
</pallas_src>

<mosaic_0001>
module attributes {stable_mosaic.version = 11 : i64} {
  func.func @resblocks_kernel(%arg0: i32, %arg1: memref<1x8x8x32xf32, #tpu.memory_space<vmem>>, %arg2: memref<2x288x32xbf16, #tpu.memory_space<vmem>>, %arg3: memref<2x288x32xbf16, #tpu.memory_space<vmem>>, %arg4: memref<1x8x8x32xf32, #tpu.memory_space<vmem>>, %arg5: memref<10x10x32xf32, #tpu.memory_space<vmem>>, %arg6: memref<8x8x288xf32, #tpu.memory_space<vmem>>) attributes {dimension_semantics = [#tpu.dimension_semantics<parallel>], iteration_bounds = array<i64: 2>, scalar_prefetch = 0 : i64, scratch_operands = 2 : i64, tpu.core_type = #tpu.core_type<tc>, window_params = [{transform_indices = @transform_0, window_bounds = array<i64: 1, 8, 8, 32>}, {pipeline_mode = #tpu.pipeline_mode<synchronous>, transform_indices = @transform_1, window_bounds = array<i64: 2, 288, 32>}, {pipeline_mode = #tpu.pipeline_mode<synchronous>, transform_indices = @transform_2, window_bounds = array<i64: 2, 288, 32>}, {transform_indices = @transform_3, window_bounds = array<i64: 1, 8, 8, 32>}]} {
    %cst = arith.constant 0.000000e+00 : f32
    %0 = vector.broadcast %cst : f32 to vector<10x10x32xf32>
    %c0 = arith.constant 0 : index
    %c0_0 = arith.constant 0 : index
    %c0_1 = arith.constant 0 : index
    %1 = vector.load %arg5[%c0, %c0_0, %c0_1] : memref<10x10x32xf32, #tpu.memory_space<vmem>>, vector<10x10x32xf32>
    tpu.vector_store %arg5[%c0, %c0_0, %c0_1], %0 {strides = array<i32>} : memref<10x10x32xf32, #tpu.memory_space<vmem>>, vector<10x10x32xf32>,
    %c0_2 = arith.constant 0 : index
    %c0_3 = arith.constant 0 : index
    %c0_4 = arith.constant 0 : index
    %c0_5 = arith.constant 0 : index
    %2 = vector.load %arg1[%c0_2, %c0_3, %c0_4, %c0_5] : memref<1x8x8x32xf32, #tpu.memory_space<vmem>>, vector<1x8x8x32xf32>
    %3 = vector.shape_cast %2 : vector<1x8x8x32xf32> to vector<8x8x32xf32>
    %c0_6 = arith.constant 0 : index
    %c0_7 = arith.constant 0 : index
    %c0_8 = arith.constant 0 : index
    %4 = vector.load %arg2[%c0_6, %c0_7, %c0_8] : memref<2x288x32xbf16, #tpu.memory_space<vmem>>, vector<1x288x32xbf16>
    %5 = vector.shape_cast %4 : vector<1x288x32xbf16> to vector<288x32xbf16>
    %c1 = arith.constant 1 : index
    %c1_9 = arith.constant 1 : index
    %c0_10 = arith.constant 0 : index
    %6 = vector.load %arg5[%c1, %c1_9, %c0_10] : memref<10x10x32xf32, #tpu.memory_space<vmem>>, vector<8x8x32xf32>
    tpu.vector_store %arg5[%c1, %c1_9, %c0_10], %3 {strides = array<i32>} : memref<10x10x32xf32, #tpu.memory_space<vmem>>, vector<8x8x32xf32>,
    %c0_11 = arith.constant 0 : index
    %c0_12 = arith.constant 0 : index
    %c0_13 = arith.constant 0 : index
    %7 = vector.load %arg5[%c0_11, %c0_12, %c0_13] : memref<10x10x32xf32, #tpu.memory_space<vmem>>, vector<8x8x32xf32>
    %c0_14 = arith.constant 0 : index
    %c0_15 = arith.constant 0 : index
    %c0_16 = arith.constant 0 : index
    %8 = vector.load %arg6[%c0_14, %c0_15, %c0_16] : memref<8x8x288xf32, #tpu.memory_space<vmem>>, vector<8x8x32xf32>
    tpu.vector_store %arg6[%c0_14, %c0_15, %c0_16], %7 {strides = array<i32>} : memref<8x8x288xf32, #tpu.memory_space<vmem>>, vector<8x8x32xf32>,
    %c0_17 = arith.constant 0 : index
    %c1_18 = arith.constant 1 : index
    %c0_19 = arith.constant 0 : index
    %9 = vector.load %arg5[%c0_17, %c1_18, %c0_19] : memref<10x10x32xf32, #tpu.memory_space<vmem>>, vector<8x8x32xf32>
    %c0_20 = arith.constant 0 : index
    %c0_21 = arith.constant 0 : index
    %c32 = arith.constant 32 : index
    %10 = vector.load %arg6[%c0_20, %c0_21, %c32] : memref<8x8x288xf32, #tpu.memory_space<vmem>>, vector<8x8x32xf32>
    tpu.vector_store %arg6[%c0_20, %c0_21, %c32], %9 {strides = array<i32>} : memref<8x8x288xf32, #tpu.memory_space<vmem>>, vector<8x8x32xf32>,
    %c0_22 = arith.constant 0 : index
    %c2 = arith.constant 2 : index
    %c0_23 = arith.constant 0 : index
    %11 = vector.load %arg5[%c0_22, %c2, %c0_23] : memref<10x10x32xf32, #tpu.memory_space<vmem>>, vector<8x8x32xf32>
    %c0_24 = arith.constant 0 : index
    %c0_25 = arith.constant 0 : index
    %c64 = arith.constant 64 : index
    %12 = vector.load %arg6[%c0_24, %c0_25, %c64] : memref<8x8x288xf32, #tpu.memory_space<vmem>>, vector<8x8x32xf32>
    tpu.vector_store %arg6[%c0_24, %c0_25, %c64], %11 {strides = array<i32>} : memref<8x8x288xf32, #tpu.memory_space<vmem>>, vector<8x8x32xf32>,
    %c1_26 = arith.constant 1 : index
    %c0_27 = arith.constant 0 : index
    %c0_28 = arith.constant 0 : index
    %13 = vector.load %arg5[%c1_26, %c0_27, %c0_28] : memref<10x10x32xf32, #tpu.memory_space<vmem>>, vector<8x8x32xf32>
    %c0_29 = arith.constant 0 : index
    %c0_30 = arith.constant 0 : index
    %c96 = arith.constant 96 : index
    %14 = vector.load %arg6[%c0_29, %c0_30, %c96] : memref<8x8x288xf32, #tpu.memory_space<vmem>>, vector<8x8x32xf32>
    tpu.vector_store %arg6[%c0_29, %c0_30, %c96], %13 {strides = array<i32>} : memref<8x8x288xf32, #tpu.memory_space<vmem>>, vector<8x8x32xf32>,
    %c1_31 = arith.constant 1 : index
    %c1_32 = arith.constant 1 : index
    %c0_33 = arith.constant 0 : index
    %15 = vector.load %arg5[%c1_31, %c1_32, %c0_33] : memref<10x10x32xf32, #tpu.memory_space<vmem>>, vector<8x8x32xf32>
    %c0_34 = arith.constant 0 : index
    %c0_35 = arith.constant 0 : index
    %c128 = arith.constant 128 : index
    %16 = vector.load %arg6[%c0_34, %c0_35, %c128] : memref<8x8x288xf32, #tpu.memory_space<vmem>>, vector<8x8x32xf32>
    tpu.vector_store %arg6[%c0_34, %c0_35, %c128], %15 {strides = array<i32>} : memref<8x8x288xf32, #tpu.memory_space<vmem>>, vector<8x8x32xf32>,
    %c1_36 = arith.constant 1 : index
    %c2_37 = arith.constant 2 : index
    %c0_38 = arith.constant 0 : index
    %17 = vector.load %arg5[%c1_36, %c2_37, %c0_38] : memref<10x10x32xf32, #tpu.memory_space<vmem>>, vector<8x8x32xf32>
    %c0_39 = arith.constant 0 : index
    %c0_40 = arith.constant 0 : index
    %c160 = arith.constant 160 : index
    %18 = vector.load %arg6[%c0_39, %c0_40, %c160] : memref<8x8x288xf32, #tpu.memory_space<vmem>>, vector<8x8x32xf32>
    tpu.vector_store %arg6[%c0_39, %c0_40, %c160], %17 {strides = array<i32>} : memref<8x8x288xf32, #tpu.memory_space<vmem>>, vector<8x8x32xf32>,
    %c2_41 = arith.constant 2 : index
    %c0_42 = arith.constant 0 : index
    %c0_43 = arith.constant 0 : index
    %19 = vector.load %arg5[%c2_41, %c0_42, %c0_43] : memref<10x10x32xf32, #tpu.memory_space<vmem>>, vector<8x8x32xf32>
    %c0_44 = arith.constant 0 : index
    %c0_45 = arith.constant 0 : index
    %c192 = arith.constant 192 : index
    %20 = vector.load %arg6[%c0_44, %c0_45, %c192] : memref<8x8x288xf32, #tpu.memory_space<vmem>>, vector<8x8x32xf32>
    tpu.vector_store %arg6[%c0_44, %c0_45, %c192], %19 {strides = array<i32>} : memref<8x8x288xf32, #tpu.memory_space<vmem>>, vector<8x8x32xf32>,
    %c2_46 = arith.constant 2 : index
    %c1_47 = arith.constant 1 : index
    %c0_48 = arith.constant 0 : index
    %21 = vector.load %arg5[%c2_46, %c1_47, %c0_48] : memref<10x10x32xf32, #tpu.memory_space<vmem>>, vector<8x8x32xf32>
    %c0_49 = arith.constant 0 : index
    %c0_50 = arith.constant 0 : index
    %c224 = arith.constant 224 : index
    %22 = vector.load %arg6[%c0_49, %c0_50, %c224] : memref<8x8x288xf32, #tpu.memory_space<vmem>>, vector<8x8x32xf32>
    tpu.vector_store %arg6[%c0_49, %c0_50, %c224], %21 {strides = array<i32>} : memref<8x8x288xf32, #tpu.memory_space<vmem>>, vector<8x8x32xf32>,
    %c2_51 = arith.constant 2 : index
    %c2_52 = arith.constant 2 : index
    %c0_53 = arith.constant 0 : index
    %23 = vector.load %arg5[%c2_51, %c2_52, %c0_53] : memref<10x10x32xf32, #tpu.memory_space<vmem>>, vector<8x8x32xf32>
    %c0_54 = arith.constant 0 : index
    %c0_55 = arith.constant 0 : index
    %c256 = arith.constant 256 : index
    %24 = vector.load %arg6[%c0_54, %c0_55, %c256] : memref<8x8x288xf32, #tpu.memory_space<vmem>>, vector<8x8x32xf32>
    tpu.vector_store %arg6[%c0_54, %c0_55, %c256], %23 {strides = array<i32>} : memref<8x8x288xf32, #tpu.memory_space<vmem>>, vector<8x8x32xf32>,
    %c0_56 = arith.constant 0 : index
    %c0_57 = arith.constant 0 : index
    %c0_58 = arith.constant 0 : index
    %25 = vector.load %arg6[%c0_56, %c0_57, %c0_58] : memref<8x8x288xf32, #tpu.memory_space<vmem>>, vector<8x8x288xf32>
    %26 = vector.shape_cast %25 : vector<8x8x288xf32> to vector<64x288xf32>
    %27 = arith.truncf %26 : vector<64x288xf32> to vector<64x288xbf16>
    %cst_59 = arith.constant dense<0.000000e+00> : vector<64x32xf32>
    %28 = tpu.matmul %27, %5, %cst_59 {dimension_numbers = #tpu.dot_dimension_numbers<[1], [0], [0], [1], [0, 0, 1, 1], [], []>} : vector<64x288xbf16>, vector<288x32xbf16>, vector<64x32xf32> -> vector<64x32xf32>
    %cst_60 = arith.constant dense<0.000000e+00> : vector<32xf32>
    %29 = vector.multi_reduction <add>, %28, %cst_60 [0] : vector<64x32xf32> to vector<32xf32>
    %30 = vector.shape_cast %29 : vector<32xf32> to vector<1x32xf32>
    %cst_61 = arith.constant 1.562500e-02 : f32
    %31 = vector.broadcast %cst_61 : f32 to vector<1x32xf32>
    %32 = arith.mulf %30, %31 : vector<1x32xf32>
    %33 = arith.mulf %28, %28 : vector<64x32xf32>
    %cst_62 = arith.constant dense<0.000000e+00> : vector<32xf32>
    %34 = vector.multi_reduction <add>, %33, %cst_62 [0] : vector<64x32xf32> to vector<32xf32>
    %35 = vector.shape_cast %34 : vector<32xf32> to vector<1x32xf32>
    %cst_63 = arith.constant 1.562500e-02 : f32
    %36 = vector.broadcast %cst_63 : f32 to vector<1x32xf32>
    %37 = arith.mulf %35, %36 : vector<1x32xf32>
    %38 = arith.mulf %32, %32 : vector<1x32xf32>
    %39 = arith.subf %37, %38 : vector<1x32xf32>
    %40 = vector.broadcast %32 : vector<1x32xf32> to vector<64x32xf32>
    %41 = arith.subf %28, %40 : vector<64x32xf32>
    %cst_64 = arith.constant 9.99999974E-6 : f32
    %42 = vector.broadcast %cst_64 : f32 to vector<1x32xf32>
    %43 = arith.addf %39, %42 : vector<1x32xf32>
    %44 = math.rsqrt %43 : vector<1x32xf32>
    %45 = vector.broadcast %44 : vector<1x32xf32> to vector<64x32xf32>
    %46 = arith.mulf %41, %45 : vector<64x32xf32>
    %cst_65 = arith.constant 0.000000e+00 : f32
    %47 = vector.broadcast %cst_65 : f32 to vector<64x32xf32>
    %48 = arith.maximumf %46, %47 : vector<64x32xf32>
    %49 = vector.shape_cast %48 : vector<64x32xf32> to vector<8x8x32xf32>
    %c0_66 = arith.constant 0 : index
    %c0_67 = arith.constant 0 : index
    %c0_68 = arith.constant 0 : index
    %50 = vector.load %arg3[%c0_66, %c0_67, %c0_68] : memref<2x288x32xbf16, #tpu.memory_space<vmem>>, vector<1x288x32xbf16>
    %51 = vector.shape_cast %50 : vector<1x288x32xbf16> to vector<288x32xbf16>
    %c1_69 = arith.constant 1 : index
    %c1_70 = arith.constant 1 : index
    %c0_71 = arith.constant 0 : index
    %52 = vector.load %arg5[%c1_69, %c1_70, %c0_71] : memref<10x10x32xf32, #tpu.memory_space<vmem>>, vector<8x8x32xf32>
    tpu.vector_store %arg5[%c1_69, %c1_70, %c0_71], %49 {strides = array<i32>} : memref<10x10x32xf32, #tpu.memory_space<vmem>>, vector<8x8x32xf32>,
    %c0_72 = arith.constant 0 : index
    %c0_73 = arith.constant 0 : index
    %c0_74 = arith.constant 0 : index
    %53 = vector.load %arg5[%c0_72, %c0_73, %c0_74] : memref<10x10x32xf32, #tpu.memory_space<vmem>>, vector<8x8x32xf32>
    %c0_75 = arith.constant 0 : index
    %c0_76 = arith.constant 0 : index
    %c0_77 = arith.constant 0 : index
    %54 = vector.load %arg6[%c0_75, %c0_76, %c0_77] : memref<8x8x288xf32, #tpu.memory_space<vmem>>, vector<8x8x32xf32>
    tpu.vector_store %arg6[%c0_75, %c0_76, %c0_77], %53 {strides = array<i32>} : memref<8x8x288xf32, #tpu.memory_space<vmem>>, vector<8x8x32xf32>,
    %c0_78 = arith.constant 0 : index
    %c1_79 = arith.constant 1 : index
    %c0_80 = arith.constant 0 : index
    %55 = vector.load %arg5[%c0_78, %c1_79, %c0_80] : memref<10x10x32xf32, #tpu.memory_space<vmem>>, vector<8x8x32xf32>
    %c0_81 = arith.constant 0 : index
    %c0_82 = arith.constant 0 : index
    %c32_83 = arith.constant 32 : index
    %56 = vector.load %arg6[%c0_81, %c0_82, %c32_83] : memref<8x8x288xf32, #tpu.memory_space<vmem>>, vector<8x8x32xf32>
    tpu.vector_store %arg6[%c0_81, %c0_82, %c32_83], %55 {strides = array<i32>} : memref<8x8x288xf32, #tpu.memory_space<vmem>>, vector<8x8x32xf32>,
    %c0_84 = arith.constant 0 : index
    %c2_85 = arith.constant 2 : index
    %c0_86 = arith.constant 0 : index
    %57 = vector.load %arg5[%c0_84, %c2_85, %c0_86] : memref<10x10x32xf32, #tpu.memory_space<vmem>>, vector<8x8x32xf32>
    %c0_87 = arith.constant 0 : index
    %c0_88 = arith.constant 0 : index
    %c64_89 = arith.constant 64 : index
    %58 = vector.load %arg6[%c0_87, %c0_88, %c64_89] : memref<8x8x288xf32, #tpu.memory_space<vmem>>, vector<8x8x32xf32>
    tpu.vector_store %arg6[%c0_87, %c0_88, %c64_89], %57 {strides = array<i32>} : memref<8x8x288xf32, #tpu.memory_space<vmem>>, vector<8x8x32xf32>,
    %c1_90 = arith.constant 1 : index
    %c0_91 = arith.constant 0 : index
    %c0_92 = arith.constant 0 : index
    %59 = vector.load %arg5[%c1_90, %c0_91, %c0_92] : memref<10x10x32xf32, #tpu.memory_space<vmem>>, vector<8x8x32xf32>
    %c0_93 = arith.constant 0 : index
    %c0_94 = arith.constant 0 : index
    %c96_95 = arith.constant 96 : index
    %60 = vector.load %arg6[%c0_93, %c0_94, %c96_95] : memref<8x8x288xf32, #tpu.memory_space<vmem>>, vector<8x8x32xf32>
    tpu.vector_store %arg6[%c0_93, %c0_94, %c96_95], %59 {strides = array<i32>} : memref<8x8x288xf32, #tpu.memory_space<vmem>>, vector<8x8x32xf32>,
    %c1_96 = arith.constant 1 : index
    %c1_97 = arith.constant 1 : index
    %c0_98 = arith.constant 0 : index
    %61 = vector.load %arg5[%c1_96, %c1_97, %c0_98] : memref<10x10x32xf32, #tpu.memory_space<vmem>>, vector<8x8x32xf32>
    %c0_99 = arith.constant 0 : index
    %c0_100 = arith.constant 0 : index
    %c128_101 = arith.constant 128 : index
    %62 = vector.load %arg6[%c0_99, %c0_100, %c128_101] : memref<8x8x288xf32, #tpu.memory_space<vmem>>, vector<8x8x32xf32>
    tpu.vector_store %arg6[%c0_99, %c0_100, %c128_101], %61 {strides = array<i32>} : memref<8x8x288xf32, #tpu.memory_space<vmem>>, vector<8x8x32xf32>,
    %c1_102 = arith.constant 1 : index
    %c2_103 = arith.constant 2 : index
    %c0_104 = arith.constant 0 : index
    %63 = vector.load %arg5[%c1_102, %c2_103, %c0_104] : memref<10x10x32xf32, #tpu.memory_space<vmem>>, vector<8x8x32xf32>
    %c0_105 = arith.constant 0 : index
    %c0_106 = arith.constant 0 : index
    %c160_107 = arith.constant 160 : index
    %64 = vector.load %arg6[%c0_105, %c0_106, %c160_107] : memref<8x8x288xf32, #tpu.memory_space<vmem>>, vector<8x8x32xf32>
    tpu.vector_store %arg6[%c0_105, %c0_106, %c160_107], %63 {strides = array<i32>} : memref<8x8x288xf32, #tpu.memory_space<vmem>>, vector<8x8x32xf32>,
    %c2_108 = arith.constant 2 : index
    %c0_109 = arith.constant 0 : index
    %c0_110 = arith.constant 0 : index
    %65 = vector.load %arg5[%c2_108, %c0_109, %c0_110] : memref<10x10x32xf32, #tpu.memory_space<vmem>>, vector<8x8x32xf32>
    %c0_111 = arith.constant 0 : index
    %c0_112 = arith.constant 0 : index
    %c192_113 = arith.constant 192 : index
    %66 = vector.load %arg6[%c0_111, %c0_112, %c192_113] : memref<8x8x288xf32, #tpu.memory_space<vmem>>, vector<8x8x32xf32>
    tpu.vector_store %arg6[%c0_111, %c0_112, %c192_113], %65 {strides = array<i32>} : memref<8x8x288xf32, #tpu.memory_space<vmem>>, vector<8x8x32xf32>,
    %c2_114 = arith.constant 2 : index
    %c1_115 = arith.constant 1 : index
    %c0_116 = arith.constant 0 : index
    %67 = vector.load %arg5[%c2_114, %c1_115, %c0_116] : memref<10x10x32xf32, #tpu.memory_space<vmem>>, vector<8x8x32xf32>
    %c0_117 = arith.constant 0 : index
    %c0_118 = arith.constant 0 : index
    %c224_119 = arith.constant 224 : index
    %68 = vector.load %arg6[%c0_117, %c0_118, %c224_119] : memref<8x8x288xf32, #tpu.memory_space<vmem>>, vector<8x8x32xf32>
    tpu.vector_store %arg6[%c0_117, %c0_118, %c224_119], %67 {strides = array<i32>} : memref<8x8x288xf32, #tpu.memory_space<vmem>>, vector<8x8x32xf32>,
    %c2_120 = arith.constant 2 : index
    %c2_121 = arith.constant 2 : index
    %c0_122 = arith.constant 0 : index
    %69 = vector.load %arg5[%c2_120, %c2_121, %c0_122] : memref<10x10x32xf32, #tpu.memory_space<vmem>>, vector<8x8x32xf32>
    %c0_123 = arith.constant 0 : index
    %c0_124 = arith.constant 0 : index
    %c256_125 = arith.constant 256 : index
    %70 = vector.load %arg6[%c0_123, %c0_124, %c256_125] : memref<8x8x288xf32, #tpu.memory_space<vmem>>, vector<8x8x32xf32>
    tpu.vector_store %arg6[%c0_123, %c0_124, %c256_125], %69 {strides = array<i32>} : memref<8x8x288xf32, #tpu.memory_space<vmem>>, vector<8x8x32xf32>,
    %c0_126 = arith.constant 0 : index
    %c0_127 = arith.constant 0 : index
    %c0_128 = arith.constant 0 : index
    %71 = vector.load %arg6[%c0_126, %c0_127, %c0_128] : memref<8x8x288xf32, #tpu.memory_space<vmem>>, vector<8x8x288xf32>
    %72 = vector.shape_cast %71 : vector<8x8x288xf32> to vector<64x288xf32>
    %73 = arith.truncf %72 : vector<64x288xf32> to vector<64x288xbf16>
    %cst_129 = arith.constant dense<0.000000e+00> : vector<64x32xf32>
    %74 = tpu.matmul %73, %51, %cst_129 {dimension_numbers = #tpu.dot_dimension_numbers<[1], [0], [0], [1], [0, 0, 1, 1], [], []>} : vector<64x288xbf16>, vector<288x32xbf16>, vector<64x32xf32> -> vector<64x32xf32>
    %cst_130 = arith.constant dense<0.000000e+00> : vector<32xf32>
    %75 = vector.multi_reduction <add>, %74, %cst_130 [0] : vector<64x32xf32> to vector<32xf32>
    %76 = vector.shape_cast %75 : vector<32xf32> to vector<1x32xf32>
    %cst_131 = arith.constant 1.562500e-02 : f32
    %77 = vector.broadcast %cst_131 : f32 to vector<1x32xf32>
    %78 = arith.mulf %76, %77 : vector<1x32xf32>
    %79 = arith.mulf %74, %74 : vector<64x32xf32>
    %cst_132 = arith.constant dense<0.000000e+00> : vector<32xf32>
    %80 = vector.multi_reduction <add>, %79, %cst_132 [0] : vector<64x32xf32> to vector<32xf32>
    %81 = vector.shape_cast %80 : vector<32xf32> to vector<1x32xf32>
    %cst_133 = arith.constant 1.562500e-02 : f32
    %82 = vector.broadcast %cst_133 : f32 to vector<1x32xf32>
    %83 = arith.mulf %81, %82 : vector<1x32xf32>
    %84 = arith.mulf %78, %78 : vector<1x32xf32>
    %85 = arith.subf %83, %84 : vector<1x32xf32>
    %86 = vector.broadcast %78 : vector<1x32xf32> to vector<64x32xf32>
    %87 = arith.subf %74, %86 : vector<64x32xf32>
    %cst_134 = arith.constant 9.99999974E-6 : f32
    %88 = vector.broadcast %cst_134 : f32 to vector<1x32xf32>
    %89 = arith.addf %85, %88 : vector<1x32xf32>
    %90 = math.rsqrt %89 : vector<1x32xf32>
    %91 = vector.broadcast %90 : vector<1x32xf32> to vector<64x32xf32>
    %92 = arith.mulf %87, %91 : vector<64x32xf32>
    %93 = vector.shape_cast %92 : vector<64x32xf32> to vector<8x8x32xf32>
    %94 = arith.addf %3, %93 : vector<8x8x32xf32>
    %c1_135 = arith.constant 1 : index
    %c0_136 = arith.constant 0 : index
    %c0_137 = arith.constant 0 : index
    %95 = vector.load %arg2[%c1_135, %c0_136, %c0_137] : memref<2x288x32xbf16, #tpu.memory_space<vmem>>, vector<1x288x32xbf16>
    %96 = vector.shape_cast %95 : vector<1x288x32xbf16> to vector<288x32xbf16>
    %c1_138 = arith.constant 1 : index
    %c1_139 = arith.constant 1 : index
    %c0_140 = arith.constant 0 : index
    %97 = vector.load %arg5[%c1_138, %c1_139, %c0_140] : memref<10x10x32xf32, #tpu.memory_space<vmem>>, vector<8x8x32xf32>
    tpu.vector_store %arg5[%c1_138, %c1_139, %c0_140], %94 {strides = array<i32>} : memref<10x10x32xf32, #tpu.memory_space<vmem>>, vector<8x8x32xf32>,
    %c0_141 = arith.constant 0 : index
    %c0_142 = arith.constant 0 : index
    %c0_143 = arith.constant 0 : index
    %98 = vector.load %arg5[%c0_141, %c0_142, %c0_143] : memref<10x10x32xf32, #tpu.memory_space<vmem>>, vector<8x8x32xf32>
    %c0_144 = arith.constant 0 : index
    %c0_145 = arith.constant 0 : index
    %c0_146 = arith.constant 0 : index
    %99 = vector.load %arg6[%c0_144, %c0_145, %c0_146] : memref<8x8x288xf32, #tpu.memory_space<vmem>>, vector<8x8x32xf32>
    tpu.vector_store %arg6[%c0_144, %c0_145, %c0_146], %98 {strides = array<i32>} : memref<8x8x288xf32, #tpu.memory_space<vmem>>, vector<8x8x32xf32>,
    %c0_147 = arith.constant 0 : index
    %c1_148 = arith.constant 1 : index
    %c0_149 = arith.constant 0 : index
    %100 = vector.load %arg5[%c0_147, %c1_148, %c0_149] : memref<10x10x32xf32, #tpu.memory_space<vmem>>, vector<8x8x32xf32>
    %c0_150 = arith.constant 0 : index
    %c0_151 = arith.constant 0 : index
    %c32_152 = arith.constant 32 : index
    %101 = vector.load %arg6[%c0_150, %c0_151, %c32_152] : memref<8x8x288xf32, #tpu.memory_space<vmem>>, vector<8x8x32xf32>
    tpu.vector_store %arg6[%c0_150, %c0_151, %c32_152], %100 {strides = array<i32>} : memref<8x8x288xf32, #tpu.memory_space<vmem>>, vector<8x8x32xf32>,
    %c0_153 = arith.constant 0 : index
    %c2_154 = arith.constant 2 : index
    %c0_155 = arith.constant 0 : index
    %102 = vector.load %arg5[%c0_153, %c2_154, %c0_155] : memref<10x10x32xf32, #tpu.memory_space<vmem>>, vector<8x8x32xf32>
    %c0_156 = arith.constant 0 : index
    %c0_157 = arith.constant 0 : index
    %c64_158 = arith.constant 64 : index
    %103 = vector.load %arg6[%c0_156, %c0_157, %c64_158] : memref<8x8x288xf32, #tpu.memory_space<vmem>>, vector<8x8x32xf32>
    tpu.vector_store %arg6[%c0_156, %c0_157, %c64_158], %102 {strides = array<i32>} : memref<8x8x288xf32, #tpu.memory_space<vmem>>, vector<8x8x32xf32>,
    %c1_159 = arith.constant 1 : index
    %c0_160 = arith.constant 0 : index
    %c0_161 = arith.constant 0 : index
    %104 = vector.load %arg5[%c1_159, %c0_160, %c0_161] : memref<10x10x32xf32, #tpu.memory_space<vmem>>, vector<8x8x32xf32>
    %c0_162 = arith.constant 0 : index
    %c0_163 = arith.constant 0 : index
    %c96_164 = arith.constant 96 : index
    %105 = vector.load %arg6[%c0_162, %c0_163, %c96_164] : memref<8x8x288xf32, #tpu.memory_space<vmem>>, vector<8x8x32xf32>
    tpu.vector_store %arg6[%c0_162, %c0_163, %c96_164], %104 {strides = array<i32>} : memref<8x8x288xf32, #tpu.memory_space<vmem>>, vector<8x8x32xf32>,
    %c1_165 = arith.constant 1 : index
    %c1_166 = arith.constant 1 : index
    %c0_167 = arith.constant 0 : index
    %106 = vector.load %arg5[%c1_165, %c1_166, %c0_167] : memref<10x10x32xf32, #tpu.memory_space<vmem>>, vector<8x8x32xf32>
    %c0_168 = arith.constant 0 : index
    %c0_169 = arith.constant 0 : index
    %c128_170 = arith.constant 128 : index
    %107 = vector.load %arg6[%c0_168, %c0_169, %c128_170] : memref<8x8x288xf32, #tpu.memory_space<vmem>>, vector<8x8x32xf32>
    tpu.vector_store %arg6[%c0_168, %c0_169, %c128_170], %106 {strides = array<i32>} : memref<8x8x288xf32, #tpu.memory_space<vmem>>, vector<8x8x32xf32>,
    %c1_171 = arith.constant 1 : index
    %c2_172 = arith.constant 2 : index
    %c0_173 = arith.constant 0 : index
    %108 = vector.load %arg5[%c1_171, %c2_172, %c0_173] : memref<10x10x32xf32, #tpu.memory_space<vmem>>, vector<8x8x32xf32>
    %c0_174 = arith.constant 0 : index
    %c0_175 = arith.constant 0 : index
    %c160_176 = arith.constant 160 : index
    %109 = vector.load %arg6[%c0_174, %c0_175, %c160_176] : memref<8x8x288xf32, #tpu.memory_space<vmem>>, vector<8x8x32xf32>
    tpu.vector_store %arg6[%c0_174, %c0_175, %c160_176], %108 {strides = array<i32>} : memref<8x8x288xf32, #tpu.memory_space<vmem>>, vector<8x8x32xf32>,
    %c2_177 = arith.constant 2 : index
    %c0_178 = arith.constant 0 : index
    %c0_179 = arith.constant 0 : index
    %110 = vector.load %arg5[%c2_177, %c0_178, %c0_179] : memref<10x10x32xf32, #tpu.memory_space<vmem>>, vector<8x8x32xf32>
    %c0_180 = arith.constant 0 : index
    %c0_181 = arith.constant 0 : index
    %c192_182 = arith.constant 192 : index
    %111 = vector.load %arg6[%c0_180, %c0_181, %c192_182] : memref<8x8x288xf32, #tpu.memory_space<vmem>>, vector<8x8x32xf32>
    tpu.vector_store %arg6[%c0_180, %c0_181, %c192_182], %110 {strides = array<i32>} : memref<8x8x288xf32, #tpu.memory_space<vmem>>, vector<8x8x32xf32>,
    %c2_183 = arith.constant 2 : index
    %c1_184 = arith.constant 1 : index
    %c0_185 = arith.constant 0 : index
    %112 = vector.load %arg5[%c2_183, %c1_184, %c0_185] : memref<10x10x32xf32, #tpu.memory_space<vmem>>, vector<8x8x32xf32>
    %c0_186 = arith.constant 0 : index
    %c0_187 = arith.constant 0 : index
    %c224_188 = arith.constant 224 : index
    %113 = vector.load %arg6[%c0_186, %c0_187, %c224_188] : memref<8x8x288xf32, #tpu.memory_space<vmem>>, vector<8x8x32xf32>
    tpu.vector_store %arg6[%c0_186, %c0_187, %c224_188], %112 {strides = array<i32>} : memref<8x8x288xf32, #tpu.memory_space<vmem>>, vector<8x8x32xf32>,
    %c2_189 = arith.constant 2 : index
    %c2_190 = arith.constant 2 : index
    %c0_191 = arith.constant 0 : index
    %114 = vector.load %arg5[%c2_189, %c2_190, %c0_191] : memref<10x10x32xf32, #tpu.memory_space<vmem>>, vector<8x8x32xf32>
    %c0_192 = arith.constant 0 : index
    %c0_193 = arith.constant 0 : index
    %c256_194 = arith.constant 256 : index
    %115 = vector.load %arg6[%c0_192, %c0_193, %c256_194] : memref<8x8x288xf32, #tpu.memory_space<vmem>>, vector<8x8x32xf32>
    tpu.vector_store %arg6[%c0_192, %c0_193, %c256_194], %114 {strides = array<i32>} : memref<8x8x288xf32, #tpu.memory_space<vmem>>, vector<8x8x32xf32>,
    %c0_195 = arith.constant 0 : index
    %c0_196 = arith.constant 0 : index
    %c0_197 = arith.constant 0 : index
    %116 = vector.load %arg6[%c0_195, %c0_196, %c0_197] : memref<8x8x288xf32, #tpu.memory_space<vmem>>, vector<8x8x288xf32>
    %117 = vector.shape_cast %116 : vector<8x8x288xf32> to vector<64x288xf32>
    %118 = arith.truncf %117 : vector<64x288xf32> to vector<64x288xbf16>
    %cst_198 = arith.constant dense<0.000000e+00> : vector<64x32xf32>
    %119 = tpu.matmul %118, %96, %cst_198 {dimension_numbers = #tpu.dot_dimension_numbers<[1], [0], [0], [1], [0, 0, 1, 1], [], []>} : vector<64x288xbf16>, vector<288x32xbf16>, vector<64x32xf32> -> vector<64x32xf32>
    %cst_199 = arith.constant dense<0.000000e+00> : vector<32xf32>
    %120 = vector.multi_reduction <add>, %119, %cst_199 [0] : vector<64x32xf32> to vector<32xf32>
    %121 = vector.shape_cast %120 : vector<32xf32> to vector<1x32xf32>
    %cst_200 = arith.constant 1.562500e-02 : f32
    %122 = vector.broadcast %cst_200 : f32 to vector<1x32xf32>
    %123 = arith.mulf %121, %122 : vector<1x32xf32>
    %124 = arith.mulf %119, %119 : vector<64x32xf32>
    %cst_201 = arith.constant dense<0.000000e+00> : vector<32xf32>
    %125 = vector.multi_reduction <add>, %124, %cst_201 [0] : vector<64x32xf32> to vector<32xf32>
    %126 = vector.shape_cast %125 : vector<32xf32> to vector<1x32xf32>
    %cst_202 = arith.constant 1.562500e-02 : f32
    %127 = vector.broadcast %cst_202 : f32 to vector<1x32xf32>
    %128 = arith.mulf %126, %127 : vector<1x32xf32>
    %129 = arith.mulf %123, %123 : vector<1x32xf32>
    %130 = arith.subf %128, %129 : vector<1x32xf32>
    %131 = vector.broadcast %123 : vector<1x32xf32> to vector<64x32xf32>
    %132 = arith.subf %119, %131 : vector<64x32xf32>
    %cst_203 = arith.constant 9.99999974E-6 : f32
    %133 = vector.broadcast %cst_203 : f32 to vector<1x32xf32>
    %134 = arith.addf %130, %133 : vector<1x32xf32>
    %135 = math.rsqrt %134 : vector<1x32xf32>
    %136 = vector.broadcast %135 : vector<1x32xf32> to vector<64x32xf32>
    %137 = arith.mulf %132, %136 : vector<64x32xf32>
    %cst_204 = arith.constant 0.000000e+00 : f32
    %138 = vector.broadcast %cst_204 : f32 to vector<64x32xf32>
    %139 = arith.maximumf %137, %138 : vector<64x32xf32>
    %140 = vector.shape_cast %139 : vector<64x32xf32> to vector<8x8x32xf32>
    %c1_205 = arith.constant 1 : index
    %c0_206 = arith.constant 0 : index
    %c0_207 = arith.constant 0 : index
    %141 = vector.load %arg3[%c1_205, %c0_206, %c0_207] : memref<2x288x32xbf16, #tpu.memory_space<vmem>>, vector<1x288x32xbf16>
    %142 = vector.shape_cast %141 : vector<1x288x32xbf16> to vector<288x32xbf16>
    %c1_208 = arith.constant 1 : index
    %c1_209 = arith.constant 1 : index
    %c0_210 = arith.constant 0 : index
    %143 = vector.load %arg5[%c1_208, %c1_209, %c0_210] : memref<10x10x32xf32, #tpu.memory_space<vmem>>, vector<8x8x32xf32>
    tpu.vector_store %arg5[%c1_208, %c1_209, %c0_210], %140 {strides = array<i32>} : memref<10x10x32xf32, #tpu.memory_space<vmem>>, vector<8x8x32xf32>,
    %c0_211 = arith.constant 0 : index
    %c0_212 = arith.constant 0 : index
    %c0_213 = arith.constant 0 : index
    %144 = vector.load %arg5[%c0_211, %c0_212, %c0_213] : memref<10x10x32xf32, #tpu.memory_space<vmem>>, vector<8x8x32xf32>
    %c0_214 = arith.constant 0 : index
    %c0_215 = arith.constant 0 : index
    %c0_216 = arith.constant 0 : index
    %145 = vector.load %arg6[%c0_214, %c0_215, %c0_216] : memref<8x8x288xf32, #tpu.memory_space<vmem>>, vector<8x8x32xf32>
    tpu.vector_store %arg6[%c0_214, %c0_215, %c0_216], %144 {strides = array<i32>} : memref<8x8x288xf32, #tpu.memory_space<vmem>>, vector<8x8x32xf32>,
    %c0_217 = arith.constant 0 : index
    %c1_218 = arith.constant 1 : index
    %c0_219 = arith.constant 0 : index
    %146 = vector.load %arg5[%c0_217, %c1_218, %c0_219] : memref<10x10x32xf32, #tpu.memory_space<vmem>>, vector<8x8x32xf32>
    %c0_220 = arith.constant 0 : index
    %c0_221 = arith.constant 0 : index
    %c32_222 = arith.constant 32 : index
    %147 = vector.load %arg6[%c0_220, %c0_221, %c32_222] : memref<8x8x288xf32, #tpu.memory_space<vmem>>, vector<8x8x32xf32>
    tpu.vector_store %arg6[%c0_220, %c0_221, %c32_222], %146 {strides = array<i32>} : memref<8x8x288xf32, #tpu.memory_space<vmem>>, vector<8x8x32xf32>,
    %c0_223 = arith.constant 0 : index
    %c2_224 = arith.constant 2 : index
    %c0_225 = arith.constant 0 : index
    %148 = vector.load %arg5[%c0_223, %c2_224, %c0_225] : memref<10x10x32xf32, #tpu.memory_space<vmem>>, vector<8x8x32xf32>
    %c0_226 = arith.constant 0 : index
    %c0_227 = arith.constant 0 : index
    %c64_228 = arith.constant 64 : index
    %149 = vector.load %arg6[%c0_226, %c0_227, %c64_228] : memref<8x8x288xf32, #tpu.memory_space<vmem>>, vector<8x8x32xf32>
    tpu.vector_store %arg6[%c0_226, %c0_227, %c64_228], %148 {strides = array<i32>} : memref<8x8x288xf32, #tpu.memory_space<vmem>>, vector<8x8x32xf32>,
    %c1_229 = arith.constant 1 : index
    %c0_230 = arith.constant 0 : index
    %c0_231 = arith.constant 0 : index
    %150 = vector.load %arg5[%c1_229, %c0_230, %c0_231] : memref<10x10x32xf32, #tpu.memory_space<vmem>>, vector<8x8x32xf32>
    %c0_232 = arith.constant 0 : index
    %c0_233 = arith.constant 0 : index
    %c96_234 = arith.constant 96 : index
    %151 = vector.load %arg6[%c0_232, %c0_233, %c96_234] : memref<8x8x288xf32, #tpu.memory_space<vmem>>, vector<8x8x32xf32>
    tpu.vector_store %arg6[%c0_232, %c0_233, %c96_234], %150 {strides = array<i32>} : memref<8x8x288xf32, #tpu.memory_space<vmem>>, vector<8x8x32xf32>,
    %c1_235 = arith.constant 1 : index
    %c1_236 = arith.constant 1 : index
    %c0_237 = arith.constant 0 : index
    %152 = vector.load %arg5[%c1_235, %c1_236, %c0_237] : memref<10x10x32xf32, #tpu.memory_space<vmem>>, vector<8x8x32xf32>
    %c0_238 = arith.constant 0 : index
    %c0_239 = arith.constant 0 : index
    %c128_240 = arith.constant 128 : index
    %153 = vector.load %arg6[%c0_238, %c0_239, %c128_240] : memref<8x8x288xf32, #tpu.memory_space<vmem>>, vector<8x8x32xf32>
    tpu.vector_store %arg6[%c0_238, %c0_239, %c128_240], %152 {strides = array<i32>} : memref<8x8x288xf32, #tpu.memory_space<vmem>>, vector<8x8x32xf32>,
    %c1_241 = arith.constant 1 : index
    %c2_242 = arith.constant 2 : index
    %c0_243 = arith.constant 0 : index
    %154 = vector.load %arg5[%c1_241, %c2_242, %c0_243] : memref<10x10x32xf32, #tpu.memory_space<vmem>>, vector<8x8x32xf32>
    %c0_244 = arith.constant 0 : index
    %c0_245 = arith.constant 0 : index
    %c160_246 = arith.constant 160 : index
    %155 = vector.load %arg6[%c0_244, %c0_245, %c160_246] : memref<8x8x288xf32, #tpu.memory_space<vmem>>, vector<8x8x32xf32>
    tpu.vector_store %arg6[%c0_244, %c0_245, %c160_246], %154 {strides = array<i32>} : memref<8x8x288xf32, #tpu.memory_space<vmem>>, vector<8x8x32xf32>,
    %c2_247 = arith.constant 2 : index
    %c0_248 = arith.constant 0 : index
    %c0_249 = arith.constant 0 : index
    %156 = vector.load %arg5[%c2_247, %c0_248, %c0_249] : memref<10x10x32xf32, #tpu.memory_space<vmem>>, vector<8x8x32xf32>
    %c0_250 = arith.constant 0 : index
    %c0_251 = arith.constant 0 : index
    %c192_252 = arith.constant 192 : index
    %157 = vector.load %arg6[%c0_250, %c0_251, %c192_252] : memref<8x8x288xf32, #tpu.memory_space<vmem>>, vector<8x8x32xf32>
    tpu.vector_store %arg6[%c0_250, %c0_251, %c192_252], %156 {strides = array<i32>} : memref<8x8x288xf32, #tpu.memory_space<vmem>>, vector<8x8x32xf32>,
    %c2_253 = arith.constant 2 : index
    %c1_254 = arith.constant 1 : index
    %c0_255 = arith.constant 0 : index
    %158 = vector.load %arg5[%c2_253, %c1_254, %c0_255] : memref<10x10x32xf32, #tpu.memory_space<vmem>>, vector<8x8x32xf32>
    %c0_256 = arith.constant 0 : index
    %c0_257 = arith.constant 0 : index
    %c224_258 = arith.constant 224 : index
    %159 = vector.load %arg6[%c0_256, %c0_257, %c224_258] : memref<8x8x288xf32, #tpu.memory_space<vmem>>, vector<8x8x32xf32>
    tpu.vector_store %arg6[%c0_256, %c0_257, %c224_258], %158 {strides = array<i32>} : memref<8x8x288xf32, #tpu.memory_space<vmem>>, vector<8x8x32xf32>,
    %c2_259 = arith.constant 2 : index
    %c2_260 = arith.constant 2 : index
    %c0_261 = arith.constant 0 : index
    %160 = vector.load %arg5[%c2_259, %c2_260, %c0_261] : memref<10x10x32xf32, #tpu.memory_space<vmem>>, vector<8x8x32xf32>
    %c0_262 = arith.constant 0 : index
    %c0_263 = arith.constant 0 : index
    %c256_264 = arith.constant 256 : index
    %161 = vector.load %arg6[%c0_262, %c0_263, %c256_264] : memref<8x8x288xf32, #tpu.memory_space<vmem>>, vector<8x8x32xf32>
    tpu.vector_store %arg6[%c0_262, %c0_263, %c256_264], %160 {strides = array<i32>} : memref<8x8x288xf32, #tpu.memory_space<vmem>>, vector<8x8x32xf32>,
    %c0_265 = arith.constant 0 : index
    %c0_266 = arith.constant 0 : index
    %c0_267 = arith.constant 0 : index
    %162 = vector.load %arg6[%c0_265, %c0_266, %c0_267] : memref<8x8x288xf32, #tpu.memory_space<vmem>>, vector<8x8x288xf32>
    %163 = vector.shape_cast %162 : vector<8x8x288xf32> to vector<64x288xf32>
    %164 = arith.truncf %163 : vector<64x288xf32> to vector<64x288xbf16>
    %cst_268 = arith.constant dense<0.000000e+00> : vector<64x32xf32>
    %165 = tpu.matmul %164, %142, %cst_268 {dimension_numbers = #tpu.dot_dimension_numbers<[1], [0], [0], [1], [0, 0, 1, 1], [], []>} : vector<64x288xbf16>, vector<288x32xbf16>, vector<64x32xf32> -> vector<64x32xf32>
    %cst_269 = arith.constant dense<0.000000e+00> : vector<32xf32>
    %166 = vector.multi_reduction <add>, %165, %cst_269 [0] : vector<64x32xf32> to vector<32xf32>
    %167 = vector.shape_cast %166 : vector<32xf32> to vector<1x32xf32>
    %cst_270 = arith.constant 1.562500e-02 : f32
    %168 = vector.broadcast %cst_270 : f32 to vector<1x32xf32>
    %169 = arith.mulf %167, %168 : vector<1x32xf32>
    %170 = arith.mulf %165, %165 : vector<64x32xf32>
    %cst_271 = arith.constant dense<0.000000e+00> : vector<32xf32>
    %171 = vector.multi_reduction <add>, %170, %cst_271 [0] : vector<64x32xf32> to vector<32xf32>
    %172 = vector.shape_cast %171 : vector<32xf32> to vector<1x32xf32>
    %cst_272 = arith.constant 1.562500e-02 : f32
    %173 = vector.broadcast %cst_272 : f32 to vector<1x32xf32>
    %174 = arith.mulf %172, %173 : vector<1x32xf32>
    %175 = arith.mulf %169, %169 : vector<1x32xf32>
    %176 = arith.subf %174, %175 : vector<1x32xf32>
    %177 = vector.broadcast %169 : vector<1x32xf32> to vector<64x32xf32>
    %178 = arith.subf %165, %177 : vector<64x32xf32>
    %cst_273 = arith.constant 9.99999974E-6 : f32
    %179 = vector.broadcast %cst_273 : f32 to vector<1x32xf32>
    %180 = arith.addf %176, %179 : vector<1x32xf32>
    %181 = math.rsqrt %180 : vector<1x32xf32>
    %182 = vector.broadcast %181 : vector<1x32xf32> to vector<64x32xf32>
    %183 = arith.mulf %178, %182 : vector<64x32xf32>
    %184 = vector.shape_cast %183 : vector<64x32xf32> to vector<8x8x32xf32>
    %185 = arith.addf %94, %184 : vector<8x8x32xf32>
    %c0_274 = arith.constant 0 : index
    %c0_275 = arith.constant 0 : index
    %c0_276 = arith.constant 0 : index
    %c0_277 = arith.constant 0 : index
    %186 = vector.load %arg4[%c0_274, %c0_275, %c0_276, %c0_277] : memref<1x8x8x32xf32, #tpu.memory_space<vmem>>, vector<1x8x8x32xf32>
    %187 = vector.shape_cast %186 : vector<1x8x8x32xf32> to vector<8x8x32xf32>
    %188 = vector.shape_cast %185 : vector<8x8x32xf32> to vector<1x8x8x32xf32>
    tpu.vector_store %arg4[%c0_274, %c0_275, %c0_276, %c0_277], %188 {strides = array<i32>} : memref<1x8x8x32xf32, #tpu.memory_space<vmem>>, vector<1x8x8x32xf32>,
    return
  }
  func.func @transform_0(%arg0: i32) -> (i32, i32, i32, i32) {
    %c0_i32 = arith.constant 0 : i32
    %c0_i32_0 = arith.constant 0 : i32
    %c0_i32_1 = arith.constant 0 : i32
    %c0_i32_2 = arith.constant 0 : i32
    return %arg0, %c0_i32, %c0_i32_0, %c0_i32_1 : i32, i32, i32, i32
  }
  func.func @transform_1(%arg0: i32) -> (i32, i32, i32) {
    %c0_i32 = arith.constant 0 : i32
    %c0_i32_0 = arith.constant 0 : i32
    %c0_i32_1 = arith.constant 0 : i32
    %c0_i32_2 = arith.constant 0 : i32
    return %c0_i32, %c0_i32_0, %c0_i32_1 : i32, i32, i32
  }
  func.func @transform_2(%arg0: i32) -> (i32, i32, i32) {
    %c0_i32 = arith.constant 0 : i32
    %c0_i32_0 = arith.constant 0 : i32
    %c0_i32_1 = arith.constant 0 : i32
    %c0_i32_2 = arith.constant 0 : i32
    return %c0_i32, %c0_i32_0, %c0_i32_1 : i32, i32, i32
  }
  func.func @transform_3(%arg0: i32) -> (i32, i32, i32, i32) {
    %c0_i32 = arith.constant 0 : i32
    %c0_i32_0 = arith.constant 0 : i32
    %c0_i32_1 = arith.constant 0 : i32
    %c0_i32_2 = arith.constant 0 : i32
    return %arg0, %c0_i32, %c0_i32_0, %c0_i32_1 : i32, i32, i32, i32
  }
}

</mosaic_0001>

<llo_original>
// kernel: tpu_custom_call.1
$region0: #{tpu_custom_call.1}
  #allocation0 [shape = 'u32[]', space=smem, size = 0x4, offset = 0x4, fixed_abs, tag = 'smem constant byte address 0x4 - core index']
  #allocation1 [shape = 'u32[72,128]{1,0:T(1,128)}', space=vmem, size = 0x9000, scoped, tag = 'internal scratch']
  #allocation2 [shape = 'f32[10,10,32]{2,1,0:T(8,128)}', space=vmem, size = 0x14000, scoped, tag = 'scratch operand']
  #allocation3 [shape = 'f32[8,8,288]{2,1,0:T(8,128)}', space=vmem, size = 0x18000, scoped, tag = 'scratch operand']
  %s0 = inlined_call_operand.vmem [shape: f32[2,8,8,32], index: 0, kind: input, shape index: {}]
  %s1 = inlined_call_operand.vmem [shape: bf16[2,288,32], index: 1, kind: input, shape index: {}]
  %s2 = inlined_call_operand.vmem [shape: bf16[2,288,32], index: 2, kind: input, shape index: {}]
  %s3 = inlined_call_operand.hbm [shape: f32[2,8,8,32], index: 3, kind: output, shape index: {}]
  %s4 = sld [smem:[#allocation0]]
  $region45: #{tpu_custom_call.1} parent=0
    _
  %s6 = ssub.s32 1, %s4
  %s7 = scalar_select 0, %s6, %s4
  $region1: #{tpu_custom_call.1} parent=0
    #allocation4 [shape = 'u8[65536]{0}', space=vmem, size = 0x10000, scoped, tag = 'output window, operand 0']
    #allocation5 [shape = 's32[2]{0}', space=sflag, size = 0x8, scoped, tag = 'scoped memory for tpu_custom_call.1']
    %8 = vsyncpa [#allocation5], 0
    %s9 = scalar_lea.sflag [#allocation5], 1
    %10 = vsyncpa %s9, 0
    loop: start=0, step=1, limit=4
    $region2: #{tpu_custom_call.1} parent=1 // loop_pre_header
      _
    $region3: #{tpu_custom_call.1} parent=1 // loop_header
      %s12 = sphi 0, %s16
      %p13 = scmp.ge.s32.totalorder %s12, 4
      %s22 = sphi 0, %s24
      %s25 = sphi 0, %s22
      %s26 = sphi 0, %s25
      %s42 = sphi 0, %s26
      %s46 = sphi 0, %s46
      %s48 = sphi 0, %s46
      %s49 = sphi 0, %s48
      %s63 = sphi 0, %s49
      %s67 = sphi 0, %s67
      %s69 = sphi 0, %s67
      %s70 = sphi 0, %s69
      %s84 = sphi 0, %s70
      %s90 = sphi 0, %s92
      %s93 = sphi 0, %s90
      %s94 = sphi 0, %s93
      %s110 = sphi 0, %s94
    $region4: #{tpu_custom_call.1} parent=1 // loop_header_branch
      %15 = sbr.rel (%p13) target = $region8
    $region5: #{tpu_custom_call.1} parent=1 // loop_body
      %s17 = ssub.s32 %s12, 1
      %s18 = ssub.s32 %s12, 2
      %s19 = sadd.s32 %s12, 1
      %s20 = ssub.s32 %s12, %s19
      %p21 = scmp.eq.s32.totalorder %s20, 0
      %s23 = sadd.s32 %s22, 1
      %s24 = scalar_select %p21, %s22, %s23
      %p27 = pneg %p21
      %p28 = scmp.eq.s32.totalorder %s12, 1
      %p29 = por %p27, %p28
      %p30 = scmp.ne.s32.totalorder %s22, %s25
      %p31 = scmp.eq.s32.totalorder %s12, 0
      %p32 = por %p30, %p31
      %p33 = scmp.ne.s32.totalorder %s22, %s25
      %p34 = scmp.eq.s32.totalorder %s17, 1
      %p35 = por %p33, %p34
      %p36 = scmp.ne.s32.totalorder %s25, %s26
      %p37 = scmp.eq.s32.totalorder %s17, 0
      %p38 = por %p36, %p37
      %p39 = scmp.ne.s32.totalorder %s25, %s26
      %p40 = scmp.eq.s32.totalorder %s18, 1
      %p41 = por %p39, %p40
      %p43 = scmp.ne.s32.totalorder %s26, %s42
      %p44 = scmp.eq.s32.totalorder %s18, 0
      %p45 = por %p43, %p44
      %s47 = sadd.s32 %s46, 1
      %p50 = scmp.eq.s32.totalorder %s12, 1
      %p51 = scmp.ne.s32.totalorder %s46, %s48
      %p52 = scmp.eq.s32.totalorder %s12, 0
      %p53 = por %p51, %p52
      %p54 = scmp.ne.s32.totalorder %s46, %s48
      %p55 = scmp.eq.s32.totalorder %s17, 1
      %p56 = por %p54, %p55
      %p57 = scmp.ne.s32.totalorder %s48, %s49
      %p58 = scmp.eq.s32.totalorder %s17, 0
      %p59 = por %p57, %p58
      %p60 = scmp.ne.s32.totalorder %s48, %s49
      %p61 = scmp.eq.s32.totalorder %s18, 1
      %p62 = por %p60, %p61
      %p64 = scmp.ne.s32.totalorder %s49, %s63
      %p65 = scmp.eq.s32.totalorder %s18, 0
      %p66 = por %p64, %p65
      %s68 = sadd.s32 %s67, 1
      %p71 = scmp.eq.s32.totalorder %s12, 1
      %p72 = scmp.ne.s32.totalorder %s67, %s69
      %p73 = scmp.eq.s32.totalorder %s12, 0
      %p74 = por %p72, %p73
      %p75 = scmp.ne.s32.totalorder %s67, %s69
      %p76 = scmp.eq.s32.totalorder %s17, 1
      %p77 = por %p75, %p76
      %p78 = scmp.ne.s32.totalorder %s69, %s70
      %p79 = scmp.eq.s32.totalorder %s17, 0
      %p80 = por %p78, %p79
      %p81 = scmp.ne.s32.totalorder %s69, %s70
      %p82 = scmp.eq.s32.totalorder %s18, 1
      %p83 = por %p81, %p82
      %p85 = scmp.ne.s32.totalorder %s70, %s84
      %p86 = scmp.eq.s32.totalorder %s18, 0
      %p87 = por %p85, %p86
      %s88 = ssub.s32 %s12, %s19
      %p89 = scmp.eq.s32.totalorder %s88, 0
      %s91 = sadd.s32 %s90, 1
      %s92 = scalar_select %p89, %s90, %s91
      %p95 = pneg %p89
      %p96 = scmp.eq.s32.totalorder %s12, 1
      %p97 = por %p95, %p96
      %p98 = scmp.ne.s32.totalorder %s90, %s93
      %p99 = scmp.eq.s32.totalorder %s12, 0
      %p100 = por %p98, %p99
      %p101 = scmp.ne.s32.totalorder %s90, %s93
      %p102 = scmp.eq.s32.totalorder %s17, 1
      %p103 = por %p101, %p102
      %p104 = scmp.ne.s32.totalorder %s93, %s94
      %p105 = scmp.eq.s32.totalorder %s17, 0
      %p106 = por %p104, %p105
      %p107 = scmp.ne.s32.totalorder %s93, %s94
      %p108 = scmp.eq.s32.totalorder %s18, 1
      %p109 = por %p107, %p108
      %p111 = scmp.ne.s32.totalorder %s94, %s110
      %p112 = scmp.eq.s32.totalorder %s18, 0
      %p113 = por %p111, %p112
      %p114 = scmp.le.s32.totalorder 1, %s12
      %p115 = scmp.lt.s32.totalorder %s12, 3
      %p116 = pnand %p114, %p115
      %p117 = pneg %p116
      // Predicated region
      $region9: #{tpu_custom_call.1} parent=5 // pred_check
        _
      $region10: #{tpu_custom_call.1} parent=5 // pred_check_branch
        %119 = sbr.rel (%p116) target = $region12
      $region11: #{tpu_custom_call.1} parent=5 // pred_region
        %s120 = ssub.s32 %s12, 1
        // Predicated region
        $region13: #{tpu_custom_call.1} parent=11 // pred_check
          %p121 = pneg %p59
        $region14: #{tpu_custom_call.1} parent=11 // pred_check_branch
          %123 = sbr.rel (%p121) target = $region16
        $region15: #{tpu_custom_call.1} parent=11 // pred_region
          _
        $region16: #{tpu_custom_call.1} parent=11 // pred_fallthru
          _
        // Predicated region
        $region17: #{tpu_custom_call.1} parent=11 // pred_check
          %p124 = pneg %p80
        $region18: #{tpu_custom_call.1} parent=11 // pred_check_branch
          %126 = sbr.rel (%p124) target = $region20
        $region19: #{tpu_custom_call.1} parent=11 // pred_region
          _
        $region20: #{tpu_custom_call.1} parent=11 // pred_fallthru
          _
      $region12: #{tpu_custom_call.1} parent=5 // pred_fallthru
        _
      %p127 = scmp.lt.s32.totalorder %s12, 2
      // Predicated region
      $region21: #{tpu_custom_call.1} parent=5 // pred_check
        %p128 = pneg %p127
      $region22: #{tpu_custom_call.1} parent=5 // pred_check_branch
        %130 = sbr.rel (%p128) target = $region24
      $region23: #{tpu_custom_call.1} parent=5 // pred_region
        // Predicated region
        $region25: #{tpu_custom_call.1} parent=23 // pred_check
          %p131 = pneg %p32
        $region26: #{tpu_custom_call.1} parent=23 // pred_check_branch
          %133 = sbr.rel (%p131) target = $region28
        $region27: #{tpu_custom_call.1} parent=23 // pred_region
          %p134 = scmp.lt.s32.totalorder %s12, 1
          %s135 = scalar_select %p134, %s12, 1
          %s136 = smul.addr %s135, 8
          %s137 = smul.addr %s136, 8
          %s138 = scalar_lea.vmem %s0, %s137
        $region28: #{tpu_custom_call.1} parent=23 // pred_fallthru
          _
      $region24: #{tpu_custom_call.1} parent=5 // pred_fallthru
        _
      %p139 = scmp.le.s32.totalorder 1, %s12
      %p140 = scmp.lt.s32.totalorder %s12, 3
      %p141 = pnand %p139, %p140
      %p142 = pneg %p141
      // Predicated region
      $region29: #{tpu_custom_call.1} parent=5 // pred_check
        _
      $region30: #{tpu_custom_call.1} parent=5 // pred_check_branch
        %144 = sbr.rel (%p141) target = $region32
      $region31: #{tpu_custom_call.1} parent=5 // pred_region
        %s145 = ssub.s32 %s12, 1
        %p146 = scmp.lt.s32.totalorder %s17, 1
        %s147 = scalar_select %p146, %s17, 1
        %s148 = smul.addr %s147, 8
        %s149 = smul.addr %s148, 8
        %s150 = scalar_lea.vmem %s0, %s149
        %p151 = pneg %p38
        %p152 = pneg %p35
        %p153 = pneg %p59
        %p154 = pneg %p56
        %p155 = pneg %p80
        %p156 = pneg %p77
        %p157 = pneg %p106
        %p158 = pneg %p103
        %s159 = sand.u32 %s93, 1
        %s160 = scalar_lea.sflag [#allocation5], %s159
        %s161 = sand.u32 %s93, 1
        %s162 = smul.addr %s161, 64
        %s163 = scalar_lea.vmem [#allocation4], %s162
        %p164 = scmp.lt.s32.totalorder %s17, 1
        %s165 = scalar_select %p164, %s17, 1
        %s166 = smul.addr %s165, 8
        %s167 = smul.addr %s166, 8
        %s168 = scalar_lea.vmem %s0, %s167
        %vm170 = vcmask 261120
        %171 = vst.msk [vmem:[#allocation2] sm:$0xff] %vm170, 0.0
        %vm172 = vcmask 254976
        %173 = vst.msk [vmem:[#allocation2 + $0x8] sm:$0x3] %vm172, 0.0
        %174 = vst.msk [vmem:[#allocation2 + $0x10] sm:$0xff] %vm170, 0.0
        %175 = vst.msk [vmem:[#allocation2 + $0x18] sm:$0x3] %vm172, 0.0
        %176 = vst.msk [vmem:[#allocation2 + $0x20] sm:$0xff] %vm170, 0.0
        %177 = vst.msk [vmem:[#allocation2 + $0x28] sm:$0x3] %vm172, 0.0
        %178 = vst.msk [vmem:[#allocation2 + $0x30] sm:$0xff] %vm170, 0.0
        %179 = vst.msk [vmem:[#allocation2 + $0x38] sm:$0x3] %vm172, 0.0
        %180 = vst.msk [vmem:[#allocation2 + $0x40] sm:$0xff] %vm170, 0.0
        %181 = vst.msk [vmem:[#allocation2 + $0x48] sm:$0x3] %vm172, 0.0
        %182 = vst.msk [vmem:[#allocation2 + $0x50] sm:$0xff] %vm170, 0.0
        %183 = vst.msk [vmem:[#allocation2 + $0x58] sm:$0x3] %vm172, 0.0
        %184 = vst.msk [vmem:[#allocation2 + $0x60] sm:$0xff] %vm170, 0.0
        %185 = vst.msk [vmem:[#allocation2 + $0x68] sm:$0x3] %vm172, 0.0
        %186 = vst.msk [vmem:[#allocation2 + $0x70] sm:$0xff] %vm170, 0.0
        %187 = vst.msk [vmem:[#allocation2 + $0x78] sm:$0x3] %vm172, 0.0
        %188 = vst.msk [vmem:[#allocation2 + $0x80] sm:$0xff] %vm170, 0.0
        %189 = vst.msk [vmem:[#allocation2 + $0x88] sm:$0x3] %vm172, 0.0
        %190 = vst.msk [vmem:[#allocation2 + $0x90] sm:$0xff] %vm170, 0.0
        %191 = vst.msk [vmem:[#allocation2 + $0x98] sm:$0x3] %vm172, 0.0
        %v192 = vld [vmem:[%s168] sm:$0xff]
        %v193 = vld [vmem:[%s168 + $0x8] sm:$0xff]
        %v194 = vld [vmem:[%s168 + $0x10] sm:$0xff]
        %v195 = vld [vmem:[%s168 + $0x18] sm:$0xff]
        %v196 = vld [vmem:[%s168 + $0x20] sm:$0xff]
        %v197 = vld [vmem:[%s168 + $0x28] sm:$0xff]
        %v198 = vld [vmem:[%s168 + $0x30] sm:$0xff]
        %v199 = vld [vmem:[%s168 + $0x38] sm:$0xff]
        %v200 = vld [vmem:[%s1] sm:$0xf]
        %v201 = vld [vmem:[%s1 + $0x4] sm:$0xf]
        %v202 = vld [vmem:[%s1 + $0x8] sm:$0xf]
        %v203 = vld [vmem:[%s1 + $0xc] sm:$0xf]
        %v204 = vld [vmem:[%s1 + $0x10] sm:$0xf]
        %v205 = vld [vmem:[%s1 + $0x14] sm:$0xf]
        %v206 = vld [vmem:[%s1 + $0x18] sm:$0xf]
        %v207 = vld [vmem:[%s1 + $0x1c] sm:$0xf]
        %v208 = vld [vmem:[%s1 + $0x20] sm:$0xf]
        %v209 = vld [vmem:[%s1 + $0x24] sm:$0xf]
        %v210 = vld [vmem:[%s1 + $0x28] sm:$0xf]
        %v211 = vld [vmem:[%s1 + $0x2c] sm:$0xf]
        %v212 = vld [vmem:[%s1 + $0x30] sm:$0xf]
        %v213 = vld [vmem:[%s1 + $0x34] sm:$0xf]
        %v214 = vld [vmem:[%s1 + $0x38] sm:$0xf]
        %v215 = vld [vmem:[%s1 + $0x3c] sm:$0xf]
        %v216 = vld [vmem:[%s1 + $0x40] sm:$0xf]
        %v217 = vld [vmem:[%s1 + $0x44] sm:$0xf]
        %v218 = vld [vmem:[%s1 + $0x48] sm:$0xf]
        %v219 = vld [vmem:[%s1 + $0x4c] sm:$0xf]
        %v220 = vld [vmem:[%s1 + $0x50] sm:$0xf]
        %v221 = vld [vmem:[%s1 + $0x54] sm:$0xf]
        %v222 = vld [vmem:[%s1 + $0x58] sm:$0xf]
        %v223 = vld [vmem:[%s1 + $0x5c] sm:$0xf]
        %v224 = vld [vmem:[%s1 + $0x60] sm:$0xf]
        %v225 = vld [vmem:[%s1 + $0x64] sm:$0xf]
        %v226 = vld [vmem:[%s1 + $0x68] sm:$0xf]
        %v227 = vld [vmem:[%s1 + $0x6c] sm:$0xf]
        %v228 = vld [vmem:[%s1 + $0x70] sm:$0xf]
        %v229 = vld [vmem:[%s1 + $0x74] sm:$0xf]
        %v230 = vld [vmem:[%s1 + $0x78] sm:$0xf]
        %v231 = vld [vmem:[%s1 + $0x7c] sm:$0xf]
        %v232 = vld [vmem:[%s1 + $0x80] sm:$0xf]
        %v233 = vld [vmem:[%s1 + $0x84] sm:$0xf]
        %v234 = vld [vmem:[%s1 + $0x88] sm:$0xf]
        %v235 = vld [vmem:[%s1 + $0x8c] sm:$0xf]
        %s236 = scalar_lea.vmem [#allocation2], 16
        %237 = vst.msk [vmem:[%s236 + $0x1] sm:$0xff] %vm170, %v192
        %238 = vst.msk [vmem:[%s236 + $0x11] sm:$0xff] %vm170, %v193
        %239 = vst.msk [vmem:[%s236 + $0x21] sm:$0xff] %vm170, %v194
        %240 = vst.msk [vmem:[%s236 + $0x31] sm:$0xff] %vm170, %v195
        %241 = vst.msk [vmem:[%s236 + $0x41] sm:$0xff] %vm170, %v196
        %242 = vst.msk [vmem:[%s236 + $0x51] sm:$0xff] %vm170, %v197
        %243 = vst.msk [vmem:[%s236 + $0x61] sm:$0xff] %vm170, %v198
        %244 = vst.msk [vmem:[%s236 + $0x71] sm:$0xff] %vm170, %v199
        %v245 = vld [vmem:[#allocation2] sm:$0xff]
        %v246 = vld [vmem:[#allocation2 + $0x10] sm:$0xff]
        %v247 = vld [vmem:[#allocation2 + $0x20] sm:$0xff]
        %v248 = vld [vmem:[#allocation2 + $0x30] sm:$0xff]
        %v249 = vld [vmem:[#allocation2 + $0x40] sm:$0xff]
        %v250 = vld [vmem:[#allocation2 + $0x50] sm:$0xff]
        %v251 = vld [vmem:[#allocation2 + $0x60] sm:$0xff]
        %v252 = vld [vmem:[#allocation2 + $0x70] sm:$0xff]
        %253 = vst.msk [vmem:[#allocation3] sm:$0xff] %vm170, %v245
        %254 = vst.msk [vmem:[#allocation3 + $0x18] sm:$0xff] %vm170, %v246
        %255 = vst.msk [vmem:[#allocation3 + $0x30] sm:$0xff] %vm170, %v247
        %256 = vst.msk [vmem:[#allocation3 + $0x48] sm:$0xff] %vm170, %v248
        %257 = vst.msk [vmem:[#allocation3 + $0x60] sm:$0xff] %vm170, %v249
        %258 = vst.msk [vmem:[#allocation3 + $0x78] sm:$0xff] %vm170, %v250
        %259 = vst.msk [vmem:[#allocation3 + $0x90] sm:$0xff] %vm170, %v251
        %260 = vst.msk [vmem:[#allocation3 + $0xa8] sm:$0xff] %vm170, %v252
        %v261 = vld [vmem:[#allocation2 + $0x1] sm:$0xff]
        %v262 = vld [vmem:[#allocation2 + $0x11] sm:$0xff]
        %v263 = vld [vmem:[#allocation2 + $0x21] sm:$0xff]
        %v264 = vld [vmem:[#allocation2 + $0x31] sm:$0xff]
        %v265 = vld [vmem:[#allocation2 + $0x41] sm:$0xff]
        %v266 = vld [vmem:[#allocation2 + $0x51] sm:$0xff]
        %v267 = vld [vmem:[#allocation2 + $0x61] sm:$0xff]
        %v268 = vld [vmem:[#allocation2 + $0x71] sm:$0xff]
        %277 = vrot.lane.b32.xlu0 %v261, 32
        %v278 = vpop.permute.xlu0 %277
        %279 = vrot.lane.b32.xlu0 %v262, 32
        %v280 = vpop.permute.xlu0 %279
        %281 = vrot.lane.b32.xlu0 %v263, 32
        %v282 = vpop.permute.xlu0 %281
        %283 = vrot.lane.b32.xlu0 %v264, 32
        %v284 = vpop.permute.xlu0 %283
        %285 = vrot.lane.b32.xlu0 %v265, 32
        %v286 = vpop.permute.xlu0 %285
        %287 = vrot.lane.b32.xlu0 %v266, 32
        %v288 = vpop.permute.xlu0 %287
        %289 = vrot.lane.b32.xlu0 %v267, 32
        %v290 = vpop.permute.xlu0 %289
        %291 = vrot.lane.b32.xlu0 %v268, 32
        %v292 = vpop.permute.xlu0 %291
        %vm301 = vcmask 523520
        %302 = vst.msk [vmem:[#allocation3] sm:$0xff] %vm301, %v278
        %303 = vst.msk [vmem:[#allocation3 + $0x18] sm:$0xff] %vm301, %v280
        %304 = vst.msk [vmem:[#allocation3 + $0x30] sm:$0xff] %vm301, %v282
        %305 = vst.msk [vmem:[#allocation3 + $0x48] sm:$0xff] %vm301, %v284
        %306 = vst.msk [vmem:[#allocation3 + $0x60] sm:$0xff] %vm301, %v286
        %307 = vst.msk [vmem:[#allocation3 + $0x78] sm:$0xff] %vm301, %v288
        %308 = vst.msk [vmem:[#allocation3 + $0x90] sm:$0xff] %vm301, %v290
        %309 = vst.msk [vmem:[#allocation3 + $0xa8] sm:$0xff] %vm301, %v292
        %v310 = vld [vmem:[#allocation2 + $0x2] sm:$0xff]
        %v311 = vld [vmem:[#allocation2 + $0x12] sm:$0xff]
        %v312 = vld [vmem:[#allocation2 + $0x22] sm:$0xff]
        %v313 = vld [vmem:[#allocation2 + $0x32] sm:$0xff]
        %v314 = vld [vmem:[#allocation2 + $0x42] sm:$0xff]
        %v315 = vld [vmem:[#allocation2 + $0x52] sm:$0xff]
        %v316 = vld [vmem:[#allocation2 + $0x62] sm:$0xff]
        %v317 = vld [vmem:[#allocation2 + $0x72] sm:$0xff]
        %326 = vrot.lane.b32.xlu0 %v310, 64
        %v327 = vpop.permute.xlu0 %326
        %328 = vrot.lane.b32.xlu0 %v311, 64
        %v329 = vpop.permute.xlu0 %328
        %330 = vrot.lane.b32.xlu0 %v312, 64
        %v331 = vpop.permute.xlu0 %330
        %332 = vrot.lane.b32.xlu0 %v313, 64
        %v333 = vpop.permute.xlu0 %332
        %334 = vrot.lane.b32.xlu0 %v314, 64
        %v335 = vpop.permute.xlu0 %334
        %336 = vrot.lane.b32.xlu0 %v315, 64
        %v337 = vpop.permute.xlu0 %336
        %338 = vrot.lane.b32.xlu0 %v316, 64
        %v339 = vpop.permute.xlu0 %338
        %340 = vrot.lane.b32.xlu0 %v317, 64
        %v341 = vpop.permute.xlu0 %340
        %vm350 = vcmask 785920
        %351 = vst.msk [vmem:[#allocation3] sm:$0xff] %vm350, %v327
        %352 = vst.msk [vmem:[#allocation3 + $0x18] sm:$0xff] %vm350, %v329
        %353 = vst.msk [vmem:[#allocation3 + $0x30] sm:$0xff] %vm350, %v331
        %354 = vst.msk [vmem:[#allocation3 + $0x48] sm:$0xff] %vm350, %v333
        %355 = vst.msk [vmem:[#allocation3 + $0x60] sm:$0xff] %vm350, %v335
        %356 = vst.msk [vmem:[#allocation3 + $0x78] sm:$0xff] %vm350, %v337
        %357 = vst.msk [vmem:[#allocation3 + $0x90] sm:$0xff] %vm350, %v339
        %358 = vst.msk [vmem:[#allocation3 + $0xa8] sm:$0xff] %vm350, %v341
        %v359 = vld [vmem:[%s236] sm:$0xff]
        %v360 = vld [vmem:[%s236 + $0x10] sm:$0xff]
        %v361 = vld [vmem:[%s236 + $0x20] sm:$0xff]
        %v362 = vld [vmem:[%s236 + $0x30] sm:$0xff]
        %v363 = vld [vmem:[%s236 + $0x40] sm:$0xff]
        %v364 = vld [vmem:[%s236 + $0x50] sm:$0xff]
        %v365 = vld [vmem:[%s236 + $0x60] sm:$0xff]
        %v366 = vld [vmem:[%s236 + $0x70] sm:$0xff]
        %375 = vrot.lane.b32.xlu0 %v359, 96
        %v376 = vpop.permute.xlu0 %375
        %377 = vrot.lane.b32.xlu0 %v360, 96
        %v378 = vpop.permute.xlu0 %377
        %379 = vrot.lane.b32.xlu0 %v361, 96
        %v380 = vpop.permute.xlu0 %379
        %381 = vrot.lane.b32.xlu0 %v362, 96
        %v382 = vpop.permute.xlu0 %381
        %383 = vrot.lane.b32.xlu0 %v363, 96
        %v384 = vpop.permute.xlu0 %383
        %385 = vrot.lane.b32.xlu0 %v364, 96
        %v386 = vpop.permute.xlu0 %385
        %387 = vrot.lane.b32.xlu0 %v365, 96
        %v388 = vpop.permute.xlu0 %387
        %389 = vrot.lane.b32.xlu0 %v366, 96
        %v390 = vpop.permute.xlu0 %389
        %vm399 = vcmask 1048320
        %400 = vst.msk [vmem:[#allocation3] sm:$0xff] %vm399, %v376
        %401 = vst.msk [vmem:[#allocation3 + $0x18] sm:$0xff] %vm399, %v378
        %402 = vst.msk [vmem:[#allocation3 + $0x30] sm:$0xff] %vm399, %v380
        %403 = vst.msk [vmem:[#allocation3 + $0x48] sm:$0xff] %vm399, %v382
        %404 = vst.msk [vmem:[#allocation3 + $0x60] sm:$0xff] %vm399, %v384
        %405 = vst.msk [vmem:[#allocation3 + $0x78] sm:$0xff] %vm399, %v386
        %406 = vst.msk [vmem:[#allocation3 + $0x90] sm:$0xff] %vm399, %v388
        %407 = vst.msk [vmem:[#allocation3 + $0xa8] sm:$0xff] %vm399, %v390
        %v408 = vld [vmem:[%s236 + $0x1] sm:$0xff]
        %v409 = vld [vmem:[%s236 + $0x11] sm:$0xff]
        %v410 = vld [vmem:[%s236 + $0x21] sm:$0xff]
        %v411 = vld [vmem:[%s236 + $0x31] sm:$0xff]
        %v412 = vld [vmem:[%s236 + $0x41] sm:$0xff]
        %v413 = vld [vmem:[%s236 + $0x51] sm:$0xff]
        %v414 = vld [vmem:[%s236 + $0x61] sm:$0xff]
        %v415 = vld [vmem:[%s236 + $0x71] sm:$0xff]
        %416 = vst.msk [vmem:[#allocation3 + $0x8] sm:$0xff] %vm170, %v408
        %417 = vst.msk [vmem:[#allocation3 + $0x20] sm:$0xff] %vm170, %v409
        %418 = vst.msk [vmem:[#allocation3 + $0x38] sm:$0xff] %vm170, %v410
        %419 = vst.msk [vmem:[#allocation3 + $0x50] sm:$0xff] %vm170, %v411
        %420 = vst.msk [vmem:[#allocation3 + $0x68] sm:$0xff] %vm170, %v412
        %421 = vst.msk [vmem:[#allocation3 + $0x80] sm:$0xff] %vm170, %v413
        %422 = vst.msk [vmem:[#allocation3 + $0x98] sm:$0xff] %vm170, %v414
        %423 = vst.msk [vmem:[#allocation3 + $0xb0] sm:$0xff] %vm170, %v415
        %v424 = vld [vmem:[%s236 + $0x2] sm:$0xff]
        %v425 = vld [vmem:[%s236 + $0x12] sm:$0xff]
        %v426 = vld [vmem:[%s236 + $0x22] sm:$0xff]
        %v427 = vld [vmem:[%s236 + $0x32] sm:$0xff]
        %v428 = vld [vmem:[%s236 + $0x42] sm:$0xff]
        %v429 = vld [vmem:[%s236 + $0x52] sm:$0xff]
        %v430 = vld [vmem:[%s236 + $0x62] sm:$0xff]
        %v431 = vld [vmem:[%s236 + $0x72] sm:$0xff]
        %440 = vrot.lane.b32.xlu0 %v424, 32
        %v441 = vpop.permute.xlu0 %440
        %442 = vrot.lane.b32.xlu0 %v425, 32
        %v443 = vpop.permute.xlu0 %442
        %444 = vrot.lane.b32.xlu0 %v426, 32
        %v445 = vpop.permute.xlu0 %444
        %446 = vrot.lane.b32.xlu0 %v427, 32
        %v447 = vpop.permute.xlu0 %446
        %448 = vrot.lane.b32.xlu0 %v428, 32
        %v449 = vpop.permute.xlu0 %448
        %450 = vrot.lane.b32.xlu0 %v429, 32
        %v451 = vpop.permute.xlu0 %450
        %452 = vrot.lane.b32.xlu0 %v430, 32
        %v453 = vpop.permute.xlu0 %452
        %454 = vrot.lane.b32.xlu0 %v431, 32
        %v455 = vpop.permute.xlu0 %454
        %464 = vst.msk [vmem:[#allocation3 + $0x8] sm:$0xff] %vm301, %v441
        %465 = vst.msk [vmem:[#allocation3 + $0x20] sm:$0xff] %vm301, %v443
        %466 = vst.msk [vmem:[#allocation3 + $0x38] sm:$0xff] %vm301, %v445
        %467 = vst.msk [vmem:[#allocation3 + $0x50] sm:$0xff] %vm301, %v447
        %468 = vst.msk [vmem:[#allocation3 + $0x68] sm:$0xff] %vm301, %v449
        %469 = vst.msk [vmem:[#allocation3 + $0x80] sm:$0xff] %vm301, %v451
        %470 = vst.msk [vmem:[#allocation3 + $0x98] sm:$0xff] %vm301, %v453
        %471 = vst.msk [vmem:[#allocation3 + $0xb0] sm:$0xff] %vm301, %v455
        %s472 = scalar_lea.vmem [#allocation2], 32
        %v473 = vld [vmem:[%s472] sm:$0xff]
        %v474 = vld [vmem:[%s472 + $0x10] sm:$0xff]
        %v475 = vld [vmem:[%s472 + $0x20] sm:$0xff]
        %v476 = vld [vmem:[%s472 + $0x30] sm:$0xff]
        %v477 = vld [vmem:[%s472 + $0x40] sm:$0xff]
        %v478 = vld [vmem:[%s472 + $0x50] sm:$0xff]
        %v479 = vld [vmem:[%s472 + $0x60] sm:$0xff]
        %v480 = vld [vmem:[%s472 + $0x70] sm:$0xff]
        %489 = vrot.lane.b32.xlu0 %v473, 64
        %v490 = vpop.permute.xlu0 %489
        %491 = vrot.lane.b32.xlu0 %v474, 64
        %v492 = vpop.permute.xlu0 %491
        %493 = vrot.lane.b32.xlu0 %v475, 64
        %v494 = vpop.permute.xlu0 %493
        %495 = vrot.lane.b32.xlu0 %v476, 64
        %v496 = vpop.permute.xlu0 %495
        %497 = vrot.lane.b32.xlu0 %v477, 64
        %v498 = vpop.permute.xlu0 %497
        %499 = vrot.lane.b32.xlu0 %v478, 64
        %v500 = vpop.permute.xlu0 %499
        %501 = vrot.lane.b32.xlu0 %v479, 64
        %v502 = vpop.permute.xlu0 %501
        %503 = vrot.lane.b32.xlu0 %v480, 64
        %v504 = vpop.permute.xlu0 %503
        %513 = vst.msk [vmem:[#allocation3 + $0x8] sm:$0xff] %vm350, %v490
        %514 = vst.msk [vmem:[#allocation3 + $0x20] sm:$0xff] %vm350, %v492
        %515 = vst.msk [vmem:[#allocation3 + $0x38] sm:$0xff] %vm350, %v494
        %516 = vst.msk [vmem:[#allocation3 + $0x50] sm:$0xff] %vm350, %v496
        %517 = vst.msk [vmem:[#allocation3 + $0x68] sm:$0xff] %vm350, %v498
        %518 = vst.msk [vmem:[#allocation3 + $0x80] sm:$0xff] %vm350, %v500
        %519 = vst.msk [vmem:[#allocation3 + $0x98] sm:$0xff] %vm350, %v502
        %520 = vst.msk [vmem:[#allocation3 + $0xb0] sm:$0xff] %vm350, %v504
        %v521 = vld [vmem:[%s472 + $0x1] sm:$0xff]
        %v522 = vld [vmem:[%s472 + $0x11] sm:$0xff]
        %v523 = vld [vmem:[%s472 + $0x21] sm:$0xff]
        %v524 = vld [vmem:[%s472 + $0x31] sm:$0xff]
        %v525 = vld [vmem:[%s472 + $0x41] sm:$0xff]
        %v526 = vld [vmem:[%s472 + $0x51] sm:$0xff]
        %v527 = vld [vmem:[%s472 + $0x61] sm:$0xff]
        %v528 = vld [vmem:[%s472 + $0x71] sm:$0xff]
        %537 = vrot.lane.b32.xlu0 %v521, 96
        %v538 = vpop.permute.xlu0 %537
        %539 = vrot.lane.b32.xlu0 %v522, 96
        %v540 = vpop.permute.xlu0 %539
        %541 = vrot.lane.b32.xlu0 %v523, 96
        %v542 = vpop.permute.xlu0 %541
        %543 = vrot.lane.b32.xlu0 %v524, 96
        %v544 = vpop.permute.xlu0 %543
        %545 = vrot.lane.b32.xlu0 %v525, 96
        %v546 = vpop.permute.xlu0 %545
        %547 = vrot.lane.b32.xlu0 %v526, 96
        %v548 = vpop.permute.xlu0 %547
        %549 = vrot.lane.b32.xlu0 %v527, 96
        %v550 = vpop.permute.xlu0 %549
        %551 = vrot.lane.b32.xlu0 %v528, 96
        %v552 = vpop.permute.xlu0 %551
        %561 = vst.msk [vmem:[#allocation3 + $0x8] sm:$0xff] %vm399, %v538
        %562 = vst.msk [vmem:[#allocation3 + $0x20] sm:$0xff] %vm399, %v540
        %563 = vst.msk [vmem:[#allocation3 + $0x38] sm:$0xff] %vm399, %v542
        %564 = vst.msk [vmem:[#allocation3 + $0x50] sm:$0xff] %vm399, %v544
        %565 = vst.msk [vmem:[#allocation3 + $0x68] sm:$0xff] %vm399, %v546
        %566 = vst.msk [vmem:[#allocation3 + $0x80] sm:$0xff] %vm399, %v548
        %567 = vst.msk [vmem:[#allocation3 + $0x98] sm:$0xff] %vm399, %v550
        %568 = vst.msk [vmem:[#allocation3 + $0xb0] sm:$0xff] %vm399, %v552
        %v569 = vld [vmem:[%s472 + $0x2] sm:$0xff]
        %v570 = vld [vmem:[%s472 + $0x12] sm:$0xff]
        %v571 = vld [vmem:[%s472 + $0x22] sm:$0xff]
        %v572 = vld [vmem:[%s472 + $0x32] sm:$0xff]
        %v573 = vld [vmem:[%s472 + $0x42] sm:$0xff]
        %v574 = vld [vmem:[%s472 + $0x52] sm:$0xff]
        %v575 = vld [vmem:[%s472 + $0x62] sm:$0xff]
        %v576 = vld [vmem:[%s472 + $0x72] sm:$0xff]
        %577 = vst.msk [vmem:[#allocation3 + $0x10] sm:$0xff] %vm170, %v569
        %578 = vst.msk [vmem:[#allocation3 + $0x28] sm:$0xff] %vm170, %v570
        %579 = vst.msk [vmem:[#allocation3 + $0x40] sm:$0xff] %vm170, %v571
        %580 = vst.msk [vmem:[#allocation3 + $0x58] sm:$0xff] %vm170, %v572
        %581 = vst.msk [vmem:[#allocation3 + $0x70] sm:$0xff] %vm170, %v573
        %582 = vst.msk [vmem:[#allocation3 + $0x88] sm:$0xff] %vm170, %v574
        %583 = vst.msk [vmem:[#allocation3 + $0xa0] sm:$0xff] %vm170, %v575
        %584 = vst.msk [vmem:[#allocation3 + $0xb8] sm:$0xff] %vm170, %v576
        %v585 = vld [vmem:[#allocation3] sm:$0xff]
        %v586 = vld [vmem:[#allocation3 + $0x8] sm:$0xff]
        %v587 = vld [vmem:[#allocation3 + $0x10] sm:$0xff]
        %v588 = vld [vmem:[#allocation3 + $0x18] sm:$0xff]
        %v589 = vld [vmem:[#allocation3 + $0x20] sm:$0xff]
        %v590 = vld [vmem:[#allocation3 + $0x28] sm:$0xff]
        %v591 = vld [vmem:[#allocation3 + $0x30] sm:$0xff]
        %v592 = vld [vmem:[#allocation3 + $0x38] sm:$0xff]
        %v593 = vld [vmem:[#allocation3 + $0x40] sm:$0xff]
        %v594 = vld [vmem:[#allocation3 + $0x48] sm:$0xff]
        %v595 = vld [vmem:[#allocation3 + $0x50] sm:$0xff]
        %v596 = vld [vmem:[#allocation3 + $0x58] sm:$0xff]
        %v597 = vld [vmem:[#allocation3 + $0x60] sm:$0xff]
        %v598 = vld [vmem:[#allocation3 + $0x68] sm:$0xff]
        %v599 = vld [vmem:[#allocation3 + $0x70] sm:$0xff]
        %v600 = vld [vmem:[#allocation3 + $0x78] sm:$0xff]
        %v601 = vld [vmem:[#allocation3 + $0x80] sm:$0xff]
        %v602 = vld [vmem:[#allocation3 + $0x88] sm:$0xff]
        %v603 = vld [vmem:[#allocation3 + $0x90] sm:$0xff]
        %v604 = vld [vmem:[#allocation3 + $0x98] sm:$0xff]
        %v605 = vld [vmem:[#allocation3 + $0xa0] sm:$0xff]
        %v606 = vld [vmem:[#allocation3 + $0xa8] sm:$0xff]
        %v607 = vld [vmem:[#allocation3 + $0xb0] sm:$0xff]
        %v608 = vld [vmem:[#allocation3 + $0xb8] sm:$0xff]
        %v609 = vpack.c.bf16 %v588, %v585
        %v610 = vpack.c.bf16 %v589, %v586
        %v611 = vpack.c.bf16 %v590, %v587
        %v612 = vpack.c.bf16 %v594, %v591
        %v613 = vpack.c.bf16 %v595, %v592
        %v614 = vpack.c.bf16 %v596, %v593
        %v615 = vpack.c.bf16 %v600, %v597
        %v616 = vpack.c.bf16 %v601, %v598
        %v617 = vpack.c.bf16 %v602, %v599
        %v618 = vpack.c.bf16 %v606, %v603
        %v619 = vpack.c.bf16 %v607, %v604
        %v620 = vpack.c.bf16 %v608, %v605
        %v657 = vunpack.c.l.b16 %v200
        %v658 = vunpack.c.l.b16 %v201
        %v659 = vunpack.c.l.b16 %v202
        %v660 = vunpack.c.l.b16 %v203
        %v661 = vunpack.c.l.b16 %v204
        %v662 = vunpack.c.l.b16 %v205
        %v663 = vunpack.c.l.b16 %v206
        %v664 = vunpack.c.l.b16 %v207
        %v665 = vunpack.c.l.b16 %v208
        %v666 = vunpack.c.l.b16 %v209
        %v667 = vunpack.c.l.b16 %v210
        %v668 = vunpack.c.l.b16 %v211
        %v669 = vunpack.c.l.b16 %v212
        %v670 = vunpack.c.l.b16 %v213
        %v671 = vunpack.c.l.b16 %v214
        %v672 = vunpack.c.l.b16 %v215
        %v673 = vunpack.c.l.b16 %v216
        %v674 = vunpack.c.l.b16 %v217
        %v675 = vunpack.c.l.b16 %v218
        %v676 = vunpack.c.l.b16 %v219
        %v677 = vunpack.c.l.b16 %v220
        %v678 = vunpack.c.l.b16 %v221
        %v679 = vunpack.c.l.b16 %v222
        %v680 = vunpack.c.l.b16 %v223
        %v681 = vunpack.c.l.b16 %v224
        %v682 = vunpack.c.l.b16 %v225
        %v683 = vunpack.c.l.b16 %v226
        %v684 = vunpack.c.l.b16 %v227
        %v685 = vunpack.c.l.b16 %v228
        %v686 = vunpack.c.l.b16 %v229
        %v687 = vunpack.c.l.b16 %v230
        %v688 = vunpack.c.l.b16 %v231
        %v689 = vunpack.c.l.b16 %v232
        %v690 = vunpack.c.l.b16 %v233
        %v691 = vunpack.c.l.b16 %v234
        %v692 = vunpack.c.l.b16 %v235
        %v693 = vpack.c.b16 %v658, %v657
        %v694 = vpack.c.b16 %v660, %v659
        %v695 = vpack.c.b16 %v662, %v661
        %v696 = vpack.c.b16 %v664, %v663
        %v697 = vpack.c.b16 %v666, %v665
        %v698 = vpack.c.b16 %v668, %v667
        %v699 = vpack.c.b16 %v670, %v669
        %v700 = vpack.c.b16 %v672, %v671
        %v701 = vpack.c.b16 %v674, %v673
        %v702 = vpack.c.b16 %v676, %v675
        %v703 = vpack.c.b16 %v678, %v677
        %v704 = vpack.c.b16 %v680, %v679
        %v705 = vpack.c.b16 %v682, %v681
        %v706 = vpack.c.b16 %v684, %v683
        %v707 = vpack.c.b16 %v686, %v685
        %v708 = vpack.c.b16 %v688, %v687
        %v709 = vpack.c.b16 %v690, %v689
        %v710 = vpack.c.b16 %v692, %v691
        %v730 = vsel %vm170, %v611, 0
        %v733 = vsel %vm170, %v614, 0
        %v736 = vsel %vm170, %v617, 0
        %v739 = vsel %vm170, %v620, 0
        %741 = vmatpush.bf16.msra.mxu0 %v700
        %742 = vmatpush.bf16.msra.mxu0 %v699
        %743 = vmatpush.bf16.msra.mxu0 %v698
        %744 = vmatpush.bf16.msra.mxu0 %v697
        %745 = vmatpush.bf16.msra.mxu0 %v696
        %746 = vmatpush.bf16.msra.mxu0 %v695
        %747 = vmatpush.bf16.msra.mxu0 %v694
        %748 = vmatpush.bf16.msra.mxu0 %v693
        %749 = vmatmul.bf16.gmra.mxu0 %v609
        %v750 = vpop.f32.mrf.mxu0
        %v751 = vadd.f32 0.0, %v750
        %v752 = vpop.f32.mrf.mxu0
        %v753 = vadd.f32 0.0, %v752
        %754 = vmatmul.bf16.gmra.mxu0 %v612
        %v755 = vpop.f32.mrf.mxu0
        %v756 = vadd.f32 0.0, %v755
        %v757 = vpop.f32.mrf.mxu0
        %v758 = vadd.f32 0.0, %v757
        %759 = vmatmul.bf16.gmra.mxu0 %v615
        %v760 = vpop.f32.mrf.mxu0
        %v761 = vadd.f32 0.0, %v760
        %v762 = vpop.f32.mrf.mxu0
        %v763 = vadd.f32 0.0, %v762
        %764 = vmatmul.bf16.gmra.mxu0 %v618
        %v765 = vpop.f32.mrf.mxu0
        %v766 = vadd.f32 0.0, %v765
        %v767 = vpop.f32.mrf.mxu0
        %v768 = vadd.f32 0.0, %v767
        %769 = vdwg.mxu0
        %770 = vmatpush.bf16.msra.mxu0 %v708
        %771 = vmatpush.bf16.msra.mxu0 %v707
        %772 = vmatpush.bf16.msra.mxu0 %v706
        %773 = vmatpush.bf16.msra.mxu0 %v705
        %774 = vmatpush.bf16.msra.mxu0 %v704
        %775 = vmatpush.bf16.msra.mxu0 %v703
        %776 = vmatpush.bf16.msra.mxu0 %v702
        %777 = vmatpush.bf16.msra.mxu0 %v701
        %778 = vmatmul.bf16.gmra.mxu0 %v610
        %v779 = vpop.f32.mrf.mxu0
        %v780 = vadd.f32 %v751, %v779
        %v781 = vpop.f32.mrf.mxu0
        %v782 = vadd.f32 %v753, %v781
        %783 = vmatmul.bf16.gmra.mxu0 %v613
        %v784 = vpop.f32.mrf.mxu0
        %v785 = vadd.f32 %v756, %v784
        %v786 = vpop.f32.mrf.mxu0
        %v787 = vadd.f32 %v758, %v786
        %788 = vmatmul.bf16.gmra.mxu0 %v616
        %v789 = vpop.f32.mrf.mxu0
        %v790 = vadd.f32 %v761, %v789
        %v791 = vpop.f32.mrf.mxu0
        %v792 = vadd.f32 %v763, %v791
        %793 = vmatmul.bf16.gmra.mxu0 %v619
        %v794 = vpop.f32.mrf.mxu0
        %v795 = vadd.f32 %v766, %v794
        %v796 = vpop.f32.mrf.mxu0
        %v797 = vadd.f32 %v768, %v796
        %798 = vdwg.mxu0
        %799 = vmatpush.bf16.msra.mxu0 0
        %800 = vmatpush.bf16.msra.mxu0 0
        %801 = vmatpush.bf16.msra.mxu0 0
        %802 = vmatpush.bf16.msra.mxu0 0
        %803 = vmatpush.bf16.msra.mxu0 0
        %804 = vmatpush.bf16.msra.mxu0 0
        %805 = vmatpush.bf16.msra.mxu0 %v710
        %806 = vmatpush.bf16.msra.mxu0 %v709
        %807 = vmatmul.bf16.gmra.mxu0 %v730
        %v808 = vpop.f32.mrf.mxu0
        %v809 = vadd.f32 %v780, %v808
        %v810 = vpop.f32.mrf.mxu0
        %v811 = vadd.f32 %v782, %v810
        %812 = vmatmul.bf16.gmra.mxu0 %v733
        %v813 = vpop.f32.mrf.mxu0
        %v814 = vadd.f32 %v785, %v813
        %v815 = vpop.f32.mrf.mxu0
        %v816 = vadd.f32 %v787, %v815
        %817 = vmatmul.bf16.gmra.mxu0 %v736
        %v818 = vpop.f32.mrf.mxu0
        %v819 = vadd.f32 %v790, %v818
        %v820 = vpop.f32.mrf.mxu0
        %v821 = vadd.f32 %v792, %v820
        %822 = vmatmul.bf16.gmra.mxu0 %v739
        %v823 = vpop.f32.mrf.mxu0
        %v824 = vadd.f32 %v795, %v823
        %v825 = vpop.f32.mrf.mxu0
        %v826 = vadd.f32 %v797, %v825
        %827 = vdwg.mxu0
        %v828 = vsel %vm170, %v809, 0.0
        %v829 = vsel %vm170, %v811, 0.0
        %v830 = vadd.f32 %v828, %v829
        %v831 = vsel %vm170, %v814, 0.0
        %v832 = vadd.f32 %v830, %v831
        %v833 = vsel %vm170, %v816, 0.0
        %v834 = vadd.f32 %v832, %v833
        %v835 = vsel %vm170, %v819, 0.0
        %v836 = vadd.f32 %v834, %v835
        %v837 = vsel %vm170, %v821, 0.0
        %v838 = vadd.f32 %v836, %v837
        %v839 = vsel %vm170, %v824, 0.0
        %v840 = vadd.f32 %v838, %v839
        %v841 = vsel %vm170, %v826, 0.0
        %v842 = vadd.f32 %v840, %v841
        %v843 = vrot.slane %v842, 4
        %v844 = vadd.f32 %v842, %v843
        %v845 = vrot.slane %v844, 2
        %v846 = vadd.f32 %v844, %v845
        %v847 = vrot.slane %v846, 1
        %v848 = vadd.f32 %v846, %v847
        %v849 = vmul.f32 %v848, 0.015625
        %v850 = vmul.f32 %v809, %v809
        %v851 = vmul.f32 %v811, %v811
        %v852 = vmul.f32 %v814, %v814
        %v853 = vmul.f32 %v816, %v816
        %v854 = vmul.f32 %v819, %v819
        %v855 = vmul.f32 %v821, %v821
        %v856 = vmul.f32 %v824, %v824
        %v857 = vmul.f32 %v826, %v826
        %v858 = vsel %vm170, %v850, 0.0
        %v859 = vsel %vm170, %v851, 0.0
        %v860 = vadd.f32 %v858, %v859
        %v861 = vsel %vm170, %v852, 0.0
        %v862 = vadd.f32 %v860, %v861
        %v863 = vsel %vm170, %v853, 0.0
        %v864 = vadd.f32 %v862, %v863
        %v865 = vsel %vm170, %v854, 0.0
        %v866 = vadd.f32 %v864, %v865
        %v867 = vsel %vm170, %v855, 0.0
        %v868 = vadd.f32 %v866, %v867
        %v869 = vsel %vm170, %v856, 0.0
        %v870 = vadd.f32 %v868, %v869
        %v871 = vsel %vm170, %v857, 0.0
        %v872 = vadd.f32 %v870, %v871
        %v873 = vrot.slane %v872, 4
        %v874 = vadd.f32 %v872, %v873
        %v875 = vrot.slane %v874, 2
        %v876 = vadd.f32 %v874, %v875
        %v877 = vrot.slane %v876, 1
        %v878 = vadd.f32 %v876, %v877
        %v879 = vmul.f32 %v878, 0.015625
        %v880 = vmul.f32 %v849, %v849
        %v881 = vsub.f32 %v879, %v880
        %v882 = vsub.f32 %v809, %v849
        %v883 = vsub.f32 %v811, %v849
        %v884 = vsub.f32 %v814, %v849
        %v885 = vsub.f32 %v816, %v849
        %v886 = vsub.f32 %v819, %v849
        %v887 = vsub.f32 %v821, %v849
        %v888 = vsub.f32 %v824, %v849
        %v889 = vsub.f32 %v826, %v849
        %v890 = vadd.f32 %v881, 1e-05
        %v891 = vrsqrt.pop %v890
        %v892 = vmul.f32 %v891, %v890
        %v893 = vmul.f32 %v892, %v891
        %v894 = vmul.f32 0.5, %v893
        %v895 = vsub.f32 1.5, %v894
        %v896 = vmul.f32 %v891, %v895
        %vm897 = vweird.f32 %v890
        %vm898 = vweird.f32 %v891
        %vm899 = vmor %vm897, %vm898
        %v900 = vsel %vm899, %v891, %v896
        %v901 = vmul.f32 %v882, %v900
        %v902 = vmul.f32 %v883, %v900
        %v903 = vmul.f32 %v884, %v900
        %v904 = vmul.f32 %v885, %v900
        %v905 = vmul.f32 %v886, %v900
        %v906 = vmul.f32 %v887, %v900
        %v907 = vmul.f32 %v888, %v900
        %v908 = vmul.f32 %v889, %v900
        %v909 = vmax.f32 %v901, 0.0
        %v910 = vmax.f32 %v902, 0.0
        %v911 = vmax.f32 %v903, 0.0
        %v912 = vmax.f32 %v904, 0.0
        %v913 = vmax.f32 %v905, 0.0
        %v914 = vmax.f32 %v906, 0.0
        %v915 = vmax.f32 %v907, 0.0
        %v916 = vmax.f32 %v908, 0.0
        %v917 = vld [vmem:[%s2] sm:$0xf]
        %v918 = vld [vmem:[%s2 + $0x4] sm:$0xf]
        %v919 = vld [vmem:[%s2 + $0x8] sm:$0xf]
        %v920 = vld [vmem:[%s2 + $0xc] sm:$0xf]
        %v921 = vld [vmem:[%s2 + $0x10] sm:$0xf]
        %v922 = vld [vmem:[%s2 + $0x14] sm:$0xf]
        %v923 = vld [vmem:[%s2 + $0x18] sm:$0xf]
        %v924 = vld [vmem:[%s2 + $0x1c] sm:$0xf]
        %v925 = vld [vmem:[%s2 + $0x20] sm:$0xf]
        %v926 = vld [vmem:[%s2 + $0x24] sm:$0xf]
        %v927 = vld [vmem:[%s2 + $0x28] sm:$0xf]
        %v928 = vld [vmem:[%s2 + $0x2c] sm:$0xf]
        %v929 = vld [vmem:[%s2 + $0x30] sm:$0xf]
        %v930 = vld [vmem:[%s2 + $0x34] sm:$0xf]
        %v931 = vld [vmem:[%s2 + $0x38] sm:$0xf]
        %v932 = vld [vmem:[%s2 + $0x3c] sm:$0xf]
        %v933 = vld [vmem:[%s2 + $0x40] sm:$0xf]
        %v934 = vld [vmem:[%s2 + $0x44] sm:$0xf]
        %v935 = vld [vmem:[%s2 + $0x48] sm:$0xf]
        %v936 = vld [vmem:[%s2 + $0x4c] sm:$0xf]
        %v937 = vld [vmem:[%s2 + $0x50] sm:$0xf]
        %v938 = vld [vmem:[%s2 + $0x54] sm:$0xf]
        %v939 = vld [vmem:[%s2 + $0x58] sm:$0xf]
        %v940 = vld [vmem:[%s2 + $0x5c] sm:$0xf]
        %v941 = vld [vmem:[%s2 + $0x60] sm:$0xf]
        %v942 = vld [vmem:[%s2 + $0x64] sm:$0xf]
        %v943 = vld [vmem:[%s2 + $0x68] sm:$0xf]
        %v944 = vld [vmem:[%s2 + $0x6c] sm:$0xf]
        %v945 = vld [vmem:[%s2 + $0x70] sm:$0xf]
        %v946 = vld [vmem:[%s2 + $0x74] sm:$0xf]
        %v947 = vld [vmem:[%s2 + $0x78] sm:$0xf]
        %v948 = vld [vmem:[%s2 + $0x7c] sm:$0xf]
        %v949 = vld [vmem:[%s2 + $0x80] sm:$0xf]
        %v950 = vld [vmem:[%s2 + $0x84] sm:$0xf]
        %v951 = vld [vmem:[%s2 + $0x88] sm:$0xf]
        %v952 = vld [vmem:[%s2 + $0x8c] sm:$0xf]
        %953 = vst.msk [vmem:[%s236 + $0x1] sm:$0xff] %vm170, %v909
        %954 = vst.msk [vmem:[%s236 + $0x11] sm:$0xff] %vm170, %v910
        %955 = vst.msk [vmem:[%s236 + $0x21] sm:$0xff] %vm170, %v911
        %956 = vst.msk [vmem:[%s236 + $0x31] sm:$0xff] %vm170, %v912
        %957 = vst.msk [vmem:[%s236 + $0x41] sm:$0xff] %vm170, %v913
        %958 = vst.msk [vmem:[%s236 + $0x51] sm:$0xff] %vm170, %v914
        %959 = vst.msk [vmem:[%s236 + $0x61] sm:$0xff] %vm170, %v915
        %960 = vst.msk [vmem:[%s236 + $0x71] sm:$0xff] %vm170, %v916
        %v961 = vld [vmem:[#allocation2] sm:$0xff]
        %v962 = vld [vmem:[#allocation2 + $0x10] sm:$0xff]
        %v963 = vld [vmem:[#allocation2 + $0x20] sm:$0xff]
        %v964 = vld [vmem:[#allocation2 + $0x30] sm:$0xff]
        %v965 = vld [vmem:[#allocation2 + $0x40] sm:$0xff]
        %v966 = vld [vmem:[#allocation2 + $0x50] sm:$0xff]
        %v967 = vld [vmem:[#allocation2 + $0x60] sm:$0xff]
        %v968 = vld [vmem:[#allocation2 + $0x70] sm:$0xff]
        %969 = vst.msk [vmem:[#allocation3] sm:$0xff] %vm170, %v961
        %970 = vst.msk [vmem:[#allocation3 + $0x18] sm:$0xff] %vm170, %v962
        %971 = vst.msk [vmem:[#allocation3 + $0x30] sm:$0xff] %vm170, %v963
        %972 = vst.msk [vmem:[#allocation3 + $0x48] sm:$0xff] %vm170, %v964
        %973 = vst.msk [vmem:[#allocation3 + $0x60] sm:$0xff] %vm170, %v965
        %974 = vst.msk [vmem:[#allocation3 + $0x78] sm:$0xff] %vm170, %v966
        %975 = vst.msk [vmem:[#allocation3 + $0x90] sm:$0xff] %vm170, %v967
        %976 = vst.msk [vmem:[#allocation3 + $0xa8] sm:$0xff] %vm170, %v968
        %v977 = vld [vmem:[#allocation2 + $0x1] sm:$0xff]
        %v978 = vld [vmem:[#allocation2 + $0x11] sm:$0xff]
        %v979 = vld [vmem:[#allocation2 + $0x21] sm:$0xff]
        %v980 = vld [vmem:[#allocation2 + $0x31] sm:$0xff]
        %v981 = vld [vmem:[#allocation2 + $0x41] sm:$0xff]
        %v982 = vld [vmem:[#allocation2 + $0x51] sm:$0xff]
        %v983 = vld [vmem:[#allocation2 + $0x61] sm:$0xff]
        %v984 = vld [vmem:[#allocation2 + $0x71] sm:$0xff]
        %993 = vrot.lane.b32.xlu0 %v977, 32
        %v994 = vpop.permute.xlu0 %993
        %995 = vrot.lane.b32.xlu0 %v978, 32
        %v996 = vpop.permute.xlu0 %995
        %997 = vrot.lane.b32.xlu0 %v979, 32
        %v998 = vpop.permute.xlu0 %997
        %999 = vrot.lane.b32.xlu0 %v980, 32
        %v1000 = vpop.permute.xlu0 %999
        %1001 = vrot.lane.b32.xlu0 %v981, 32
        %v1002 = vpop.permute.xlu0 %1001
        %1003 = vrot.lane.b32.xlu0 %v982, 32
        %v1004 = vpop.permute.xlu0 %1003
        %1005 = vrot.lane.b32.xlu0 %v983, 32
        %v1006 = vpop.permute.xlu0 %1005
        %1007 = vrot.lane.b32.xlu0 %v984, 32
        %v1008 = vpop.permute.xlu0 %1007
        %1017 = vst.msk [vmem:[#allocation3] sm:$0xff] %vm301, %v994
        %1018 = vst.msk [vmem:[#allocation3 + $0x18] sm:$0xff] %vm301, %v996
        %1019 = vst.msk [vmem:[#allocation3 + $0x30] sm:$0xff] %vm301, %v998
        %1020 = vst.msk [vmem:[#allocation3 + $0x48] sm:$0xff] %vm301, %v1000
        %1021 = vst.msk [vmem:[#allocation3 + $0x60] sm:$0xff] %vm301, %v1002
        %1022 = vst.msk [vmem:[#allocation3 + $0x78] sm:$0xff] %vm301, %v1004
        %1023 = vst.msk [vmem:[#allocation3 + $0x90] sm:$0xff] %vm301, %v1006
        %1024 = vst.msk [vmem:[#allocation3 + $0xa8] sm:$0xff] %vm301, %v1008
        %v1025 = vld [vmem:[#allocation2 + $0x2] sm:$0xff]
        %v1026 = vld [vmem:[#allocation2 + $0x12] sm:$0xff]
        %v1027 = vld [vmem:[#allocation2 + $0x22] sm:$0xff]
        %v1028 = vld [vmem:[#allocation2 + $0x32] sm:$0xff]
        %v1029 = vld [vmem:[#allocation2 + $0x42] sm:$0xff]
        %v1030 = vld [vmem:[#allocation2 + $0x52] sm:$0xff]
        %v1031 = vld [vmem:[#allocation2 + $0x62] sm:$0xff]
        %v1032 = vld [vmem:[#allocation2 + $0x72] sm:$0xff]
        %1041 = vrot.lane.b32.xlu0 %v1025, 64
        %v1042 = vpop.permute.xlu0 %1041
        %1043 = vrot.lane.b32.xlu0 %v1026, 64
        %v1044 = vpop.permute.xlu0 %1043
        %1045 = vrot.lane.b32.xlu0 %v1027, 64
        %v1046 = vpop.permute.xlu0 %1045
        %1047 = vrot.lane.b32.xlu0 %v1028, 64
        %v1048 = vpop.permute.xlu0 %1047
        %1049 = vrot.lane.b32.xlu0 %v1029, 64
        %v1050 = vpop.permute.xlu0 %1049
        %1051 = vrot.lane.b32.xlu0 %v1030, 64
        %v1052 = vpop.permute.xlu0 %1051
        %1053 = vrot.lane.b32.xlu0 %v1031, 64
        %v1054 = vpop.permute.xlu0 %1053
        %1055 = vrot.lane.b32.xlu0 %v1032, 64
        %v1056 = vpop.permute.xlu0 %1055
        %1065 = vst.msk [vmem:[#allocation3] sm:$0xff] %vm350, %v1042
        %1066 = vst.msk [vmem:[#allocation3 + $0x18] sm:$0xff] %vm350, %v1044
        %1067 = vst.msk [vmem:[#allocation3 + $0x30] sm:$0xff] %vm350, %v1046
        %1068 = vst.msk [vmem:[#allocation3 + $0x48] sm:$0xff] %vm350, %v1048
        %1069 = vst.msk [vmem:[#allocation3 + $0x60] sm:$0xff] %vm350, %v1050
        %1070 = vst.msk [vmem:[#allocation3 + $0x78] sm:$0xff] %vm350, %v1052
        %1071 = vst.msk [vmem:[#allocation3 + $0x90] sm:$0xff] %vm350, %v1054
        %1072 = vst.msk [vmem:[#allocation3 + $0xa8] sm:$0xff] %vm350, %v1056
        %v1073 = vld [vmem:[%s236] sm:$0xff]
        %v1074 = vld [vmem:[%s236 + $0x10] sm:$0xff]
        %v1075 = vld [vmem:[%s236 + $0x20] sm:$0xff]
        %v1076 = vld [vmem:[%s236 + $0x30] sm:$0xff]
        %v1077 = vld [vmem:[%s236 + $0x40] sm:$0xff]
        %v1078 = vld [vmem:[%s236 + $0x50] sm:$0xff]
        %v1079 = vld [vmem:[%s236 + $0x60] sm:$0xff]
        %v1080 = vld [vmem:[%s236 + $0x70] sm:$0xff]
        %1089 = vrot.lane.b32.xlu0 %v1073, 96
        %v1090 = vpop.permute.xlu0 %1089
        %1091 = vrot.lane.b32.xlu0 %v1074, 96
        %v1092 = vpop.permute.xlu0 %1091
        %1093 = vrot.lane.b32.xlu0 %v1075, 96
        %v1094 = vpop.permute.xlu0 %1093
        %1095 = vrot.lane.b32.xlu0 %v1076, 96
        %v1096 = vpop.permute.xlu0 %1095
        %1097 = vrot.lane.b32.xlu0 %v1077, 96
        %v1098 = vpop.permute.xlu0 %1097
        %1099 = vrot.lane.b32.xlu0 %v1078, 96
        %v1100 = vpop.permute.xlu0 %1099
        %1101 = vrot.lane.b32.xlu0 %v1079, 96
        %v1102 = vpop.permute.xlu0 %1101
        %1103 = vrot.lane.b32.xlu0 %v1080, 96
        %v1104 = vpop.permute.xlu0 %1103
        %1113 = vst.msk [vmem:[#allocation3] sm:$0xff] %vm399, %v1090
        %1114 = vst.msk [vmem:[#allocation3 + $0x18] sm:$0xff] %vm399, %v1092
        %1115 = vst.msk [vmem:[#allocation3 + $0x30] sm:$0xff] %vm399, %v1094
        %1116 = vst.msk [vmem:[#allocation3 + $0x48] sm:$0xff] %vm399, %v1096
        %1117 = vst.msk [vmem:[#allocation3 + $0x60] sm:$0xff] %vm399, %v1098
        %1118 = vst.msk [vmem:[#allocation3 + $0x78] sm:$0xff] %vm399, %v1100
        %1119 = vst.msk [vmem:[#allocation3 + $0x90] sm:$0xff] %vm399, %v1102
        %1120 = vst.msk [vmem:[#allocation3 + $0xa8] sm:$0xff] %vm399, %v1104
        %v1121 = vld [vmem:[%s236 + $0x1] sm:$0xff]
        %v1122 = vld [vmem:[%s236 + $0x11] sm:$0xff]
        %v1123 = vld [vmem:[%s236 + $0x21] sm:$0xff]
        %v1124 = vld [vmem:[%s236 + $0x31] sm:$0xff]
        %v1125 = vld [vmem:[%s236 + $0x41] sm:$0xff]
        %v1126 = vld [vmem:[%s236 + $0x51] sm:$0xff]
        %v1127 = vld [vmem:[%s236 + $0x61] sm:$0xff]
        %v1128 = vld [vmem:[%s236 + $0x71] sm:$0xff]
        %1129 = vst.msk [vmem:[#allocation3 + $0x8] sm:$0xff] %vm170, %v1121
        %1130 = vst.msk [vmem:[#allocation3 + $0x20] sm:$0xff] %vm170, %v1122
        %1131 = vst.msk [vmem:[#allocation3 + $0x38] sm:$0xff] %vm170, %v1123
        %1132 = vst.msk [vmem:[#allocation3 + $0x50] sm:$0xff] %vm170, %v1124
        %1133 = vst.msk [vmem:[#allocation3 + $0x68] sm:$0xff] %vm170, %v1125
        %1134 = vst.msk [vmem:[#allocation3 + $0x80] sm:$0xff] %vm170, %v1126
        %1135 = vst.msk [vmem:[#allocation3 + $0x98] sm:$0xff] %vm170, %v1127
        %1136 = vst.msk [vmem:[#allocation3 + $0xb0] sm:$0xff] %vm170, %v1128
        %v1137 = vld [vmem:[%s236 + $0x2] sm:$0xff]
        %v1138 = vld [vmem:[%s236 + $0x12] sm:$0xff]
        %v1139 = vld [vmem:[%s236 + $0x22] sm:$0xff]
        %v1140 = vld [vmem:[%s236 + $0x32] sm:$0xff]
        %v1141 = vld [vmem:[%s236 + $0x42] sm:$0xff]
        %v1142 = vld [vmem:[%s236 + $0x52] sm:$0xff]
        %v1143 = vld [vmem:[%s236 + $0x62] sm:$0xff]
        %v1144 = vld [vmem:[%s236 + $0x72] sm:$0xff]
        %1153 = vrot.lane.b32.xlu0 %v1137, 32
        %v1154 = vpop.permute.xlu0 %1153
        %1155 = vrot.lane.b32.xlu0 %v1138, 32
        %v1156 = vpop.permute.xlu0 %1155
        %1157 = vrot.lane.b32.xlu0 %v1139, 32
        %v1158 = vpop.permute.xlu0 %1157
        %1159 = vrot.lane.b32.xlu0 %v1140, 32
        %v1160 = vpop.permute.xlu0 %1159
        %1161 = vrot.lane.b32.xlu0 %v1141, 32
        %v1162 = vpop.permute.xlu0 %1161
        %1163 = vrot.lane.b32.xlu0 %v1142, 32
        %v1164 = vpop.permute.xlu0 %1163
        %1165 = vrot.lane.b32.xlu0 %v1143, 32
        %v1166 = vpop.permute.xlu0 %1165
        %1167 = vrot.lane.b32.xlu0 %v1144, 32
        %v1168 = vpop.permute.xlu0 %1167
        %1177 = vst.msk [vmem:[#allocation3 + $0x8] sm:$0xff] %vm301, %v1154
        %1178 = vst.msk [vmem:[#allocation3 + $0x20] sm:$0xff] %vm301, %v1156
        %1179 = vst.msk [vmem:[#allocation3 + $0x38] sm:$0xff] %vm301, %v1158
        %1180 = vst.msk [vmem:[#allocation3 + $0x50] sm:$0xff] %vm301, %v1160
        %1181 = vst.msk [vmem:[#allocation3 + $0x68] sm:$0xff] %vm301, %v1162
        %1182 = vst.msk [vmem:[#allocation3 + $0x80] sm:$0xff] %vm301, %v1164
        %1183 = vst.msk [vmem:[#allocation3 + $0x98] sm:$0xff] %vm301, %v1166
        %1184 = vst.msk [vmem:[#allocation3 + $0xb0] sm:$0xff] %vm301, %v1168
        %v1185 = vld [vmem:[%s472] sm:$0xff]
        %v1186 = vld [vmem:[%s472 + $0x10] sm:$0xff]
        %v1187 = vld [vmem:[%s472 + $0x20] sm:$0xff]
        %v1188 = vld [vmem:[%s472 + $0x30] sm:$0xff]
        %v1189 = vld [vmem:[%s472 + $0x40] sm:$0xff]
        %v1190 = vld [vmem:[%s472 + $0x50] sm:$0xff]
        %v1191 = vld [vmem:[%s472 + $0x60] sm:$0xff]
        %v1192 = vld [vmem:[%s472 + $0x70] sm:$0xff]
        %1201 = vrot.lane.b32.xlu0 %v1185, 64
        %v1202 = vpop.permute.xlu0 %1201
        %1203 = vrot.lane.b32.xlu0 %v1186, 64
        %v1204 = vpop.permute.xlu0 %1203
        %1205 = vrot.lane.b32.xlu0 %v1187, 64
        %v1206 = vpop.permute.xlu0 %1205
        %1207 = vrot.lane.b32.xlu0 %v1188, 64
        %v1208 = vpop.permute.xlu0 %1207
        %1209 = vrot.lane.b32.xlu0 %v1189, 64
        %v1210 = vpop.permute.xlu0 %1209
        %1211 = vrot.lane.b32.xlu0 %v1190, 64
        %v1212 = vpop.permute.xlu0 %1211
        %1213 = vrot.lane.b32.xlu0 %v1191, 64
        %v1214 = vpop.permute.xlu0 %1213
        %1215 = vrot.lane.b32.xlu0 %v1192, 64
        %v1216 = vpop.permute.xlu0 %1215
        %1225 = vst.msk [vmem:[#allocation3 + $0x8] sm:$0xff] %vm350, %v1202
        %1226 = vst.msk [vmem:[#allocation3 + $0x20] sm:$0xff] %vm350, %v1204
        %1227 = vst.msk [vmem:[#allocation3 + $0x38] sm:$0xff] %vm350, %v1206
        %1228 = vst.msk [vmem:[#allocation3 + $0x50] sm:$0xff] %vm350, %v1208
        %1229 = vst.msk [vmem:[#allocation3 + $0x68] sm:$0xff] %vm350, %v1210
        %1230 = vst.msk [vmem:[#allocation3 + $0x80] sm:$0xff] %vm350, %v1212
        %1231 = vst.msk [vmem:[#allocation3 + $0x98] sm:$0xff] %vm350, %v1214
        %1232 = vst.msk [vmem:[#allocation3 + $0xb0] sm:$0xff] %vm350, %v1216
        %v1233 = vld [vmem:[%s472 + $0x1] sm:$0xff]
        %v1234 = vld [vmem:[%s472 + $0x11] sm:$0xff]
        %v1235 = vld [vmem:[%s472 + $0x21] sm:$0xff]
        %v1236 = vld [vmem:[%s472 + $0x31] sm:$0xff]
        %v1237 = vld [vmem:[%s472 + $0x41] sm:$0xff]
        %v1238 = vld [vmem:[%s472 + $0x51] sm:$0xff]
        %v1239 = vld [vmem:[%s472 + $0x61] sm:$0xff]
        %v1240 = vld [vmem:[%s472 + $0x71] sm:$0xff]
        %1249 = vrot.lane.b32.xlu0 %v1233, 96
        %v1250 = vpop.permute.xlu0 %1249
        %1251 = vrot.lane.b32.xlu0 %v1234, 96
        %v1252 = vpop.permute.xlu0 %1251
        %1253 = vrot.lane.b32.xlu0 %v1235, 96
        %v1254 = vpop.permute.xlu0 %1253
        %1255 = vrot.lane.b32.xlu0 %v1236, 96
        %v1256 = vpop.permute.xlu0 %1255
        %1257 = vrot.lane.b32.xlu0 %v1237, 96
        %v1258 = vpop.permute.xlu0 %1257
        %1259 = vrot.lane.b32.xlu0 %v1238, 96
        %v1260 = vpop.permute.xlu0 %1259
        %1261 = vrot.lane.b32.xlu0 %v1239, 96
        %v1262 = vpop.permute.xlu0 %1261
        %1263 = vrot.lane.b32.xlu0 %v1240, 96
        %v1264 = vpop.permute.xlu0 %1263
        %1273 = vst.msk [vmem:[#allocation3 + $0x8] sm:$0xff] %vm399, %v1250
        %1274 = vst.msk [vmem:[#allocation3 + $0x20] sm:$0xff] %vm399, %v1252
        %1275 = vst.msk [vmem:[#allocation3 + $0x38] sm:$0xff] %vm399, %v1254
        %1276 = vst.msk [vmem:[#allocation3 + $0x50] sm:$0xff] %vm399, %v1256
        %1277 = vst.msk [vmem:[#allocation3 + $0x68] sm:$0xff] %vm399, %v1258
        %1278 = vst.msk [vmem:[#allocation3 + $0x80] sm:$0xff] %vm399, %v1260
        %1279 = vst.msk [vmem:[#allocation3 + $0x98] sm:$0xff] %vm399, %v1262
        %1280 = vst.msk [vmem:[#allocation3 + $0xb0] sm:$0xff] %vm399, %v1264
        %v1281 = vld [vmem:[%s472 + $0x2] sm:$0xff]
        %v1282 = vld [vmem:[%s472 + $0x12] sm:$0xff]
        %v1283 = vld [vmem:[%s472 + $0x22] sm:$0xff]
        %v1284 = vld [vmem:[%s472 + $0x32] sm:$0xff]
        %v1285 = vld [vmem:[%s472 + $0x42] sm:$0xff]
        %v1286 = vld [vmem:[%s472 + $0x52] sm:$0xff]
        %v1287 = vld [vmem:[%s472 + $0x62] sm:$0xff]
        %v1288 = vld [vmem:[%s472 + $0x72] sm:$0xff]
        %1289 = vst.msk [vmem:[#allocation3 + $0x10] sm:$0xff] %vm170, %v1281
        %1290 = vst.msk [vmem:[#allocation3 + $0x28] sm:$0xff] %vm170, %v1282
        %1291 = vst.msk [vmem:[#allocation3 + $0x40] sm:$0xff] %vm170, %v1283
        %1292 = vst.msk [vmem:[#allocation3 + $0x58] sm:$0xff] %vm170, %v1284
        %1293 = vst.msk [vmem:[#allocation3 + $0x70] sm:$0xff] %vm170, %v1285
        %1294 = vst.msk [vmem:[#allocation3 + $0x88] sm:$0xff] %vm170, %v1286
        %1295 = vst.msk [vmem:[#allocation3 + $0xa0] sm:$0xff] %vm170, %v1287
        %1296 = vst.msk [vmem:[#allocation3 + $0xb8] sm:$0xff] %vm170, %v1288
        %v1297 = vld [vmem:[#allocation3] sm:$0xff]
        %v1298 = vld [vmem:[#allocation3 + $0x8] sm:$0xff]
        %v1299 = vld [vmem:[#allocation3 + $0x10] sm:$0xff]
        %v1300 = vld [vmem:[#allocation3 + $0x18] sm:$0xff]
        %v1301 = vld [vmem:[#allocation3 + $0x20] sm:$0xff]
        %v1302 = vld [vmem:[#allocation3 + $0x28] sm:$0xff]
        %v1303 = vld [vmem:[#allocation3 + $0x30] sm:$0xff]
        %v1304 = vld [vmem:[#allocation3 + $0x38] sm:$0xff]
        %v1305 = vld [vmem:[#allocation3 + $0x40] sm:$0xff]
        %v1306 = vld [vmem:[#allocation3 + $0x48] sm:$0xff]
        %v1307 = vld [vmem:[#allocation3 + $0x50] sm:$0xff]
        %v1308 = vld [vmem:[#allocation3 + $0x58] sm:$0xff]
        %v1309 = vld [vmem:[#allocation3 + $0x60] sm:$0xff]
        %v1310 = vld [vmem:[#allocation3 + $0x68] sm:$0xff]
        %v1311 = vld [vmem:[#allocation3 + $0x70] sm:$0xff]
        %v1312 = vld [vmem:[#allocation3 + $0x78] sm:$0xff]
        %v1313 = vld [vmem:[#allocation3 + $0x80] sm:$0xff]
        %v1314 = vld [vmem:[#allocation3 + $0x88] sm:$0xff]
        %v1315 = vld [vmem:[#allocation3 + $0x90] sm:$0xff]
        %v1316 = vld [vmem:[#allocation3 + $0x98] sm:$0xff]
        %v1317 = vld [vmem:[#allocation3 + $0xa0] sm:$0xff]
        %v1318 = vld [vmem:[#allocation3 + $0xa8] sm:$0xff]
        %v1319 = vld [vmem:[#allocation3 + $0xb0] sm:$0xff]
        %v1320 = vld [vmem:[#allocation3 + $0xb8] sm:$0xff]
        %v1321 = vpack.c.bf16 %v1300, %v1297
        %v1322 = vpack.c.bf16 %v1301, %v1298
        %v1323 = vpack.c.bf16 %v1302, %v1299
        %v1324 = vpack.c.bf16 %v1306, %v1303
        %v1325 = vpack.c.bf16 %v1307, %v1304
        %v1326 = vpack.c.bf16 %v1308, %v1305
        %v1327 = vpack.c.bf16 %v1312, %v1309
        %v1328 = vpack.c.bf16 %v1313, %v1310
        %v1329 = vpack.c.bf16 %v1314, %v1311
        %v1330 = vpack.c.bf16 %v1318, %v1315
        %v1331 = vpack.c.bf16 %v1319, %v1316
        %v1332 = vpack.c.bf16 %v1320, %v1317
        %v1369 = vunpack.c.l.b16 %v917
        %v1370 = vunpack.c.l.b16 %v918
        %v1371 = vunpack.c.l.b16 %v919
        %v1372 = vunpack.c.l.b16 %v920
        %v1373 = vunpack.c.l.b16 %v921
        %v1374 = vunpack.c.l.b16 %v922
        %v1375 = vunpack.c.l.b16 %v923
        %v1376 = vunpack.c.l.b16 %v924
        %v1377 = vunpack.c.l.b16 %v925
        %v1378 = vunpack.c.l.b16 %v926
        %v1379 = vunpack.c.l.b16 %v927
        %v1380 = vunpack.c.l.b16 %v928
        %v1381 = vunpack.c.l.b16 %v929
        %v1382 = vunpack.c.l.b16 %v930
        %v1383 = vunpack.c.l.b16 %v931
        %v1384 = vunpack.c.l.b16 %v932
        %v1385 = vunpack.c.l.b16 %v933
        %v1386 = vunpack.c.l.b16 %v934
        %v1387 = vunpack.c.l.b16 %v935
        %v1388 = vunpack.c.l.b16 %v936
        %v1389 = vunpack.c.l.b16 %v937
        %v1390 = vunpack.c.l.b16 %v938
        %v1391 = vunpack.c.l.b16 %v939
        %v1392 = vunpack.c.l.b16 %v940
        %v1393 = vunpack.c.l.b16 %v941
        %v1394 = vunpack.c.l.b16 %v942
        %v1395 = vunpack.c.l.b16 %v943
        %v1396 = vunpack.c.l.b16 %v944
        %v1397 = vunpack.c.l.b16 %v945
        %v1398 = vunpack.c.l.b16 %v946
        %v1399 = vunpack.c.l.b16 %v947
        %v1400 = vunpack.c.l.b16 %v948
        %v1401 = vunpack.c.l.b16 %v949
        %v1402 = vunpack.c.l.b16 %v950
        %v1403 = vunpack.c.l.b16 %v951
        %v1404 = vunpack.c.l.b16 %v952
        %v1405 = vpack.c.b16 %v1370, %v1369
        %v1406 = vpack.c.b16 %v1372, %v1371
        %v1407 = vpack.c.b16 %v1374, %v1373
        %v1408 = vpack.c.b16 %v1376, %v1375
        %v1409 = vpack.c.b16 %v1378, %v1377
        %v1410 = vpack.c.b16 %v1380, %v1379
        %v1411 = vpack.c.b16 %v1382, %v1381
        %v1412 = vpack.c.b16 %v1384, %v1383
        %v1413 = vpack.c.b16 %v1386, %v1385
        %v1414 = vpack.c.b16 %v1388, %v1387
        %v1415 = vpack.c.b16 %v1390, %v1389
        %v1416 = vpack.c.b16 %v1392, %v1391
        %v1417 = vpack.c.b16 %v1394, %v1393
        %v1418 = vpack.c.b16 %v1396, %v1395
        %v1419 = vpack.c.b16 %v1398, %v1397
        %v1420 = vpack.c.b16 %v1400, %v1399
        %v1421 = vpack.c.b16 %v1402, %v1401
        %v1422 = vpack.c.b16 %v1404, %v1403
        %v1442 = vsel %vm170, %v1323, 0
        %v1445 = vsel %vm170, %v1326, 0
        %v1448 = vsel %vm170, %v1329, 0
        %v1451 = vsel %vm170, %v1332, 0
        %1453 = vmatpush.bf16.msra.mxu0 %v1412
        %1454 = vmatpush.bf16.msra.mxu0 %v1411
        %1455 = vmatpush.bf16.msra.mxu0 %v1410
        %1456 = vmatpush.bf16.msra.mxu0 %v1409
        %1457 = vmatpush.bf16.msra.mxu0 %v1408
        %1458 = vmatpush.bf16.msra.mxu0 %v1407
        %1459 = vmatpush.bf16.msra.mxu0 %v1406
        %1460 = vmatpush.bf16.msra.mxu0 %v1405
        %1461 = vmatmul.bf16.gmra.mxu0 %v1321
        %v1462 = vpop.f32.mrf.mxu0
        %v1463 = vadd.f32 0.0, %v1462
        %v1464 = vpop.f32.mrf.mxu0
        %v1465 = vadd.f32 0.0, %v1464
        %1466 = vmatmul.bf16.gmra.mxu0 %v1324
        %v1467 = vpop.f32.mrf.mxu0
        %v1468 = vadd.f32 0.0, %v1467
        %v1469 = vpop.f32.mrf.mxu0
        %v1470 = vadd.f32 0.0, %v1469
        %1471 = vmatmul.bf16.gmra.mxu0 %v1327
        %v1472 = vpop.f32.mrf.mxu0
        %v1473 = vadd.f32 0.0, %v1472
        %v1474 = vpop.f32.mrf.mxu0
        %v1475 = vadd.f32 0.0, %v1474
        %1476 = vmatmul.bf16.gmra.mxu0 %v1330
        %v1477 = vpop.f32.mrf.mxu0
        %v1478 = vadd.f32 0.0, %v1477
        %v1479 = vpop.f32.mrf.mxu0
        %v1480 = vadd.f32 0.0, %v1479
        %1481 = vdwg.mxu0
        %1482 = vmatpush.bf16.msra.mxu0 %v1420
        %1483 = vmatpush.bf16.msra.mxu0 %v1419
        %1484 = vmatpush.bf16.msra.mxu0 %v1418
        %1485 = vmatpush.bf16.msra.mxu0 %v1417
        %1486 = vmatpush.bf16.msra.mxu0 %v1416
        %1487 = vmatpush.bf16.msra.mxu0 %v1415
        %1488 = vmatpush.bf16.msra.mxu0 %v1414
        %1489 = vmatpush.bf16.msra.mxu0 %v1413
        %1490 = vmatmul.bf16.gmra.mxu0 %v1322
        %v1491 = vpop.f32.mrf.mxu0
        %v1492 = vadd.f32 %v1463, %v1491
        %v1493 = vpop.f32.mrf.mxu0
        %v1494 = vadd.f32 %v1465, %v1493
        %1495 = vmatmul.bf16.gmra.mxu0 %v1325
        %v1496 = vpop.f32.mrf.mxu0
        %v1497 = vadd.f32 %v1468, %v1496
        %v1498 = vpop.f32.mrf.mxu0
        %v1499 = vadd.f32 %v1470, %v1498
        %1500 = vmatmul.bf16.gmra.mxu0 %v1328
        %v1501 = vpop.f32.mrf.mxu0
        %v1502 = vadd.f32 %v1473, %v1501
        %v1503 = vpop.f32.mrf.mxu0
        %v1504 = vadd.f32 %v1475, %v1503
        %1505 = vmatmul.bf16.gmra.mxu0 %v1331
        %v1506 = vpop.f32.mrf.mxu0
        %v1507 = vadd.f32 %v1478, %v1506
        %v1508 = vpop.f32.mrf.mxu0
        %v1509 = vadd.f32 %v1480, %v1508
        %1510 = vdwg.mxu0
        %1511 = vmatpush.bf16.msra.mxu0 0
        %1512 = vmatpush.bf16.msra.mxu0 0
        %1513 = vmatpush.bf16.msra.mxu0 0
        %1514 = vmatpush.bf16.msra.mxu0 0
        %1515 = vmatpush.bf16.msra.mxu0 0
        %1516 = vmatpush.bf16.msra.mxu0 0
        %1517 = vmatpush.bf16.msra.mxu0 %v1422
        %1518 = vmatpush.bf16.msra.mxu0 %v1421
        %1519 = vmatmul.bf16.gmra.mxu0 %v1442
        %v1520 = vpop.f32.mrf.mxu0
        %v1521 = vadd.f32 %v1492, %v1520
        %v1522 = vpop.f32.mrf.mxu0
        %v1523 = vadd.f32 %v1494, %v1522
        %1524 = vmatmul.bf16.gmra.mxu0 %v1445
        %v1525 = vpop.f32.mrf.mxu0
        %v1526 = vadd.f32 %v1497, %v1525
        %v1527 = vpop.f32.mrf.mxu0
        %v1528 = vadd.f32 %v1499, %v1527
        %1529 = vmatmul.bf16.gmra.mxu0 %v1448
        %v1530 = vpop.f32.mrf.mxu0
        %v1531 = vadd.f32 %v1502, %v1530
        %v1532 = vpop.f32.mrf.mxu0
        %v1533 = vadd.f32 %v1504, %v1532
        %1534 = vmatmul.bf16.gmra.mxu0 %v1451
        %v1535 = vpop.f32.mrf.mxu0
        %v1536 = vadd.f32 %v1507, %v1535
        %v1537 = vpop.f32.mrf.mxu0
        %v1538 = vadd.f32 %v1509, %v1537
        %1539 = vdwg.mxu0
        %v1540 = vsel %vm170, %v1521, 0.0
        %v1541 = vsel %vm170, %v1523, 0.0
        %v1542 = vadd.f32 %v1540, %v1541
        %v1543 = vsel %vm170, %v1526, 0.0
        %v1544 = vadd.f32 %v1542, %v1543
        %v1545 = vsel %vm170, %v1528, 0.0
        %v1546 = vadd.f32 %v1544, %v1545
        %v1547 = vsel %vm170, %v1531, 0.0
        %v1548 = vadd.f32 %v1546, %v1547
        %v1549 = vsel %vm170, %v1533, 0.0
        %v1550 = vadd.f32 %v1548, %v1549
        %v1551 = vsel %vm170, %v1536, 0.0
        %v1552 = vadd.f32 %v1550, %v1551
        %v1553 = vsel %vm170, %v1538, 0.0
        %v1554 = vadd.f32 %v1552, %v1553
        %v1555 = vrot.slane %v1554, 4
        %v1556 = vadd.f32 %v1554, %v1555
        %v1557 = vrot.slane %v1556, 2
        %v1558 = vadd.f32 %v1556, %v1557
        %v1559 = vrot.slane %v1558, 1
        %v1560 = vadd.f32 %v1558, %v1559
        %v1561 = vmul.f32 %v1560, 0.015625
        %v1562 = vmul.f32 %v1521, %v1521
        %v1563 = vmul.f32 %v1523, %v1523
        %v1564 = vmul.f32 %v1526, %v1526
        %v1565 = vmul.f32 %v1528, %v1528
        %v1566 = vmul.f32 %v1531, %v1531
        %v1567 = vmul.f32 %v1533, %v1533
        %v1568 = vmul.f32 %v1536, %v1536
        %v1569 = vmul.f32 %v1538, %v1538
        %v1570 = vsel %vm170, %v1562, 0.0
        %v1571 = vsel %vm170, %v1563, 0.0
        %v1572 = vadd.f32 %v1570, %v1571
        %v1573 = vsel %vm170, %v1564, 0.0
        %v1574 = vadd.f32 %v1572, %v1573
        %v1575 = vsel %vm170, %v1565, 0.0
        %v1576 = vadd.f32 %v1574, %v1575
        %v1577 = vsel %vm170, %v1566, 0.0
        %v1578 = vadd.f32 %v1576, %v1577
        %v1579 = vsel %vm170, %v1567, 0.0
        %v1580 = vadd.f32 %v1578, %v1579
        %v1581 = vsel %vm170, %v1568, 0.0
        %v1582 = vadd.f32 %v1580, %v1581
        %v1583 = vsel %vm170, %v1569, 0.0
        %v1584 = vadd.f32 %v1582, %v1583
        %v1585 = vrot.slane %v1584, 4
        %v1586 = vadd.f32 %v1584, %v1585
        %v1587 = vrot.slane %v1586, 2
        %v1588 = vadd.f32 %v1586, %v1587
        %v1589 = vrot.slane %v1588, 1
        %v1590 = vadd.f32 %v1588, %v1589
        %v1591 = vmul.f32 %v1590, 0.015625
        %v1592 = vmul.f32 %v1561, %v1561
        %v1593 = vsub.f32 %v1591, %v1592
        %v1594 = vsub.f32 %v1521, %v1561
        %v1595 = vsub.f32 %v1523, %v1561
        %v1596 = vsub.f32 %v1526, %v1561
        %v1597 = vsub.f32 %v1528, %v1561
        %v1598 = vsub.f32 %v1531, %v1561
        %v1599 = vsub.f32 %v1533, %v1561
        %v1600 = vsub.f32 %v1536, %v1561
        %v1601 = vsub.f32 %v1538, %v1561
        %v1602 = vadd.f32 %v1593, 1e-05
        %v1603 = vrsqrt.pop %v1602
        %v1604 = vmul.f32 %v1603, %v1602
        %v1605 = vmul.f32 %v1604, %v1603
        %v1606 = vmul.f32 0.5, %v1605
        %v1607 = vsub.f32 1.5, %v1606
        %v1608 = vmul.f32 %v1603, %v1607
        %vm1609 = vweird.f32 %v1602
        %vm1610 = vweird.f32 %v1603
        %vm1611 = vmor %vm1609, %vm1610
        %v1612 = vsel %vm1611, %v1603, %v1608
        %v1613 = vmul.f32 %v1594, %v1612
        %v1614 = vmul.f32 %v1595, %v1612
        %v1615 = vmul.f32 %v1596, %v1612
        %v1616 = vmul.f32 %v1597, %v1612
        %v1617 = vmul.f32 %v1598, %v1612
        %v1618 = vmul.f32 %v1599, %v1612
        %v1619 = vmul.f32 %v1600, %v1612
        %v1620 = vmul.f32 %v1601, %v1612
        %v1621 = vadd.f32 %v192, %v1613
        %v1622 = vadd.f32 %v193, %v1614
        %v1623 = vadd.f32 %v194, %v1615
        %v1624 = vadd.f32 %v195, %v1616
        %v1625 = vadd.f32 %v196, %v1617
        %v1626 = vadd.f32 %v197, %v1618
        %v1627 = vadd.f32 %v198, %v1619
        %v1628 = vadd.f32 %v199, %v1620
        %s1629 = scalar_lea.vmem %s1, 144
        %v1630 = vld [vmem:[%s1629] sm:$0xf]
        %v1631 = vld [vmem:[%s1629 + $0x4] sm:$0xf]
        %v1632 = vld [vmem:[%s1629 + $0x8] sm:$0xf]
        %v1633 = vld [vmem:[%s1629 + $0xc] sm:$0xf]
        %v1634 = vld [vmem:[%s1629 + $0x10] sm:$0xf]
        %v1635 = vld [vmem:[%s1629 + $0x14] sm:$0xf]
        %v1636 = vld [vmem:[%s1629 + $0x18] sm:$0xf]
        %v1637 = vld [vmem:[%s1629 + $0x1c] sm:$0xf]
        %v1638 = vld [vmem:[%s1629 + $0x20] sm:$0xf]
        %v1639 = vld [vmem:[%s1629 + $0x24] sm:$0xf]
        %v1640 = vld [vmem:[%s1629 + $0x28] sm:$0xf]
        %v1641 = vld [vmem:[%s1629 + $0x2c] sm:$0xf]
        %v1642 = vld [vmem:[%s1629 + $0x30] sm:$0xf]
        %v1643 = vld [vmem:[%s1629 + $0x34] sm:$0xf]
        %v1644 = vld [vmem:[%s1629 + $0x38] sm:$0xf]
        %v1645 = vld [vmem:[%s1629 + $0x3c] sm:$0xf]
        %v1646 = vld [vmem:[%s1629 + $0x40] sm:$0xf]
        %v1647 = vld [vmem:[%s1629 + $0x44] sm:$0xf]
        %v1648 = vld [vmem:[%s1629 + $0x48] sm:$0xf]
        %v1649 = vld [vmem:[%s1629 + $0x4c] sm:$0xf]
        %v1650 = vld [vmem:[%s1629 + $0x50] sm:$0xf]
        %v1651 = vld [vmem:[%s1629 + $0x54] sm:$0xf]
        %v1652 = vld [vmem:[%s1629 + $0x58] sm:$0xf]
        %v1653 = vld [vmem:[%s1629 + $0x5c] sm:$0xf]
        %v1654 = vld [vmem:[%s1629 + $0x60] sm:$0xf]
        %v1655 = vld [vmem:[%s1629 + $0x64] sm:$0xf]
        %v1656 = vld [vmem:[%s1629 + $0x68] sm:$0xf]
        %v1657 = vld [vmem:[%s1629 + $0x6c] sm:$0xf]
        %v1658 = vld [vmem:[%s1629 + $0x70] sm:$0xf]
        %v1659 = vld [vmem:[%s1629 + $0x74] sm:$0xf]
        %v1660 = vld [vmem:[%s1629 + $0x78] sm:$0xf]
        %v1661 = vld [vmem:[%s1629 + $0x7c] sm:$0xf]
        %v1662 = vld [vmem:[%s1629 + $0x80] sm:$0xf]
        %v1663 = vld [vmem:[%s1629 + $0x84] sm:$0xf]
        %v1664 = vld [vmem:[%s1629 + $0x88] sm:$0xf]
        %v1665 = vld [vmem:[%s1629 + $0x8c] sm:$0xf]
        %1666 = vst.msk [vmem:[%s236 + $0x1] sm:$0xff] %vm170, %v1621
        %1667 = vst.msk [vmem:[%s236 + $0x11] sm:$0xff] %vm170, %v1622
        %1668 = vst.msk [vmem:[%s236 + $0x21] sm:$0xff] %vm170, %v1623
        %1669 = vst.msk [vmem:[%s236 + $0x31] sm:$0xff] %vm170, %v1624
        %1670 = vst.msk [vmem:[%s236 + $0x41] sm:$0xff] %vm170, %v1625
        %1671 = vst.msk [vmem:[%s236 + $0x51] sm:$0xff] %vm170, %v1626
        %1672 = vst.msk [vmem:[%s236 + $0x61] sm:$0xff] %vm170, %v1627
        %1673 = vst.msk [vmem:[%s236 + $0x71] sm:$0xff] %vm170, %v1628
        %v1674 = vld [vmem:[#allocation2] sm:$0xff]
        %v1675 = vld [vmem:[#allocation2 + $0x10] sm:$0xff]
        %v1676 = vld [vmem:[#allocation2 + $0x20] sm:$0xff]
        %v1677 = vld [vmem:[#allocation2 + $0x30] sm:$0xff]
        %v1678 = vld [vmem:[#allocation2 + $0x40] sm:$0xff]
        %v1679 = vld [vmem:[#allocation2 + $0x50] sm:$0xff]
        %v1680 = vld [vmem:[#allocation2 + $0x60] sm:$0xff]
        %v1681 = vld [vmem:[#allocation2 + $0x70] sm:$0xff]
        %1682 = vst.msk [vmem:[#allocation3] sm:$0xff] %vm170, %v1674
        %1683 = vst.msk [vmem:[#allocation3 + $0x18] sm:$0xff] %vm170, %v1675
        %1684 = vst.msk [vmem:[#allocation3 + $0x30] sm:$0xff] %vm170, %v1676
        %1685 = vst.msk [vmem:[#allocation3 + $0x48] sm:$0xff] %vm170, %v1677
        %1686 = vst.msk [vmem:[#allocation3 + $0x60] sm:$0xff] %vm170, %v1678
        %1687 = vst.msk [vmem:[#allocation3 + $0x78] sm:$0xff] %vm170, %v1679
        %1688 = vst.msk [vmem:[#allocation3 + $0x90] sm:$0xff] %vm170, %v1680
        %1689 = vst.msk [vmem:[#allocation3 + $0xa8] sm:$0xff] %vm170, %v1681
        %v1690 = vld [vmem:[#allocation2 + $0x1] sm:$0xff]
        %v1691 = vld [vmem:[#allocation2 + $0x11] sm:$0xff]
        %v1692 = vld [vmem:[#allocation2 + $0x21] sm:$0xff]
        %v1693 = vld [vmem:[#allocation2 + $0x31] sm:$0xff]
        %v1694 = vld [vmem:[#allocation2 + $0x41] sm:$0xff]
        %v1695 = vld [vmem:[#allocation2 + $0x51] sm:$0xff]
        %v1696 = vld [vmem:[#allocation2 + $0x61] sm:$0xff]
        %v1697 = vld [vmem:[#allocation2 + $0x71] sm:$0xff]
        %1706 = vrot.lane.b32.xlu0 %v1690, 32
        %v1707 = vpop.permute.xlu0 %1706
        %1708 = vrot.lane.b32.xlu0 %v1691, 32
        %v1709 = vpop.permute.xlu0 %1708
        %1710 = vrot.lane.b32.xlu0 %v1692, 32
        %v1711 = vpop.permute.xlu0 %1710
        %1712 = vrot.lane.b32.xlu0 %v1693, 32
        %v1713 = vpop.permute.xlu0 %1712
        %1714 = vrot.lane.b32.xlu0 %v1694, 32
        %v1715 = vpop.permute.xlu0 %1714
        %1716 = vrot.lane.b32.xlu0 %v1695, 32
        %v1717 = vpop.permute.xlu0 %1716
        %1718 = vrot.lane.b32.xlu0 %v1696, 32
        %v1719 = vpop.permute.xlu0 %1718
        %1720 = vrot.lane.b32.xlu0 %v1697, 32
        %v1721 = vpop.permute.xlu0 %1720
        %1730 = vst.msk [vmem:[#allocation3] sm:$0xff] %vm301, %v1707
        %1731 = vst.msk [vmem:[#allocation3 + $0x18] sm:$0xff] %vm301, %v1709
        %1732 = vst.msk [vmem:[#allocation3 + $0x30] sm:$0xff] %vm301, %v1711
        %1733 = vst.msk [vmem:[#allocation3 + $0x48] sm:$0xff] %vm301, %v1713
        %1734 = vst.msk [vmem:[#allocation3 + $0x60] sm:$0xff] %vm301, %v1715
        %1735 = vst.msk [vmem:[#allocation3 + $0x78] sm:$0xff] %vm301, %v1717
        %1736 = vst.msk [vmem:[#allocation3 + $0x90] sm:$0xff] %vm301, %v1719
        %1737 = vst.msk [vmem:[#allocation3 + $0xa8] sm:$0xff] %vm301, %v1721
        %v1738 = vld [vmem:[#allocation2 + $0x2] sm:$0xff]
        %v1739 = vld [vmem:[#allocation2 + $0x12] sm:$0xff]
        %v1740 = vld [vmem:[#allocation2 + $0x22] sm:$0xff]
        %v1741 = vld [vmem:[#allocation2 + $0x32] sm:$0xff]
        %v1742 = vld [vmem:[#allocation2 + $0x42] sm:$0xff]
        %v1743 = vld [vmem:[#allocation2 + $0x52] sm:$0xff]
        %v1744 = vld [vmem:[#allocation2 + $0x62] sm:$0xff]
        %v1745 = vld [vmem:[#allocation2 + $0x72] sm:$0xff]
        %1754 = vrot.lane.b32.xlu0 %v1738, 64
        %v1755 = vpop.permute.xlu0 %1754
        %1756 = vrot.lane.b32.xlu0 %v1739, 64
        %v1757 = vpop.permute.xlu0 %1756
        %1758 = vrot.lane.b32.xlu0 %v1740, 64
        %v1759 = vpop.permute.xlu0 %1758
        %1760 = vrot.lane.b32.xlu0 %v1741, 64
        %v1761 = vpop.permute.xlu0 %1760
        %1762 = vrot.lane.b32.xlu0 %v1742, 64
        %v1763 = vpop.permute.xlu0 %1762
        %1764 = vrot.lane.b32.xlu0 %v1743, 64
        %v1765 = vpop.permute.xlu0 %1764
        %1766 = vrot.lane.b32.xlu0 %v1744, 64
        %v1767 = vpop.permute.xlu0 %1766
        %1768 = vrot.lane.b32.xlu0 %v1745, 64
        %v1769 = vpop.permute.xlu0 %1768
        %1778 = vst.msk [vmem:[#allocation3] sm:$0xff] %vm350, %v1755
        %1779 = vst.msk [vmem:[#allocation3 + $0x18] sm:$0xff] %vm350, %v1757
        %1780 = vst.msk [vmem:[#allocation3 + $0x30] sm:$0xff] %vm350, %v1759
        %1781 = vst.msk [vmem:[#allocation3 + $0x48] sm:$0xff] %vm350, %v1761
        %1782 = vst.msk [vmem:[#allocation3 + $0x60] sm:$0xff] %vm350, %v1763
        %1783 = vst.msk [vmem:[#allocation3 + $0x78] sm:$0xff] %vm350, %v1765
        %1784 = vst.msk [vmem:[#allocation3 + $0x90] sm:$0xff] %vm350, %v1767
        %1785 = vst.msk [vmem:[#allocation3 + $0xa8] sm:$0xff] %vm350, %v1769
        %v1786 = vld [vmem:[%s236] sm:$0xff]
        %v1787 = vld [vmem:[%s236 + $0x10] sm:$0xff]
        %v1788 = vld [vmem:[%s236 + $0x20] sm:$0xff]
        %v1789 = vld [vmem:[%s236 + $0x30] sm:$0xff]
        %v1790 = vld [vmem:[%s236 + $0x40] sm:$0xff]
        %v1791 = vld [vmem:[%s236 + $0x50] sm:$0xff]
        %v1792 = vld [vmem:[%s236 + $0x60] sm:$0xff]
        %v1793 = vld [vmem:[%s236 + $0x70] sm:$0xff]
        %1802 = vrot.lane.b32.xlu0 %v1786, 96
        %v1803 = vpop.permute.xlu0 %1802
        %1804 = vrot.lane.b32.xlu0 %v1787, 96
        %v1805 = vpop.permute.xlu0 %1804
        %1806 = vrot.lane.b32.xlu0 %v1788, 96
        %v1807 = vpop.permute.xlu0 %1806
        %1808 = vrot.lane.b32.xlu0 %v1789, 96
        %v1809 = vpop.permute.xlu0 %1808
        %1810 = vrot.lane.b32.xlu0 %v1790, 96
        %v1811 = vpop.permute.xlu0 %1810
        %1812 = vrot.lane.b32.xlu0 %v1791, 96
        %v1813 = vpop.permute.xlu0 %1812
        %1814 = vrot.lane.b32.xlu0 %v1792, 96
        %v1815 = vpop.permute.xlu0 %1814
        %1816 = vrot.lane.b32.xlu0 %v1793, 96
        %v1817 = vpop.permute.xlu0 %1816
        %1826 = vst.msk [vmem:[#allocation3] sm:$0xff] %vm399, %v1803
        %1827 = vst.msk [vmem:[#allocation3 + $0x18] sm:$0xff] %vm399, %v1805
        %1828 = vst.msk [vmem:[#allocation3 + $0x30] sm:$0xff] %vm399, %v1807
        %1829 = vst.msk [vmem:[#allocation3 + $0x48] sm:$0xff] %vm399, %v1809
        %1830 = vst.msk [vmem:[#allocation3 + $0x60] sm:$0xff] %vm399, %v1811
        %1831 = vst.msk [vmem:[#allocation3 + $0x78] sm:$0xff] %vm399, %v1813
        %1832 = vst.msk [vmem:[#allocation3 + $0x90] sm:$0xff] %vm399, %v1815
        %1833 = vst.msk [vmem:[#allocation3 + $0xa8] sm:$0xff] %vm399, %v1817
        %v1834 = vld [vmem:[%s236 + $0x1] sm:$0xff]
        %v1835 = vld [vmem:[%s236 + $0x11] sm:$0xff]
        %v1836 = vld [vmem:[%s236 + $0x21] sm:$0xff]
        %v1837 = vld [vmem:[%s236 + $0x31] sm:$0xff]
        %v1838 = vld [vmem:[%s236 + $0x41] sm:$0xff]
        %v1839 = vld [vmem:[%s236 + $0x51] sm:$0xff]
        %v1840 = vld [vmem:[%s236 + $0x61] sm:$0xff]
        %v1841 = vld [vmem:[%s236 + $0x71] sm:$0xff]
        %1842 = vst.msk [vmem:[#allocation3 + $0x8] sm:$0xff] %vm170, %v1834
        %1843 = vst.msk [vmem:[#allocation3 + $0x20] sm:$0xff] %vm170, %v1835
        %1844 = vst.msk [vmem:[#allocation3 + $0x38] sm:$0xff] %vm170, %v1836
        %1845 = vst.msk [vmem:[#allocation3 + $0x50] sm:$0xff] %vm170, %v1837
        %1846 = vst.msk [vmem:[#allocation3 + $0x68] sm:$0xff] %vm170, %v1838
        %1847 = vst.msk [vmem:[#allocation3 + $0x80] sm:$0xff] %vm170, %v1839
        %1848 = vst.msk [vmem:[#allocation3 + $0x98] sm:$0xff] %vm170, %v1840
        %1849 = vst.msk [vmem:[#allocation3 + $0xb0] sm:$0xff] %vm170, %v1841
        %v1850 = vld [vmem:[%s236 + $0x2] sm:$0xff]
        %v1851 = vld [vmem:[%s236 + $0x12] sm:$0xff]
        %v1852 = vld [vmem:[%s236 + $0x22] sm:$0xff]
        %v1853 = vld [vmem:[%s236 + $0x32] sm:$0xff]
        %v1854 = vld [vmem:[%s236 + $0x42] sm:$0xff]
        %v1855 = vld [vmem:[%s236 + $0x52] sm:$0xff]
        %v1856 = vld [vmem:[%s236 + $0x62] sm:$0xff]
        %v1857 = vld [vmem:[%s236 + $0x72] sm:$0xff]
        %1866 = vrot.lane.b32.xlu0 %v1850, 32
        %v1867 = vpop.permute.xlu0 %1866
        %1868 = vrot.lane.b32.xlu0 %v1851, 32
        %v1869 = vpop.permute.xlu0 %1868
        %1870 = vrot.lane.b32.xlu0 %v1852, 32
        %v1871 = vpop.permute.xlu0 %1870
        %1872 = vrot.lane.b32.xlu0 %v1853, 32
        %v1873 = vpop.permute.xlu0 %1872
        %1874 = vrot.lane.b32.xlu0 %v1854, 32
        %v1875 = vpop.permute.xlu0 %1874
        %1876 = vrot.lane.b32.xlu0 %v1855, 32
        %v1877 = vpop.permute.xlu0 %1876
        %1878 = vrot.lane.b32.xlu0 %v1856, 32
        %v1879 = vpop.permute.xlu0 %1878
        %1880 = vrot.lane.b32.xlu0 %v1857, 32
        %v1881 = vpop.permute.xlu0 %1880
        %1890 = vst.msk [vmem:[#allocation3 + $0x8] sm:$0xff] %vm301, %v1867
        %1891 = vst.msk [vmem:[#allocation3 + $0x20] sm:$0xff] %vm301, %v1869
        %1892 = vst.msk [vmem:[#allocation3 + $0x38] sm:$0xff] %vm301, %v1871
        %1893 = vst.msk [vmem:[#allocation3 + $0x50] sm:$0xff] %vm301, %v1873
        %1894 = vst.msk [vmem:[#allocation3 + $0x68] sm:$0xff] %vm301, %v1875
        %1895 = vst.msk [vmem:[#allocation3 + $0x80] sm:$0xff] %vm301, %v1877
        %1896 = vst.msk [vmem:[#allocation3 + $0x98] sm:$0xff] %vm301, %v1879
        %1897 = vst.msk [vmem:[#allocation3 + $0xb0] sm:$0xff] %vm301, %v1881
        %v1898 = vld [vmem:[%s472] sm:$0xff]
        %v1899 = vld [vmem:[%s472 + $0x10] sm:$0xff]
        %v1900 = vld [vmem:[%s472 + $0x20] sm:$0xff]
        %v1901 = vld [vmem:[%s472 + $0x30] sm:$0xff]
        %v1902 = vld [vmem:[%s472 + $0x40] sm:$0xff]
        %v1903 = vld [vmem:[%s472 + $0x50] sm:$0xff]
        %v1904 = vld [vmem:[%s472 + $0x60] sm:$0xff]
        %v1905 = vld [vmem:[%s472 + $0x70] sm:$0xff]
        %1914 = vrot.lane.b32.xlu0 %v1898, 64
        %v1915 = vpop.permute.xlu0 %1914
        %1916 = vrot.lane.b32.xlu0 %v1899, 64
        %v1917 = vpop.permute.xlu0 %1916
        %1918 = vrot.lane.b32.xlu0 %v1900, 64
        %v1919 = vpop.permute.xlu0 %1918
        %1920 = vrot.lane.b32.xlu0 %v1901, 64
        %v1921 = vpop.permute.xlu0 %1920
        %1922 = vrot.lane.b32.xlu0 %v1902, 64
        %v1923 = vpop.permute.xlu0 %1922
        %1924 = vrot.lane.b32.xlu0 %v1903, 64
        %v1925 = vpop.permute.xlu0 %1924
        %1926 = vrot.lane.b32.xlu0 %v1904, 64
        %v1927 = vpop.permute.xlu0 %1926
        %1928 = vrot.lane.b32.xlu0 %v1905, 64
        %v1929 = vpop.permute.xlu0 %1928
        %1938 = vst.msk [vmem:[#allocation3 + $0x8] sm:$0xff] %vm350, %v1915
        %1939 = vst.msk [vmem:[#allocation3 + $0x20] sm:$0xff] %vm350, %v1917
        %1940 = vst.msk [vmem:[#allocation3 + $0x38] sm:$0xff] %vm350, %v1919
        %1941 = vst.msk [vmem:[#allocation3 + $0x50] sm:$0xff] %vm350, %v1921
        %1942 = vst.msk [vmem:[#allocation3 + $0x68] sm:$0xff] %vm350, %v1923
        %1943 = vst.msk [vmem:[#allocation3 + $0x80] sm:$0xff] %vm350, %v1925
        %1944 = vst.msk [vmem:[#allocation3 + $0x98] sm:$0xff] %vm350, %v1927
        %1945 = vst.msk [vmem:[#allocation3 + $0xb0] sm:$0xff] %vm350, %v1929
        %v1946 = vld [vmem:[%s472 + $0x1] sm:$0xff]
        %v1947 = vld [vmem:[%s472 + $0x11] sm:$0xff]
        %v1948 = vld [vmem:[%s472 + $0x21] sm:$0xff]
        %v1949 = vld [vmem:[%s472 + $0x31] sm:$0xff]
        %v1950 = vld [vmem:[%s472 + $0x41] sm:$0xff]
        %v1951 = vld [vmem:[%s472 + $0x51] sm:$0xff]
        %v1952 = vld [vmem:[%s472 + $0x61] sm:$0xff]
        %v1953 = vld [vmem:[%s472 + $0x71] sm:$0xff]
        %1962 = vrot.lane.b32.xlu0 %v1946, 96
        %v1963 = vpop.permute.xlu0 %1962
        %1964 = vrot.lane.b32.xlu0 %v1947, 96
        %v1965 = vpop.permute.xlu0 %1964
        %1966 = vrot.lane.b32.xlu0 %v1948, 96
        %v1967 = vpop.permute.xlu0 %1966
        %1968 = vrot.lane.b32.xlu0 %v1949, 96
        %v1969 = vpop.permute.xlu0 %1968
        %1970 = vrot.lane.b32.xlu0 %v1950, 96
        %v1971 = vpop.permute.xlu0 %1970
        %1972 = vrot.lane.b32.xlu0 %v1951, 96
        %v1973 = vpop.permute.xlu0 %1972
        %1974 = vrot.lane.b32.xlu0 %v1952, 96
        %v1975 = vpop.permute.xlu0 %1974
        %1976 = vrot.lane.b32.xlu0 %v1953, 96
        %v1977 = vpop.permute.xlu0 %1976
        %1986 = vst.msk [vmem:[#allocation3 + $0x8] sm:$0xff] %vm399, %v1963
        %1987 = vst.msk [vmem:[#allocation3 + $0x20] sm:$0xff] %vm399, %v1965
        %1988 = vst.msk [vmem:[#allocation3 + $0x38] sm:$0xff] %vm399, %v1967
        %1989 = vst.msk [vmem:[#allocation3 + $0x50] sm:$0xff] %vm399, %v1969
        %1990 = vst.msk [vmem:[#allocation3 + $0x68] sm:$0xff] %vm399, %v1971
        %1991 = vst.msk [vmem:[#allocation3 + $0x80] sm:$0xff] %vm399, %v1973
        %1992 = vst.msk [vmem:[#allocation3 + $0x98] sm:$0xff] %vm399, %v1975
        %1993 = vst.msk [vmem:[#allocation3 + $0xb0] sm:$0xff] %vm399, %v1977
        %v1994 = vld [vmem:[%s472 + $0x2] sm:$0xff]
        %v1995 = vld [vmem:[%s472 + $0x12] sm:$0xff]
        %v1996 = vld [vmem:[%s472 + $0x22] sm:$0xff]
        %v1997 = vld [vmem:[%s472 + $0x32] sm:$0xff]
        %v1998 = vld [vmem:[%s472 + $0x42] sm:$0xff]
        %v1999 = vld [vmem:[%s472 + $0x52] sm:$0xff]
        %v2000 = vld [vmem:[%s472 + $0x62] sm:$0xff]
        %v2001 = vld [vmem:[%s472 + $0x72] sm:$0xff]
        %2002 = vst.msk [vmem:[#allocation3 + $0x10] sm:$0xff] %vm170, %v1994
        %2003 = vst.msk [vmem:[#allocation3 + $0x28] sm:$0xff] %vm170, %v1995
        %2004 = vst.msk [vmem:[#allocation3 + $0x40] sm:$0xff] %vm170, %v1996
        %2005 = vst.msk [vmem:[#allocation3 + $0x58] sm:$0xff] %vm170, %v1997
        %2006 = vst.msk [vmem:[#allocation3 + $0x70] sm:$0xff] %vm170, %v1998
        %2007 = vst.msk [vmem:[#allocation3 + $0x88] sm:$0xff] %vm170, %v1999
        %2008 = vst.msk [vmem:[#allocation3 + $0xa0] sm:$0xff] %vm170, %v2000
        %2009 = vst.msk [vmem:[#allocation3 + $0xb8] sm:$0xff] %vm170, %v2001
        %v2010 = vld [vmem:[#allocation3] sm:$0xff]
        %v2011 = vld [vmem:[#allocation3 + $0x8] sm:$0xff]
        %v2012 = vld [vmem:[#allocation3 + $0x10] sm:$0xff]
        %v2013 = vld [vmem:[#allocation3 + $0x18] sm:$0xff]
        %v2014 = vld [vmem:[#allocation3 + $0x20] sm:$0xff]
        %v2015 = vld [vmem:[#allocation3 + $0x28] sm:$0xff]
        %v2016 = vld [vmem:[#allocation3 + $0x30] sm:$0xff]
        %v2017 = vld [vmem:[#allocation3 + $0x38] sm:$0xff]
        %v2018 = vld [vmem:[#allocation3 + $0x40] sm:$0xff]
        %v2019 = vld [vmem:[#allocation3 + $0x48] sm:$0xff]
        %v2020 = vld [vmem:[#allocation3 + $0x50] sm:$0xff]
        %v2021 = vld [vmem:[#allocation3 + $0x58] sm:$0xff]
        %v2022 = vld [vmem:[#allocation3 + $0x60] sm:$0xff]
        %v2023 = vld [vmem:[#allocation3 + $0x68] sm:$0xff]
        %v2024 = vld [vmem:[#allocation3 + $0x70] sm:$0xff]
        %v2025 = vld [vmem:[#allocation3 + $0x78] sm:$0xff]
        %v2026 = vld [vmem:[#allocation3 + $0x80] sm:$0xff]
        %v2027 = vld [vmem:[#allocation3 + $0x88] sm:$0xff]
        %v2028 = vld [vmem:[#allocation3 + $0x90] sm:$0xff]
        %v2029 = vld [vmem:[#allocation3 + $0x98] sm:$0xff]
        %v2030 = vld [vmem:[#allocation3 + $0xa0] sm:$0xff]
        %v2031 = vld [vmem:[#allocation3 + $0xa8] sm:$0xff]
        %v2032 = vld [vmem:[#allocation3 + $0xb0] sm:$0xff]
        %v2033 = vld [vmem:[#allocation3 + $0xb8] sm:$0xff]
        %v2034 = vpack.c.bf16 %v2013, %v2010
        %v2035 = vpack.c.bf16 %v2014, %v2011
        %v2036 = vpack.c.bf16 %v2015, %v2012
        %v2037 = vpack.c.bf16 %v2019, %v2016
        %v2038 = vpack.c.bf16 %v2020, %v2017
        %v2039 = vpack.c.bf16 %v2021, %v2018
        %v2040 = vpack.c.bf16 %v2025, %v2022
        %v2041 = vpack.c.bf16 %v2026, %v2023
        %v2042 = vpack.c.bf16 %v2027, %v2024
        %v2043 = vpack.c.bf16 %v2031, %v2028
        %v2044 = vpack.c.bf16 %v2032, %v2029
        %v2045 = vpack.c.bf16 %v2033, %v2030
        %v2082 = vunpack.c.l.b16 %v1630
        %v2083 = vunpack.c.l.b16 %v1631
        %v2084 = vunpack.c.l.b16 %v1632
        %v2085 = vunpack.c.l.b16 %v1633
        %v2086 = vunpack.c.l.b16 %v1634
        %v2087 = vunpack.c.l.b16 %v1635
        %v2088 = vunpack.c.l.b16 %v1636
        %v2089 = vunpack.c.l.b16 %v1637
        %v2090 = vunpack.c.l.b16 %v1638
        %v2091 = vunpack.c.l.b16 %v1639
        %v2092 = vunpack.c.l.b16 %v1640
        %v2093 = vunpack.c.l.b16 %v1641
        %v2094 = vunpack.c.l.b16 %v1642
        %v2095 = vunpack.c.l.b16 %v1643
        %v2096 = vunpack.c.l.b16 %v1644
        %v2097 = vunpack.c.l.b16 %v1645
        %v2098 = vunpack.c.l.b16 %v1646
        %v2099 = vunpack.c.l.b16 %v1647
        %v2100 = vunpack.c.l.b16 %v1648
        %v2101 = vunpack.c.l.b16 %v1649
        %v2102 = vunpack.c.l.b16 %v1650
        %v2103 = vunpack.c.l.b16 %v1651
        %v2104 = vunpack.c.l.b16 %v1652
        %v2105 = vunpack.c.l.b16 %v1653
        %v2106 = vunpack.c.l.b16 %v1654
        %v2107 = vunpack.c.l.b16 %v1655
        %v2108 = vunpack.c.l.b16 %v1656
        %v2109 = vunpack.c.l.b16 %v1657
        %v2110 = vunpack.c.l.b16 %v1658
        %v2111 = vunpack.c.l.b16 %v1659
        %v2112 = vunpack.c.l.b16 %v1660
        %v2113 = vunpack.c.l.b16 %v1661
        %v2114 = vunpack.c.l.b16 %v1662
        %v2115 = vunpack.c.l.b16 %v1663
        %v2116 = vunpack.c.l.b16 %v1664
        %v2117 = vunpack.c.l.b16 %v1665
        %v2118 = vpack.c.b16 %v2083, %v2082
        %v2119 = vpack.c.b16 %v2085, %v2084
        %v2120 = vpack.c.b16 %v2087, %v2086
        %v2121 = vpack.c.b16 %v2089, %v2088
        %v2122 = vpack.c.b16 %v2091, %v2090
        %v2123 = vpack.c.b16 %v2093, %v2092
        %v2124 = vpack.c.b16 %v2095, %v2094
        %v2125 = vpack.c.b16 %v2097, %v2096
        %v2126 = vpack.c.b16 %v2099, %v2098
        %v2127 = vpack.c.b16 %v2101, %v2100
        %v2128 = vpack.c.b16 %v2103, %v2102
        %v2129 = vpack.c.b16 %v2105, %v2104
        %v2130 = vpack.c.b16 %v2107, %v2106
        %v2131 = vpack.c.b16 %v2109, %v2108
        %v2132 = vpack.c.b16 %v2111, %v2110
        %v2133 = vpack.c.b16 %v2113, %v2112
        %v2134 = vpack.c.b16 %v2115, %v2114
        %v2135 = vpack.c.b16 %v2117, %v2116
        %v2155 = vsel %vm170, %v2036, 0
        %v2158 = vsel %vm170, %v2039, 0
        %v2161 = vsel %vm170, %v2042, 0
        %v2164 = vsel %vm170, %v2045, 0
        %2166 = vmatpush.bf16.msra.mxu0 %v2125
        %2167 = vmatpush.bf16.msra.mxu0 %v2124
        %2168 = vmatpush.bf16.msra.mxu0 %v2123
        %2169 = vmatpush.bf16.msra.mxu0 %v2122
        %2170 = vmatpush.bf16.msra.mxu0 %v2121
        %2171 = vmatpush.bf16.msra.mxu0 %v2120
        %2172 = vmatpush.bf16.msra.mxu0 %v2119
        %2173 = vmatpush.bf16.msra.mxu0 %v2118
        %2174 = vmatmul.bf16.gmra.mxu0 %v2034
        %v2175 = vpop.f32.mrf.mxu0
        %v2176 = vadd.f32 0.0, %v2175
        %v2177 = vpop.f32.mrf.mxu0
        %v2178 = vadd.f32 0.0, %v2177
        %2179 = vmatmul.bf16.gmra.mxu0 %v2037
        %v2180 = vpop.f32.mrf.mxu0
        %v2181 = vadd.f32 0.0, %v2180
        %v2182 = vpop.f32.mrf.mxu0
        %v2183 = vadd.f32 0.0, %v2182
        %2184 = vmatmul.bf16.gmra.mxu0 %v2040
        %v2185 = vpop.f32.mrf.mxu0
        %v2186 = vadd.f32 0.0, %v2185
        %v2187 = vpop.f32.mrf.mxu0
        %v2188 = vadd.f32 0.0, %v2187
        %2189 = vmatmul.bf16.gmra.mxu0 %v2043
        %v2190 = vpop.f32.mrf.mxu0
        %v2191 = vadd.f32 0.0, %v2190
        %v2192 = vpop.f32.mrf.mxu0
        %v2193 = vadd.f32 0.0, %v2192
        %2194 = vdwg.mxu0
        %2195 = vmatpush.bf16.msra.mxu0 %v2133
        %2196 = vmatpush.bf16.msra.mxu0 %v2132
        %2197 = vmatpush.bf16.msra.mxu0 %v2131
        %2198 = vmatpush.bf16.msra.mxu0 %v2130
        %2199 = vmatpush.bf16.msra.mxu0 %v2129
        %2200 = vmatpush.bf16.msra.mxu0 %v2128
        %2201 = vmatpush.bf16.msra.mxu0 %v2127
        %2202 = vmatpush.bf16.msra.mxu0 %v2126
        %2203 = vmatmul.bf16.gmra.mxu0 %v2035
        %v2204 = vpop.f32.mrf.mxu0
        %v2205 = vadd.f32 %v2176, %v2204
        %v2206 = vpop.f32.mrf.mxu0
        %v2207 = vadd.f32 %v2178, %v2206
        %2208 = vmatmul.bf16.gmra.mxu0 %v2038
        %v2209 = vpop.f32.mrf.mxu0
        %v2210 = vadd.f32 %v2181, %v2209
        %v2211 = vpop.f32.mrf.mxu0
        %v2212 = vadd.f32 %v2183, %v2211
        %2213 = vmatmul.bf16.gmra.mxu0 %v2041
        %v2214 = vpop.f32.mrf.mxu0
        %v2215 = vadd.f32 %v2186, %v2214
        %v2216 = vpop.f32.mrf.mxu0
        %v2217 = vadd.f32 %v2188, %v2216
        %2218 = vmatmul.bf16.gmra.mxu0 %v2044
        %v2219 = vpop.f32.mrf.mxu0
        %v2220 = vadd.f32 %v2191, %v2219
        %v2221 = vpop.f32.mrf.mxu0
        %v2222 = vadd.f32 %v2193, %v2221
        %2223 = vdwg.mxu0
        %2224 = vmatpush.bf16.msra.mxu0 0
        %2225 = vmatpush.bf16.msra.mxu0 0
        %2226 = vmatpush.bf16.msra.mxu0 0
        %2227 = vmatpush.bf16.msra.mxu0 0
        %2228 = vmatpush.bf16.msra.mxu0 0
        %2229 = vmatpush.bf16.msra.mxu0 0
        %2230 = vmatpush.bf16.msra.mxu0 %v2135
        %2231 = vmatpush.bf16.msra.mxu0 %v2134
        %2232 = vmatmul.bf16.gmra.mxu0 %v2155
        %v2233 = vpop.f32.mrf.mxu0
        %v2234 = vadd.f32 %v2205, %v2233
        %v2235 = vpop.f32.mrf.mxu0
        %v2236 = vadd.f32 %v2207, %v2235
        %2237 = vmatmul.bf16.gmra.mxu0 %v2158
        %v2238 = vpop.f32.mrf.mxu0
        %v2239 = vadd.f32 %v2210, %v2238
        %v2240 = vpop.f32.mrf.mxu0
        %v2241 = vadd.f32 %v2212, %v2240
        %2242 = vmatmul.bf16.gmra.mxu0 %v2161
        %v2243 = vpop.f32.mrf.mxu0
        %v2244 = vadd.f32 %v2215, %v2243
        %v2245 = vpop.f32.mrf.mxu0
        %v2246 = vadd.f32 %v2217, %v2245
        %2247 = vmatmul.bf16.gmra.mxu0 %v2164
        %v2248 = vpop.f32.mrf.mxu0
        %v2249 = vadd.f32 %v2220, %v2248
        %v2250 = vpop.f32.mrf.mxu0
        %v2251 = vadd.f32 %v2222, %v2250
        %2252 = vdwg.mxu0
        %v2253 = vsel %vm170, %v2234, 0.0
        %v2254 = vsel %vm170, %v2236, 0.0
        %v2255 = vadd.f32 %v2253, %v2254
        %v2256 = vsel %vm170, %v2239, 0.0
        %v2257 = vadd.f32 %v2255, %v2256
        %v2258 = vsel %vm170, %v2241, 0.0
        %v2259 = vadd.f32 %v2257, %v2258
        %v2260 = vsel %vm170, %v2244, 0.0
        %v2261 = vadd.f32 %v2259, %v2260
        %v2262 = vsel %vm170, %v2246, 0.0
        %v2263 = vadd.f32 %v2261, %v2262
        %v2264 = vsel %vm170, %v2249, 0.0
        %v2265 = vadd.f32 %v2263, %v2264
        %v2266 = vsel %vm170, %v2251, 0.0
        %v2267 = vadd.f32 %v2265, %v2266
        %v2268 = vrot.slane %v2267, 4
        %v2269 = vadd.f32 %v2267, %v2268
        %v2270 = vrot.slane %v2269, 2
        %v2271 = vadd.f32 %v2269, %v2270
        %v2272 = vrot.slane %v2271, 1
        %v2273 = vadd.f32 %v2271, %v2272
        %v2274 = vmul.f32 %v2273, 0.015625
        %v2275 = vmul.f32 %v2234, %v2234
        %v2276 = vmul.f32 %v2236, %v2236
        %v2277 = vmul.f32 %v2239, %v2239
        %v2278 = vmul.f32 %v2241, %v2241
        %v2279 = vmul.f32 %v2244, %v2244
        %v2280 = vmul.f32 %v2246, %v2246
        %v2281 = vmul.f32 %v2249, %v2249
        %v2282 = vmul.f32 %v2251, %v2251
        %v2283 = vsel %vm170, %v2275, 0.0
        %v2284 = vsel %vm170, %v2276, 0.0
        %v2285 = vadd.f32 %v2283, %v2284
        %v2286 = vsel %vm170, %v2277, 0.0
        %v2287 = vadd.f32 %v2285, %v2286
        %v2288 = vsel %vm170, %v2278, 0.0
        %v2289 = vadd.f32 %v2287, %v2288
        %v2290 = vsel %vm170, %v2279, 0.0
        %v2291 = vadd.f32 %v2289, %v2290
        %v2292 = vsel %vm170, %v2280, 0.0
        %v2293 = vadd.f32 %v2291, %v2292
        %v2294 = vsel %vm170, %v2281, 0.0
        %v2295 = vadd.f32 %v2293, %v2294
        %v2296 = vsel %vm170, %v2282, 0.0
        %v2297 = vadd.f32 %v2295, %v2296
        %v2298 = vrot.slane %v2297, 4
        %v2299 = vadd.f32 %v2297, %v2298
        %v2300 = vrot.slane %v2299, 2
        %v2301 = vadd.f32 %v2299, %v2300
        %v2302 = vrot.slane %v2301, 1
        %v2303 = vadd.f32 %v2301, %v2302
        %v2304 = vmul.f32 %v2303, 0.015625
        %v2305 = vmul.f32 %v2274, %v2274
        %v2306 = vsub.f32 %v2304, %v2305
        %v2307 = vsub.f32 %v2234, %v2274
        %v2308 = vsub.f32 %v2236, %v2274
        %v2309 = vsub.f32 %v2239, %v2274
        %v2310 = vsub.f32 %v2241, %v2274
        %v2311 = vsub.f32 %v2244, %v2274
        %v2312 = vsub.f32 %v2246, %v2274
        %v2313 = vsub.f32 %v2249, %v2274
        %v2314 = vsub.f32 %v2251, %v2274
        %v2315 = vadd.f32 %v2306, 1e-05
        %v2316 = vrsqrt.pop %v2315
        %v2317 = vmul.f32 %v2316, %v2315
        %v2318 = vmul.f32 %v2317, %v2316
        %v2319 = vmul.f32 0.5, %v2318
        %v2320 = vsub.f32 1.5, %v2319
        %v2321 = vmul.f32 %v2316, %v2320
        %vm2322 = vweird.f32 %v2315
        %vm2323 = vweird.f32 %v2316
        %vm2324 = vmor %vm2322, %vm2323
        %v2325 = vsel %vm2324, %v2316, %v2321
        %v2326 = vmul.f32 %v2307, %v2325
        %v2327 = vmul.f32 %v2308, %v2325
        %v2328 = vmul.f32 %v2309, %v2325
        %v2329 = vmul.f32 %v2310, %v2325
        %v2330 = vmul.f32 %v2311, %v2325
        %v2331 = vmul.f32 %v2312, %v2325
        %v2332 = vmul.f32 %v2313, %v2325
        %v2333 = vmul.f32 %v2314, %v2325
        %v2334 = vmax.f32 %v2326, 0.0
        %v2335 = vmax.f32 %v2327, 0.0
        %v2336 = vmax.f32 %v2328, 0.0
        %v2337 = vmax.f32 %v2329, 0.0
        %v2338 = vmax.f32 %v2330, 0.0
        %v2339 = vmax.f32 %v2331, 0.0
        %v2340 = vmax.f32 %v2332, 0.0
        %v2341 = vmax.f32 %v2333, 0.0
        %s2342 = scalar_lea.vmem %s2, 144
        %v2343 = vld [vmem:[%s2342] sm:$0xf]
        %v2344 = vld [vmem:[%s2342 + $0x4] sm:$0xf]
        %v2345 = vld [vmem:[%s2342 + $0x8] sm:$0xf]
        %v2346 = vld [vmem:[%s2342 + $0xc] sm:$0xf]
        %v2347 = vld [vmem:[%s2342 + $0x10] sm:$0xf]
        %v2348 = vld [vmem:[%s2342 + $0x14] sm:$0xf]
        %v2349 = vld [vmem:[%s2342 + $0x18] sm:$0xf]
        %v2350 = vld [vmem:[%s2342 + $0x1c] sm:$0xf]
        %v2351 = vld [vmem:[%s2342 + $0x20] sm:$0xf]
        %v2352 = vld [vmem:[%s2342 + $0x24] sm:$0xf]
        %v2353 = vld [vmem:[%s2342 + $0x28] sm:$0xf]
        %v2354 = vld [vmem:[%s2342 + $0x2c] sm:$0xf]
        %v2355 = vld [vmem:[%s2342 + $0x30] sm:$0xf]
        %v2356 = vld [vmem:[%s2342 + $0x34] sm:$0xf]
        %v2357 = vld [vmem:[%s2342 + $0x38] sm:$0xf]
        %v2358 = vld [vmem:[%s2342 + $0x3c] sm:$0xf]
        %v2359 = vld [vmem:[%s2342 + $0x40] sm:$0xf]
        %v2360 = vld [vmem:[%s2342 + $0x44] sm:$0xf]
        %v2361 = vld [vmem:[%s2342 + $0x48] sm:$0xf]
        %v2362 = vld [vmem:[%s2342 + $0x4c] sm:$0xf]
        %v2363 = vld [vmem:[%s2342 + $0x50] sm:$0xf]
        %v2364 = vld [vmem:[%s2342 + $0x54] sm:$0xf]
        %v2365 = vld [vmem:[%s2342 + $0x58] sm:$0xf]
        %v2366 = vld [vmem:[%s2342 + $0x5c] sm:$0xf]
        %v2367 = vld [vmem:[%s2342 + $0x60] sm:$0xf]
        %v2368 = vld [vmem:[%s2342 + $0x64] sm:$0xf]
        %v2369 = vld [vmem:[%s2342 + $0x68] sm:$0xf]
        %v2370 = vld [vmem:[%s2342 + $0x6c] sm:$0xf]
        %v2371 = vld [vmem:[%s2342 + $0x70] sm:$0xf]
        %v2372 = vld [vmem:[%s2342 + $0x74] sm:$0xf]
        %v2373 = vld [vmem:[%s2342 + $0x78] sm:$0xf]
        %v2374 = vld [vmem:[%s2342 + $0x7c] sm:$0xf]
        %v2375 = vld [vmem:[%s2342 + $0x80] sm:$0xf]
        %v2376 = vld [vmem:[%s2342 + $0x84] sm:$0xf]
        %v2377 = vld [vmem:[%s2342 + $0x88] sm:$0xf]
        %v2378 = vld [vmem:[%s2342 + $0x8c] sm:$0xf]
        %2379 = vst.msk [vmem:[%s236 + $0x1] sm:$0xff] %vm170, %v2334
        %2380 = vst.msk [vmem:[%s236 + $0x11] sm:$0xff] %vm170, %v2335
        %2381 = vst.msk [vmem:[%s236 + $0x21] sm:$0xff] %vm170, %v2336
        %2382 = vst.msk [vmem:[%s236 + $0x31] sm:$0xff] %vm170, %v2337
        %2383 = vst.msk [vmem:[%s236 + $0x41] sm:$0xff] %vm170, %v2338
        %2384 = vst.msk [vmem:[%s236 + $0x51] sm:$0xff] %vm170, %v2339
        %2385 = vst.msk [vmem:[%s236 + $0x61] sm:$0xff] %vm170, %v2340
        %2386 = vst.msk [vmem:[%s236 + $0x71] sm:$0xff] %vm170, %v2341
        %v2387 = vld [vmem:[#allocation2] sm:$0xff]
        %v2388 = vld [vmem:[#allocation2 + $0x10] sm:$0xff]
        %v2389 = vld [vmem:[#allocation2 + $0x20] sm:$0xff]
        %v2390 = vld [vmem:[#allocation2 + $0x30] sm:$0xff]
        %v2391 = vld [vmem:[#allocation2 + $0x40] sm:$0xff]
        %v2392 = vld [vmem:[#allocation2 + $0x50] sm:$0xff]
        %v2393 = vld [vmem:[#allocation2 + $0x60] sm:$0xff]
        %v2394 = vld [vmem:[#allocation2 + $0x70] sm:$0xff]
        %2395 = vst.msk [vmem:[#allocation3] sm:$0xff] %vm170, %v2387
        %2396 = vst.msk [vmem:[#allocation3 + $0x18] sm:$0xff] %vm170, %v2388
        %2397 = vst.msk [vmem:[#allocation3 + $0x30] sm:$0xff] %vm170, %v2389
        %2398 = vst.msk [vmem:[#allocation3 + $0x48] sm:$0xff] %vm170, %v2390
        %2399 = vst.msk [vmem:[#allocation3 + $0x60] sm:$0xff] %vm170, %v2391
        %2400 = vst.msk [vmem:[#allocation3 + $0x78] sm:$0xff] %vm170, %v2392
        %2401 = vst.msk [vmem:[#allocation3 + $0x90] sm:$0xff] %vm170, %v2393
        %2402 = vst.msk [vmem:[#allocation3 + $0xa8] sm:$0xff] %vm170, %v2394
        %v2403 = vld [vmem:[#allocation2 + $0x1] sm:$0xff]
        %v2404 = vld [vmem:[#allocation2 + $0x11] sm:$0xff]
        %v2405 = vld [vmem:[#allocation2 + $0x21] sm:$0xff]
        %v2406 = vld [vmem:[#allocation2 + $0x31] sm:$0xff]
        %v2407 = vld [vmem:[#allocation2 + $0x41] sm:$0xff]
        %v2408 = vld [vmem:[#allocation2 + $0x51] sm:$0xff]
        %v2409 = vld [vmem:[#allocation2 + $0x61] sm:$0xff]
        %v2410 = vld [vmem:[#allocation2 + $0x71] sm:$0xff]
        %2419 = vrot.lane.b32.xlu0 %v2403, 32
        %v2420 = vpop.permute.xlu0 %2419
        %2421 = vrot.lane.b32.xlu0 %v2404, 32
        %v2422 = vpop.permute.xlu0 %2421
        %2423 = vrot.lane.b32.xlu0 %v2405, 32
        %v2424 = vpop.permute.xlu0 %2423
        %2425 = vrot.lane.b32.xlu0 %v2406, 32
        %v2426 = vpop.permute.xlu0 %2425
        %2427 = vrot.lane.b32.xlu0 %v2407, 32
        %v2428 = vpop.permute.xlu0 %2427
        %2429 = vrot.lane.b32.xlu0 %v2408, 32
        %v2430 = vpop.permute.xlu0 %2429
        %2431 = vrot.lane.b32.xlu0 %v2409, 32
        %v2432 = vpop.permute.xlu0 %2431
        %2433 = vrot.lane.b32.xlu0 %v2410, 32
        %v2434 = vpop.permute.xlu0 %2433
        %2443 = vst.msk [vmem:[#allocation3] sm:$0xff] %vm301, %v2420
        %2444 = vst.msk [vmem:[#allocation3 + $0x18] sm:$0xff] %vm301, %v2422
        %2445 = vst.msk [vmem:[#allocation3 + $0x30] sm:$0xff] %vm301, %v2424
        %2446 = vst.msk [vmem:[#allocation3 + $0x48] sm:$0xff] %vm301, %v2426
        %2447 = vst.msk [vmem:[#allocation3 + $0x60] sm:$0xff] %vm301, %v2428
        %2448 = vst.msk [vmem:[#allocation3 + $0x78] sm:$0xff] %vm301, %v2430
        %2449 = vst.msk [vmem:[#allocation3 + $0x90] sm:$0xff] %vm301, %v2432
        %2450 = vst.msk [vmem:[#allocation3 + $0xa8] sm:$0xff] %vm301, %v2434
        %v2451 = vld [vmem:[#allocation2 + $0x2] sm:$0xff]
        %v2452 = vld [vmem:[#allocation2 + $0x12] sm:$0xff]
        %v2453 = vld [vmem:[#allocation2 + $0x22] sm:$0xff]
        %v2454 = vld [vmem:[#allocation2 + $0x32] sm:$0xff]
        %v2455 = vld [vmem:[#allocation2 + $0x42] sm:$0xff]
        %v2456 = vld [vmem:[#allocation2 + $0x52] sm:$0xff]
        %v2457 = vld [vmem:[#allocation2 + $0x62] sm:$0xff]
        %v2458 = vld [vmem:[#allocation2 + $0x72] sm:$0xff]
        %2467 = vrot.lane.b32.xlu0 %v2451, 64
        %v2468 = vpop.permute.xlu0 %2467
        %2469 = vrot.lane.b32.xlu0 %v2452, 64
        %v2470 = vpop.permute.xlu0 %2469
        %2471 = vrot.lane.b32.xlu0 %v2453, 64
        %v2472 = vpop.permute.xlu0 %2471
        %2473 = vrot.lane.b32.xlu0 %v2454, 64
        %v2474 = vpop.permute.xlu0 %2473
        %2475 = vrot.lane.b32.xlu0 %v2455, 64
        %v2476 = vpop.permute.xlu0 %2475
        %2477 = vrot.lane.b32.xlu0 %v2456, 64
        %v2478 = vpop.permute.xlu0 %2477
        %2479 = vrot.lane.b32.xlu0 %v2457, 64
        %v2480 = vpop.permute.xlu0 %2479
        %2481 = vrot.lane.b32.xlu0 %v2458, 64
        %v2482 = vpop.permute.xlu0 %2481
        %2491 = vst.msk [vmem:[#allocation3] sm:$0xff] %vm350, %v2468
        %2492 = vst.msk [vmem:[#allocation3 + $0x18] sm:$0xff] %vm350, %v2470
        %2493 = vst.msk [vmem:[#allocation3 + $0x30] sm:$0xff] %vm350, %v2472
        %2494 = vst.msk [vmem:[#allocation3 + $0x48] sm:$0xff] %vm350, %v2474
        %2495 = vst.msk [vmem:[#allocation3 + $0x60] sm:$0xff] %vm350, %v2476
        %2496 = vst.msk [vmem:[#allocation3 + $0x78] sm:$0xff] %vm350, %v2478
        %2497 = vst.msk [vmem:[#allocation3 + $0x90] sm:$0xff] %vm350, %v2480
        %2498 = vst.msk [vmem:[#allocation3 + $0xa8] sm:$0xff] %vm350, %v2482
        %v2499 = vld [vmem:[%s236] sm:$0xff]
        %v2500 = vld [vmem:[%s236 + $0x10] sm:$0xff]
        %v2501 = vld [vmem:[%s236 + $0x20] sm:$0xff]
        %v2502 = vld [vmem:[%s236 + $0x30] sm:$0xff]
        %v2503 = vld [vmem:[%s236 + $0x40] sm:$0xff]
        %v2504 = vld [vmem:[%s236 + $0x50] sm:$0xff]
        %v2505 = vld [vmem:[%s236 + $0x60] sm:$0xff]
        %v2506 = vld [vmem:[%s236 + $0x70] sm:$0xff]
        %2515 = vrot.lane.b32.xlu0 %v2499, 96
        %v2516 = vpop.permute.xlu0 %2515
        %2517 = vrot.lane.b32.xlu0 %v2500, 96
        %v2518 = vpop.permute.xlu0 %2517
        %2519 = vrot.lane.b32.xlu0 %v2501, 96
        %v2520 = vpop.permute.xlu0 %2519
        %2521 = vrot.lane.b32.xlu0 %v2502, 96
        %v2522 = vpop.permute.xlu0 %2521
        %2523 = vrot.lane.b32.xlu0 %v2503, 96
        %v2524 = vpop.permute.xlu0 %2523
        %2525 = vrot.lane.b32.xlu0 %v2504, 96
        %v2526 = vpop.permute.xlu0 %2525
        %2527 = vrot.lane.b32.xlu0 %v2505, 96
        %v2528 = vpop.permute.xlu0 %2527
        %2529 = vrot.lane.b32.xlu0 %v2506, 96
        %v2530 = vpop.permute.xlu0 %2529
        %2539 = vst.msk [vmem:[#allocation3] sm:$0xff] %vm399, %v2516
        %2540 = vst.msk [vmem:[#allocation3 + $0x18] sm:$0xff] %vm399, %v2518
        %2541 = vst.msk [vmem:[#allocation3 + $0x30] sm:$0xff] %vm399, %v2520
        %2542 = vst.msk [vmem:[#allocation3 + $0x48] sm:$0xff] %vm399, %v2522
        %2543 = vst.msk [vmem:[#allocation3 + $0x60] sm:$0xff] %vm399, %v2524
        %2544 = vst.msk [vmem:[#allocation3 + $0x78] sm:$0xff] %vm399, %v2526
        %2545 = vst.msk [vmem:[#allocation3 + $0x90] sm:$0xff] %vm399, %v2528
        %2546 = vst.msk [vmem:[#allocation3 + $0xa8] sm:$0xff] %vm399, %v2530
        %v2547 = vld [vmem:[%s236 + $0x1] sm:$0xff]
        %v2548 = vld [vmem:[%s236 + $0x11] sm:$0xff]
        %v2549 = vld [vmem:[%s236 + $0x21] sm:$0xff]
        %v2550 = vld [vmem:[%s236 + $0x31] sm:$0xff]
        %v2551 = vld [vmem:[%s236 + $0x41] sm:$0xff]
        %v2552 = vld [vmem:[%s236 + $0x51] sm:$0xff]
        %v2553 = vld [vmem:[%s236 + $0x61] sm:$0xff]
        %v2554 = vld [vmem:[%s236 + $0x71] sm:$0xff]
        %2555 = vst.msk [vmem:[#allocation3 + $0x8] sm:$0xff] %vm170, %v2547
        %2556 = vst.msk [vmem:[#allocation3 + $0x20] sm:$0xff] %vm170, %v2548
        %2557 = vst.msk [vmem:[#allocation3 + $0x38] sm:$0xff] %vm170, %v2549
        %2558 = vst.msk [vmem:[#allocation3 + $0x50] sm:$0xff] %vm170, %v2550
        %2559 = vst.msk [vmem:[#allocation3 + $0x68] sm:$0xff] %vm170, %v2551
        %2560 = vst.msk [vmem:[#allocation3 + $0x80] sm:$0xff] %vm170, %v2552
        %2561 = vst.msk [vmem:[#allocation3 + $0x98] sm:$0xff] %vm170, %v2553
        %2562 = vst.msk [vmem:[#allocation3 + $0xb0] sm:$0xff] %vm170, %v2554
        %v2563 = vld [vmem:[%s236 + $0x2] sm:$0xff]
        %v2564 = vld [vmem:[%s236 + $0x12] sm:$0xff]
        %v2565 = vld [vmem:[%s236 + $0x22] sm:$0xff]
        %v2566 = vld [vmem:[%s236 + $0x32] sm:$0xff]
        %v2567 = vld [vmem:[%s236 + $0x42] sm:$0xff]
        %v2568 = vld [vmem:[%s236 + $0x52] sm:$0xff]
        %v2569 = vld [vmem:[%s236 + $0x62] sm:$0xff]
        %v2570 = vld [vmem:[%s236 + $0x72] sm:$0xff]
        %2579 = vrot.lane.b32.xlu0 %v2563, 32
        %v2580 = vpop.permute.xlu0 %2579
        %2581 = vrot.lane.b32.xlu0 %v2564, 32
        %v2582 = vpop.permute.xlu0 %2581
        %2583 = vrot.lane.b32.xlu0 %v2565, 32
        %v2584 = vpop.permute.xlu0 %2583
        %2585 = vrot.lane.b32.xlu0 %v2566, 32
        %v2586 = vpop.permute.xlu0 %2585
        %2587 = vrot.lane.b32.xlu0 %v2567, 32
        %v2588 = vpop.permute.xlu0 %2587
        %2589 = vrot.lane.b32.xlu0 %v2568, 32
        %v2590 = vpop.permute.xlu0 %2589
        %2591 = vrot.lane.b32.xlu0 %v2569, 32
        %v2592 = vpop.permute.xlu0 %2591
        %2593 = vrot.lane.b32.xlu0 %v2570, 32
        %v2594 = vpop.permute.xlu0 %2593
        %2603 = vst.msk [vmem:[#allocation3 + $0x8] sm:$0xff] %vm301, %v2580
        %2604 = vst.msk [vmem:[#allocation3 + $0x20] sm:$0xff] %vm301, %v2582
        %2605 = vst.msk [vmem:[#allocation3 + $0x38] sm:$0xff] %vm301, %v2584
        %2606 = vst.msk [vmem:[#allocation3 + $0x50] sm:$0xff] %vm301, %v2586
        %2607 = vst.msk [vmem:[#allocation3 + $0x68] sm:$0xff] %vm301, %v2588
        %2608 = vst.msk [vmem:[#allocation3 + $0x80] sm:$0xff] %vm301, %v2590
        %2609 = vst.msk [vmem:[#allocation3 + $0x98] sm:$0xff] %vm301, %v2592
        %2610 = vst.msk [vmem:[#allocation3 + $0xb0] sm:$0xff] %vm301, %v2594
        %v2611 = vld [vmem:[%s472] sm:$0xff]
        %v2612 = vld [vmem:[%s472 + $0x10] sm:$0xff]
        %v2613 = vld [vmem:[%s472 + $0x20] sm:$0xff]
        %v2614 = vld [vmem:[%s472 + $0x30] sm:$0xff]
        %v2615 = vld [vmem:[%s472 + $0x40] sm:$0xff]
        %v2616 = vld [vmem:[%s472 + $0x50] sm:$0xff]
        %v2617 = vld [vmem:[%s472 + $0x60] sm:$0xff]
        %v2618 = vld [vmem:[%s472 + $0x70] sm:$0xff]
        %2627 = vrot.lane.b32.xlu0 %v2611, 64
        %v2628 = vpop.permute.xlu0 %2627
        %2629 = vrot.lane.b32.xlu0 %v2612, 64
        %v2630 = vpop.permute.xlu0 %2629
        %2631 = vrot.lane.b32.xlu0 %v2613, 64
        %v2632 = vpop.permute.xlu0 %2631
        %2633 = vrot.lane.b32.xlu0 %v2614, 64
        %v2634 = vpop.permute.xlu0 %2633
        %2635 = vrot.lane.b32.xlu0 %v2615, 64
        %v2636 = vpop.permute.xlu0 %2635
        %2637 = vrot.lane.b32.xlu0 %v2616, 64
        %v2638 = vpop.permute.xlu0 %2637
        %2639 = vrot.lane.b32.xlu0 %v2617, 64
        %v2640 = vpop.permute.xlu0 %2639
        %2641 = vrot.lane.b32.xlu0 %v2618, 64
        %v2642 = vpop.permute.xlu0 %2641
        %2651 = vst.msk [vmem:[#allocation3 + $0x8] sm:$0xff] %vm350, %v2628
        %2652 = vst.msk [vmem:[#allocation3 + $0x20] sm:$0xff] %vm350, %v2630
        %2653 = vst.msk [vmem:[#allocation3 + $0x38] sm:$0xff] %vm350, %v2632
        %2654 = vst.msk [vmem:[#allocation3 + $0x50] sm:$0xff] %vm350, %v2634
        %2655 = vst.msk [vmem:[#allocation3 + $0x68] sm:$0xff] %vm350, %v2636
        %2656 = vst.msk [vmem:[#allocation3 + $0x80] sm:$0xff] %vm350, %v2638
        %2657 = vst.msk [vmem:[#allocation3 + $0x98] sm:$0xff] %vm350, %v2640
        %2658 = vst.msk [vmem:[#allocation3 + $0xb0] sm:$0xff] %vm350, %v2642
        %v2659 = vld [vmem:[%s472 + $0x1] sm:$0xff]
        %v2660 = vld [vmem:[%s472 + $0x11] sm:$0xff]
        %v2661 = vld [vmem:[%s472 + $0x21] sm:$0xff]
        %v2662 = vld [vmem:[%s472 + $0x31] sm:$0xff]
        %v2663 = vld [vmem:[%s472 + $0x41] sm:$0xff]
        %v2664 = vld [vmem:[%s472 + $0x51] sm:$0xff]
        %v2665 = vld [vmem:[%s472 + $0x61] sm:$0xff]
        %v2666 = vld [vmem:[%s472 + $0x71] sm:$0xff]
        %2675 = vrot.lane.b32.xlu0 %v2659, 96
        %v2676 = vpop.permute.xlu0 %2675
        %2677 = vrot.lane.b32.xlu0 %v2660, 96
        %v2678 = vpop.permute.xlu0 %2677
        %2679 = vrot.lane.b32.xlu0 %v2661, 96
        %v2680 = vpop.permute.xlu0 %2679
        %2681 = vrot.lane.b32.xlu0 %v2662, 96
        %v2682 = vpop.permute.xlu0 %2681
        %2683 = vrot.lane.b32.xlu0 %v2663, 96
        %v2684 = vpop.permute.xlu0 %2683
        %2685 = vrot.lane.b32.xlu0 %v2664, 96
        %v2686 = vpop.permute.xlu0 %2685
        %2687 = vrot.lane.b32.xlu0 %v2665, 96
        %v2688 = vpop.permute.xlu0 %2687
        %2689 = vrot.lane.b32.xlu0 %v2666, 96
        %v2690 = vpop.permute.xlu0 %2689
        %2699 = vst.msk [vmem:[#allocation3 + $0x8] sm:$0xff] %vm399, %v2676
        %2700 = vst.msk [vmem:[#allocation3 + $0x20] sm:$0xff] %vm399, %v2678
        %2701 = vst.msk [vmem:[#allocation3 + $0x38] sm:$0xff] %vm399, %v2680
        %2702 = vst.msk [vmem:[#allocation3 + $0x50] sm:$0xff] %vm399, %v2682
        %2703 = vst.msk [vmem:[#allocation3 + $0x68] sm:$0xff] %vm399, %v2684
        %2704 = vst.msk [vmem:[#allocation3 + $0x80] sm:$0xff] %vm399, %v2686
        %2705 = vst.msk [vmem:[#allocation3 + $0x98] sm:$0xff] %vm399, %v2688
        %2706 = vst.msk [vmem:[#allocation3 + $0xb0] sm:$0xff] %vm399, %v2690
        %v2707 = vld [vmem:[%s472 + $0x2] sm:$0xff]
        %v2708 = vld [vmem:[%s472 + $0x12] sm:$0xff]
        %v2709 = vld [vmem:[%s472 + $0x22] sm:$0xff]
        %v2710 = vld [vmem:[%s472 + $0x32] sm:$0xff]
        %v2711 = vld [vmem:[%s472 + $0x42] sm:$0xff]
        %v2712 = vld [vmem:[%s472 + $0x52] sm:$0xff]
        %v2713 = vld [vmem:[%s472 + $0x62] sm:$0xff]
        %v2714 = vld [vmem:[%s472 + $0x72] sm:$0xff]
        %2715 = vst.msk [vmem:[#allocation3 + $0x10] sm:$0xff] %vm170, %v2707
        %2716 = vst.msk [vmem:[#allocation3 + $0x28] sm:$0xff] %vm170, %v2708
        %2717 = vst.msk [vmem:[#allocation3 + $0x40] sm:$0xff] %vm170, %v2709
        %2718 = vst.msk [vmem:[#allocation3 + $0x58] sm:$0xff] %vm170, %v2710
        %2719 = vst.msk [vmem:[#allocation3 + $0x70] sm:$0xff] %vm170, %v2711
        %2720 = vst.msk [vmem:[#allocation3 + $0x88] sm:$0xff] %vm170, %v2712
        %2721 = vst.msk [vmem:[#allocation3 + $0xa0] sm:$0xff] %vm170, %v2713
        %2722 = vst.msk [vmem:[#allocation3 + $0xb8] sm:$0xff] %vm170, %v2714
        %v2723 = vld [vmem:[#allocation3] sm:$0xff]
        %v2724 = vld [vmem:[#allocation3 + $0x8] sm:$0xff]
        %v2725 = vld [vmem:[#allocation3 + $0x10] sm:$0xff]
        %v2726 = vld [vmem:[#allocation3 + $0x18] sm:$0xff]
        %v2727 = vld [vmem:[#allocation3 + $0x20] sm:$0xff]
        %v2728 = vld [vmem:[#allocation3 + $0x28] sm:$0xff]
        %v2729 = vld [vmem:[#allocation3 + $0x30] sm:$0xff]
        %v2730 = vld [vmem:[#allocation3 + $0x38] sm:$0xff]
        %v2731 = vld [vmem:[#allocation3 + $0x40] sm:$0xff]
        %v2732 = vld [vmem:[#allocation3 + $0x48] sm:$0xff]
        %v2733 = vld [vmem:[#allocation3 + $0x50] sm:$0xff]
        %v2734 = vld [vmem:[#allocation3 + $0x58] sm:$0xff]
        %v2735 = vld [vmem:[#allocation3 + $0x60] sm:$0xff]
        %v2736 = vld [vmem:[#allocation3 + $0x68] sm:$0xff]
        %v2737 = vld [vmem:[#allocation3 + $0x70] sm:$0xff]
        %v2738 = vld [vmem:[#allocation3 + $0x78] sm:$0xff]
        %v2739 = vld [vmem:[#allocation3 + $0x80] sm:$0xff]
        %v2740 = vld [vmem:[#allocation3 + $0x88] sm:$0xff]
        %v2741 = vld [vmem:[#allocation3 + $0x90] sm:$0xff]
        %v2742 = vld [vmem:[#allocation3 + $0x98] sm:$0xff]
        %v2743 = vld [vmem:[#allocation3 + $0xa0] sm:$0xff]
        %v2744 = vld [vmem:[#allocation3 + $0xa8] sm:$0xff]
        %v2745 = vld [vmem:[#allocation3 + $0xb0] sm:$0xff]
        %v2746 = vld [vmem:[#allocation3 + $0xb8] sm:$0xff]
        %v2747 = vpack.c.bf16 %v2726, %v2723
        %v2748 = vpack.c.bf16 %v2727, %v2724
        %v2749 = vpack.c.bf16 %v2728, %v2725
        %v2750 = vpack.c.bf16 %v2732, %v2729
        %v2751 = vpack.c.bf16 %v2733, %v2730
        %v2752 = vpack.c.bf16 %v2734, %v2731
        %v2753 = vpack.c.bf16 %v2738, %v2735
        %v2754 = vpack.c.bf16 %v2739, %v2736
        %v2755 = vpack.c.bf16 %v2740, %v2737
        %v2756 = vpack.c.bf16 %v2744, %v2741
        %v2757 = vpack.c.bf16 %v2745, %v2742
        %v2758 = vpack.c.bf16 %v2746, %v2743
        %v2795 = vunpack.c.l.b16 %v2343
        %v2796 = vunpack.c.l.b16 %v2344
        %v2797 = vunpack.c.l.b16 %v2345
        %v2798 = vunpack.c.l.b16 %v2346
        %v2799 = vunpack.c.l.b16 %v2347
        %v2800 = vunpack.c.l.b16 %v2348
        %v2801 = vunpack.c.l.b16 %v2349
        %v2802 = vunpack.c.l.b16 %v2350
        %v2803 = vunpack.c.l.b16 %v2351
        %v2804 = vunpack.c.l.b16 %v2352
        %v2805 = vunpack.c.l.b16 %v2353
        %v2806 = vunpack.c.l.b16 %v2354
        %v2807 = vunpack.c.l.b16 %v2355
        %v2808 = vunpack.c.l.b16 %v2356
        %v2809 = vunpack.c.l.b16 %v2357
        %v2810 = vunpack.c.l.b16 %v2358
        %v2811 = vunpack.c.l.b16 %v2359
        %v2812 = vunpack.c.l.b16 %v2360
        %v2813 = vunpack.c.l.b16 %v2361
        %v2814 = vunpack.c.l.b16 %v2362
        %v2815 = vunpack.c.l.b16 %v2363
        %v2816 = vunpack.c.l.b16 %v2364
        %v2817 = vunpack.c.l.b16 %v2365
        %v2818 = vunpack.c.l.b16 %v2366
        %v2819 = vunpack.c.l.b16 %v2367
        %v2820 = vunpack.c.l.b16 %v2368
        %v2821 = vunpack.c.l.b16 %v2369
        %v2822 = vunpack.c.l.b16 %v2370
        %v2823 = vunpack.c.l.b16 %v2371
        %v2824 = vunpack.c.l.b16 %v2372
        %v2825 = vunpack.c.l.b16 %v2373
        %v2826 = vunpack.c.l.b16 %v2374
        %v2827 = vunpack.c.l.b16 %v2375
        %v2828 = vunpack.c.l.b16 %v2376
        %v2829 = vunpack.c.l.b16 %v2377
        %v2830 = vunpack.c.l.b16 %v2378
        %v2831 = vpack.c.b16 %v2796, %v2795
        %v2832 = vpack.c.b16 %v2798, %v2797
        %v2833 = vpack.c.b16 %v2800, %v2799
        %v2834 = vpack.c.b16 %v2802, %v2801
        %v2835 = vpack.c.b16 %v2804, %v2803
        %v2836 = vpack.c.b16 %v2806, %v2805
        %v2837 = vpack.c.b16 %v2808, %v2807
        %v2838 = vpack.c.b16 %v2810, %v2809
        %v2839 = vpack.c.b16 %v2812, %v2811
        %v2840 = vpack.c.b16 %v2814, %v2813
        %v2841 = vpack.c.b16 %v2816, %v2815
        %v2842 = vpack.c.b16 %v2818, %v2817
        %v2843 = vpack.c.b16 %v2820, %v2819
        %v2844 = vpack.c.b16 %v2822, %v2821
        %v2845 = vpack.c.b16 %v2824, %v2823
        %v2846 = vpack.c.b16 %v2826, %v2825
        %v2847 = vpack.c.b16 %v2828, %v2827
        %v2848 = vpack.c.b16 %v2830, %v2829
        %v2868 = vsel %vm170, %v2749, 0
        %v2871 = vsel %vm170, %v2752, 0
        %v2874 = vsel %vm170, %v2755, 0
        %v2877 = vsel %vm170, %v2758, 0
        %2879 = vmatpush.bf16.msra.mxu0 %v2838
        %2880 = vmatpush.bf16.msra.mxu0 %v2837
        %2881 = vmatpush.bf16.msra.mxu0 %v2836
        %2882 = vmatpush.bf16.msra.mxu0 %v2835
        %2883 = vmatpush.bf16.msra.mxu0 %v2834
        %2884 = vmatpush.bf16.msra.mxu0 %v2833
        %2885 = vmatpush.bf16.msra.mxu0 %v2832
        %2886 = vmatpush.bf16.msra.mxu0 %v2831
        %2887 = vmatmul.bf16.gmra.mxu0 %v2747
        %v2888 = vpop.f32.mrf.mxu0
        %v2889 = vadd.f32 0.0, %v2888
        %v2890 = vpop.f32.mrf.mxu0
        %v2891 = vadd.f32 0.0, %v2890
        %2892 = vmatmul.bf16.gmra.mxu0 %v2750
        %v2893 = vpop.f32.mrf.mxu0
        %v2894 = vadd.f32 0.0, %v2893
        %v2895 = vpop.f32.mrf.mxu0
        %v2896 = vadd.f32 0.0, %v2895
        %2897 = vmatmul.bf16.gmra.mxu0 %v2753
        %v2898 = vpop.f32.mrf.mxu0
        %v2899 = vadd.f32 0.0, %v2898
        %v2900 = vpop.f32.mrf.mxu0
        %v2901 = vadd.f32 0.0, %v2900
        %2902 = vmatmul.bf16.gmra.mxu0 %v2756
        %v2903 = vpop.f32.mrf.mxu0
        %v2904 = vadd.f32 0.0, %v2903
        %v2905 = vpop.f32.mrf.mxu0
        %v2906 = vadd.f32 0.0, %v2905
        %2907 = vdwg.mxu0
        %2908 = vmatpush.bf16.msra.mxu0 %v2846
        %2909 = vmatpush.bf16.msra.mxu0 %v2845
        %2910 = vmatpush.bf16.msra.mxu0 %v2844
        %2911 = vmatpush.bf16.msra.mxu0 %v2843
        %2912 = vmatpush.bf16.msra.mxu0 %v2842
        %2913 = vmatpush.bf16.msra.mxu0 %v2841
        %2914 = vmatpush.bf16.msra.mxu0 %v2840
        %2915 = vmatpush.bf16.msra.mxu0 %v2839
        %2916 = vmatmul.bf16.gmra.mxu0 %v2748
        %v2917 = vpop.f32.mrf.mxu0
        %v2918 = vadd.f32 %v2889, %v2917
        %v2919 = vpop.f32.mrf.mxu0
        %v2920 = vadd.f32 %v2891, %v2919
        %2921 = vmatmul.bf16.gmra.mxu0 %v2751
        %v2922 = vpop.f32.mrf.mxu0
        %v2923 = vadd.f32 %v2894, %v2922
        %v2924 = vpop.f32.mrf.mxu0
        %v2925 = vadd.f32 %v2896, %v2924
        %2926 = vmatmul.bf16.gmra.mxu0 %v2754
        %v2927 = vpop.f32.mrf.mxu0
        %v2928 = vadd.f32 %v2899, %v2927
        %v2929 = vpop.f32.mrf.mxu0
        %v2930 = vadd.f32 %v2901, %v2929
        %2931 = vmatmul.bf16.gmra.mxu0 %v2757
        %v2932 = vpop.f32.mrf.mxu0
        %v2933 = vadd.f32 %v2904, %v2932
        %v2934 = vpop.f32.mrf.mxu0
        %v2935 = vadd.f32 %v2906, %v2934
        %2936 = vdwg.mxu0
        %2937 = vmatpush.bf16.msra.mxu0 0
        %2938 = vmatpush.bf16.msra.mxu0 0
        %2939 = vmatpush.bf16.msra.mxu0 0
        %2940 = vmatpush.bf16.msra.mxu0 0
        %2941 = vmatpush.bf16.msra.mxu0 0
        %2942 = vmatpush.bf16.msra.mxu0 0
        %2943 = vmatpush.bf16.msra.mxu0 %v2848
        %2944 = vmatpush.bf16.msra.mxu0 %v2847
        %2945 = vmatmul.bf16.gmra.mxu0 %v2868
        %v2946 = vpop.f32.mrf.mxu0
        %v2947 = vadd.f32 %v2918, %v2946
        %v2948 = vpop.f32.mrf.mxu0
        %v2949 = vadd.f32 %v2920, %v2948
        %2950 = vmatmul.bf16.gmra.mxu0 %v2871
        %v2951 = vpop.f32.mrf.mxu0
        %v2952 = vadd.f32 %v2923, %v2951
        %v2953 = vpop.f32.mrf.mxu0
        %v2954 = vadd.f32 %v2925, %v2953
        %2955 = vmatmul.bf16.gmra.mxu0 %v2874
        %v2956 = vpop.f32.mrf.mxu0
        %v2957 = vadd.f32 %v2928, %v2956
        %v2958 = vpop.f32.mrf.mxu0
        %v2959 = vadd.f32 %v2930, %v2958
        %2960 = vmatmul.bf16.gmra.mxu0 %v2877
        %v2961 = vpop.f32.mrf.mxu0
        %v2962 = vadd.f32 %v2933, %v2961
        %v2963 = vpop.f32.mrf.mxu0
        %v2964 = vadd.f32 %v2935, %v2963
        %2965 = vdwg.mxu0
        %v2966 = vsel %vm170, %v2947, 0.0
        %v2967 = vsel %vm170, %v2949, 0.0
        %v2968 = vadd.f32 %v2966, %v2967
        %v2969 = vsel %vm170, %v2952, 0.0
        %v2970 = vadd.f32 %v2968, %v2969
        %v2971 = vsel %vm170, %v2954, 0.0
        %v2972 = vadd.f32 %v2970, %v2971
        %v2973 = vsel %vm170, %v2957, 0.0
        %v2974 = vadd.f32 %v2972, %v2973
        %v2975 = vsel %vm170, %v2959, 0.0
        %v2976 = vadd.f32 %v2974, %v2975
        %v2977 = vsel %vm170, %v2962, 0.0
        %v2978 = vadd.f32 %v2976, %v2977
        %v2979 = vsel %vm170, %v2964, 0.0
        %v2980 = vadd.f32 %v2978, %v2979
        %v2981 = vrot.slane %v2980, 4
        %v2982 = vadd.f32 %v2980, %v2981
        %v2983 = vrot.slane %v2982, 2
        %v2984 = vadd.f32 %v2982, %v2983
        %v2985 = vrot.slane %v2984, 1
        %v2986 = vadd.f32 %v2984, %v2985
        %v2987 = vmul.f32 %v2986, 0.015625
        %v2988 = vmul.f32 %v2947, %v2947
        %v2989 = vmul.f32 %v2949, %v2949
        %v2990 = vmul.f32 %v2952, %v2952
        %v2991 = vmul.f32 %v2954, %v2954
        %v2992 = vmul.f32 %v2957, %v2957
        %v2993 = vmul.f32 %v2959, %v2959
        %v2994 = vmul.f32 %v2962, %v2962
        %v2995 = vmul.f32 %v2964, %v2964
        %v2996 = vsel %vm170, %v2988, 0.0
        %v2997 = vsel %vm170, %v2989, 0.0
        %v2998 = vadd.f32 %v2996, %v2997
        %v2999 = vsel %vm170, %v2990, 0.0
        %v3000 = vadd.f32 %v2998, %v2999
        %v3001 = vsel %vm170, %v2991, 0.0
        %v3002 = vadd.f32 %v3000, %v3001
        %v3003 = vsel %vm170, %v2992, 0.0
        %v3004 = vadd.f32 %v3002, %v3003
        %v3005 = vsel %vm170, %v2993, 0.0
        %v3006 = vadd.f32 %v3004, %v3005
        %v3007 = vsel %vm170, %v2994, 0.0
        %v3008 = vadd.f32 %v3006, %v3007
        %v3009 = vsel %vm170, %v2995, 0.0
        %v3010 = vadd.f32 %v3008, %v3009
        %v3011 = vrot.slane %v3010, 4
        %v3012 = vadd.f32 %v3010, %v3011
        %v3013 = vrot.slane %v3012, 2
        %v3014 = vadd.f32 %v3012, %v3013
        %v3015 = vrot.slane %v3014, 1
        %v3016 = vadd.f32 %v3014, %v3015
        %v3017 = vmul.f32 %v3016, 0.015625
        %v3018 = vmul.f32 %v2987, %v2987
        %v3019 = vsub.f32 %v3017, %v3018
        %v3020 = vsub.f32 %v2947, %v2987
        %v3021 = vsub.f32 %v2949, %v2987
        %v3022 = vsub.f32 %v2952, %v2987
        %v3023 = vsub.f32 %v2954, %v2987
        %v3024 = vsub.f32 %v2957, %v2987
        %v3025 = vsub.f32 %v2959, %v2987
        %v3026 = vsub.f32 %v2962, %v2987
        %v3027 = vsub.f32 %v2964, %v2987
        %v3028 = vadd.f32 %v3019, 1e-05
        %v3029 = vrsqrt.pop %v3028
        %v3030 = vmul.f32 %v3029, %v3028
        %v3031 = vmul.f32 %v3030, %v3029
        %v3032 = vmul.f32 0.5, %v3031
        %v3033 = vsub.f32 1.5, %v3032
        %v3034 = vmul.f32 %v3029, %v3033
        %vm3035 = vweird.f32 %v3028
        %vm3036 = vweird.f32 %v3029
        %vm3037 = vmor %vm3035, %vm3036
        %v3038 = vsel %vm3037, %v3029, %v3034
        %v3039 = vmul.f32 %v3020, %v3038
        %v3040 = vmul.f32 %v3021, %v3038
        %v3041 = vmul.f32 %v3022, %v3038
        %v3042 = vmul.f32 %v3023, %v3038
        %v3043 = vmul.f32 %v3024, %v3038
        %v3044 = vmul.f32 %v3025, %v3038
        %v3045 = vmul.f32 %v3026, %v3038
        %v3046 = vmul.f32 %v3027, %v3038
        %v3047 = vadd.f32 %v1621, %v3039
        %v3048 = vadd.f32 %v1622, %v3040
        %v3049 = vadd.f32 %v1623, %v3041
        %v3050 = vadd.f32 %v1624, %v3042
        %v3051 = vadd.f32 %v1625, %v3043
        %v3052 = vadd.f32 %v1626, %v3044
        %v3053 = vadd.f32 %v1627, %v3045
        %v3054 = vadd.f32 %v1628, %v3046
        %3055 = vst.msk [vmem:[%s163] sm:$0xff] %vm170, %v3047
        %3056 = vst.msk [vmem:[%s163 + $0x8] sm:$0xff] %vm170, %v3048
        %3057 = vst.msk [vmem:[%s163 + $0x10] sm:$0xff] %vm170, %v3049
        %3058 = vst.msk [vmem:[%s163 + $0x18] sm:$0xff] %vm170, %v3050
        %3059 = vst.msk [vmem:[%s163 + $0x20] sm:$0xff] %vm170, %v3051
        %3060 = vst.msk [vmem:[%s163 + $0x28] sm:$0xff] %vm170, %v3052
        %3061 = vst.msk [vmem:[%s163 + $0x30] sm:$0xff] %vm170, %v3053
        %3062 = vst.msk [vmem:[%s163 + $0x38] sm:$0xff] %vm170, %v3054
        %s3063 = sand.u32 %s93, 1
        %s3064 = scalar_lea.sflag [#allocation5], %s3063
        %s3065 = sand.u32 %s93, 1
        %s3066 = smul.addr %s3065, 64
        %s3067 = scalar_lea.vmem [#allocation4], %s3066
        // Predicated region
        $region33: #{tpu_custom_call.1} parent=31 // pred_check
          %p3068 = pneg %p103
        $region34: #{tpu_custom_call.1} parent=31 // pred_check_branch
          %3070 = sbr.rel (%p3068) target = $region36
        $region35: #{tpu_custom_call.1} parent=31 // pred_region
          %3072 = vsyncadd %s3064, 0
          %s3073 = smul.addr %s17, 8
          %s3074 = smul.addr %s3073, 8
          %s3075 = scalar_lea.hbm %s3, %s3074
          %s3076 = sshll.u32 %s3067, 4
          %s3077 = int_to_ptr.vmem [resolvable:$true] %s3076
          %s3078 = sshll.u32 %s3075, 4
          %s3079 = int_to_ptr.hbm [resolvable:$true] %s3078
          %3084 = dma.vmem_to_hbm [thread:$0]  %s3077, 1024, %s3079, %s3064, 128, 128, 8
        $region36: #{tpu_custom_call.1} parent=31 // pred_fallthru
          _
      $region32: #{tpu_custom_call.1} parent=5 // pred_fallthru
        _
      %p3085 = scmp.le.s32.totalorder 2, %s12
      // Predicated region
      $region37: #{tpu_custom_call.1} parent=5 // pred_check
        %p3086 = pneg %p3085
      $region38: #{tpu_custom_call.1} parent=5 // pred_check_branch
        %3088 = sbr.rel (%p3086) target = $region40
      $region39: #{tpu_custom_call.1} parent=5 // pred_region
        %s3089 = ssub.s32 %s12, 2
        // Predicated region
        $region41: #{tpu_custom_call.1} parent=39 // pred_check
          %p3090 = pneg %p109
        $region42: #{tpu_custom_call.1} parent=39 // pred_check_branch
          %3092 = sbr.rel (%p3090) target = $region44
        $region43: #{tpu_custom_call.1} parent=39 // pred_region
          %s3093 = sand.u32 %s94, 1
          %s3094 = scalar_lea.sflag [#allocation5], %s3093
          %s3095 = sand.u32 %s94, 1
          %s3096 = smul.addr %s3095, 64
          %s3097 = scalar_lea.vmem [#allocation4], %s3096
          %3099 = dma.done %s3094, 1024
        $region44: #{tpu_custom_call.1} parent=39 // pred_fallthru
          _
      $region40: #{tpu_custom_call.1} parent=5 // pred_fallthru
        _
    $region6: #{tpu_custom_call.1} parent=1 // loop_footer
      %s16 = sadd.s32 1, %s12
    $region7: #{tpu_custom_call.1} parent=1 // loop_footer_branch
      %11 = sbr.rel target = $region3
    $region8: #{tpu_custom_call.1} parent=1 // loop_exit
      _
    %3100 = vsyncpa [#allocation5], 1
    %s3101 = scalar_lea.sflag [#allocation5], 1
    %3102 = vsyncpa %s3101, 1

</llo_original>
